<compile_context>
chip_gen: v7x
topology: tpu7x:2x2x1
jax: 0.10.0
libtpu: 0.0.40
codegen_flags: <defaults>
</compile_context>

<pallas_src>
import functools

import jax
import jax.numpy as jnp
from jax import lax
from jax.experimental import pallas as pl
from jax.experimental.pallas import tpu as pltpu


# --------------------------- per-task building blocks ---------------------- #

def _inner_step(sx, sy, fast_w, *, g_scale, local_lr):
    """One MAML inner (fast-weight) SGD step for a single task.

    Weight layout (pre-transposed in the wrapper, no in-kernel transposes):
      w1t (D0, D1), b1 (1, D1); w2t (D1, D2), b2 (1, D2); w3r (1, D2), b3 (1, 1)
    """
    w1t, b1, w2t, b2, w3r, b3 = fast_w

    # Forward on the support set.
    z1 = jnp.dot(sx, w1t, preferred_element_type=jnp.float32) + b1      # (Ns, D1)
    a1 = jnp.maximum(z1, 0.0)
    z2 = jnp.dot(a1, w2t, preferred_element_type=jnp.float32) + b2      # (Ns, D2)
    a2 = jnp.maximum(z2, 0.0)
    # linear_out has out_dim = 1: keep it off the MXU (VPU mul + lane reduce).
    pred = jnp.sum(a2 * w3r, axis=-1, keepdims=True) + b3               # (Ns, 1)

    # Manual backprop of mean((pred - y)^2).
    dpred = g_scale * (pred - sy)                                       # (Ns, 1)

    dw3r = jnp.sum(dpred * a2, axis=0, keepdims=True)                   # (1, D2)
    db3 = jnp.sum(dpred, axis=0, keepdims=True)                         # (1, 1)

    da2 = dpred * w3r                                                   # (Ns, D2)
    dz2 = jnp.where(z2 > 0.0, da2, 0.0)
    # Contract over the row axis directly; no transposed activation copies.
    dw2t = lax.dot_general(a1, dz2, (((0,), (0,)), ((), ())),
                           preferred_element_type=jnp.float32)          # (D1, D2)
    db2 = jnp.sum(dz2, axis=0, keepdims=True)                           # (1, D2)

    da1 = lax.dot_general(dz2, w2t, (((1,), (1,)), ((), ())),
                          preferred_element_type=jnp.float32)           # (Ns, D1)
    dz1 = jnp.where(z1 > 0.0, da1, 0.0)
    dw1t = lax.dot_general(sx, dz1, (((0,), (0,)), ((), ())),
                           preferred_element_type=jnp.float32)          # (D0, D1)
    db1 = jnp.sum(dz1, axis=0, keepdims=True)                           # (1, D1)

    # SGD-style local (fast-weight) update.
    return (w1t - local_lr * dw1t, b1 - local_lr * db1,
            w2t - local_lr * dw2t, b2 - local_lr * db2,
            w3r - local_lr * dw3r, b3 - local_lr * db3)


def _query_row(qx, fast_w):
    """Query forward with fast weights; returns a lane-dense (1, Nq) row."""
    w1t, b1, w2t, b2, w3r, b3 = fast_w
    z1 = jnp.dot(qx, w1t, preferred_element_type=jnp.float32) + b1
    a1 = jnp.maximum(z1, 0.0)
    z2 = jnp.dot(a1, w2t, preferred_element_type=jnp.float32) + b2
    a2 = jnp.maximum(z2, 0.0)
    return lax.dot_general(w3r, a2, (((1,), (1,)), ((), ())),
                           preferred_element_type=jnp.float32) + b3     # (1, Nq)


# ----------------------------- Pallas kernel ------------------------------ #

def melu_block_kernel(x_ref, sy_ref,
                      w1_ref, b1_ref, w2_ref, b2_ref, w3_ref, b3_ref,
                      out_ref, *, local_lr, num_local_update,
                      ns, nq, tasks_per_block):
    """One grid block = `tasks_per_block` MeLU tasks.

    x_ref:  (B, Ns+Nq, D0)  per-task support rows then query rows
    sy_ref: (B, Ns, 1)      per-task support targets
    w*/b*:  shared slow weights (VMEM-resident across the whole grid)
    out_ref:(1, B*Nq)       lane-dense row of all query predictions in block
    """
    init = (w1_ref[...], b1_ref[...], w2_ref[...], b2_ref[...],
            w3_ref[...], b3_ref[...])
    g_scale = 2.0 / ns
    step = functools.partial(_inner_step, g_scale=g_scale, local_lr=local_lr)

    def task_slices(t):
        # Static-index / static-slice loads: only this task's rows hit vregs,
        # so vreg pressure stays bounded regardless of tasks_per_block.
        sx = x_ref[t, 0:ns, :]
        qx = x_ref[t, ns:ns + nq, :]
        sy = sy_ref[t]
        return sx, sy, qx

    # Process tasks two at a time: both tasks' inner-step bodies live in the
    # same fori_loop body so the LLO scheduler interleaves the two independent
    # dependence chains (hides MXU/XLU result-FIFO latency on these tiny
    # 8-row matmuls).  Only the pair's fast weights are loop carries.
    t = 0
    while t + 1 < tasks_per_block:
        sx_a, sy_a, qx_a = task_slices(t)
        sx_b, sy_b, qx_b = task_slices(t + 1)

        def pair_body(_, carry, sx_a=sx_a, sy_a=sy_a, sx_b=sx_b, sy_b=sy_b):
            fw_a, fw_b = carry
            return step(sx_a, sy_a, fw_a), step(sx_b, sy_b, fw_b)

        fw_a, fw_b = lax.fori_loop(0, num_local_update, pair_body,
                                   (init, init), unroll=True)
        out_ref[:, t * nq:(t + 1) * nq] = _query_row(qx_a, fw_a)
        out_ref[:, (t + 1) * nq:(t + 2) * nq] = _query_row(qx_b, fw_b)
        t += 2

    if t < tasks_per_block:  # odd trailing task in the block
        sx_a, sy_a, qx_a = task_slices(t)

        def solo_body(_, fw, sx_a=sx_a, sy_a=sy_a):
            return step(sx_a, sy_a, fw)

        fw = lax.fori_loop(0, num_local_update, solo_body, init, unroll=True)
        out_ref[:, t * nq:(t + 1) * nq] = _query_row(qx_a, fw)


# ------------------------------ JAX wrapper ------------------------------- #

def _choose_tasks_per_block(t, nq):
    """Pick tasks-per-block: keep grid >= 2 (v7x has 2 TCs) and, when there
    are enough tasks, make the output row >= 128 lanes for dense stores."""
    divisors = [d for d in range(1, t + 1) if t % d == 0]
    cands = [d for d in divisors if t // d >= 2] or divisors
    dense = [d for d in cands if d * nq >= 128]
    return min(dense) if dense else max(cands)


def melu_forward(sx_emb, sy, qx_emb, params, *, local_lr, num_local_update,
                 tasks_per_block=None):
    """Batched MeLU forward over T tasks in a single pallas_call.

    sx_emb: (T, Ns, D0)  support embeddings
    sy:     (T, Ns, 1)   support targets
    qx_emb: (T, Nq, D0)  query embeddings
    params: (w1, b1, w2, b2, w3, b3) in PyTorch nn.Linear layout
            w* = (out, in), b* = (1, out)
    returns (T, Nq, 1) query predictions.
    """
    t, ns, d0 = sx_emb.shape
    _, nq, _ = qx_emb.shape
    w1, b1, w2, b2, w3, b3 = params

    # Layout plumbing is free in the wrapper: pre-transpose once to (in, out)
    # so the kernel never transposes a weight inside the inner loop.
    w1t = jnp.asarray(w1).T                     # (D0, D1)
    w2t = jnp.asarray(w2).T                     # (D1, D2)
    w3r = jnp.asarray(w3)                       # (1, D2)  row vector
    b1a = jnp.asarray(b1).reshape(1, -1)
    b2a = jnp.asarray(b2).reshape(1, -1)
    b3a = jnp.asarray(b3).reshape(1, 1)
    d1 = w1t.shape[1]
    d2 = w2t.shape[1]

    if tasks_per_block is None:
        tasks_per_block = _choose_tasks_per_block(t, nq)
    assert t % tasks_per_block == 0, (t, tasks_per_block)
    nb = t // tasks_per_block

    # Pack support + query rows into one per-task slab: 2 input DMA
    # descriptors per block (x, sy) instead of 3.
    x_all = jnp.concatenate([sx_emb, qx_emb], axis=1)        # (T, Ns+Nq, D0)

    kernel = functools.partial(
        melu_block_kernel, local_lr=local_lr,
        num_local_update=num_local_update, ns=ns, nq=nq,
        tasks_per_block=tasks_per_block)

    # Advisory cost so XLA schedules the (tiny) custom call sensibly.
    step_flops = 4 * ns * d0 * d1 + 6 * ns * d1 * d2 + 6 * ns * d2
    query_flops = 2 * nq * (d0 * d1 + d1 * d2 + d2)
    flops = int(t * (num_local_update * step_flops + query_flops))
    bytes_accessed = int(4 * (x_all.size + sy.size + t * nq
                              + w1t.size + b1a.size + w2t.size + b2a.size
                              + w3r.size + b3a.size))
    cost = pl.CostEstimate(flops=flops, transcendentals=0,
                           bytes_accessed=bytes_accessed)

    b = tasks_per_block
    out_rows = pl.pallas_call(
        kernel,
        out_shape=jax.ShapeDtypeStruct((nb, 1, b * nq), jnp.float32),
        grid=(nb,),
        in_specs=[
            # Per-block task slabs (B tasks per grid step).
            pl.BlockSpec((b, ns + nq, d0), lambda i: (i, 0, 0)),   # packed x
            pl.BlockSpec((b, ns, 1), lambda i: (i, 0, 0)),         # support y
            # Shared weights: same block every grid step -> stays VMEM-resident.
            pl.BlockSpec((d0, d1), lambda i: (0, 0)),              # w1t
            pl.BlockSpec((1, d1), lambda i: (0, 0)),               # b1
            pl.BlockSpec((d1, d2), lambda i: (0, 0)),              # w2t
            pl.BlockSpec((1, d2), lambda i: (0, 0)),               # b2
            pl.BlockSpec((1, d2), lambda i: (0, 0)),               # w3r
            pl.BlockSpec((1, 1), lambda i: (0, 0)),                # b3
        ],
        # Lane-dense output: one (1, B*Nq) row per block.
        out_specs=pl.BlockSpec((None, 1, b * nq), lambda i: (i, 0, 0)),
        compiler_params=pltpu.CompilerParams(
            # Task-block axis is independent -> shards across TCs on v7x.
            dimension_semantics=("parallel",),
            # Per-block footprint is well under 1 MiB; 32 MiB is safe on
            # v5e/v6e/v7x VMEM, no generation-specific retiling needed.
            vmem_limit_bytes=32 * 1024 * 1024),
        cost_estimate=cost,
    )(x_all, sy, w1t, b1a, w2t, b2a, w3r, b3a)

    # (nb, 1, B*Nq) -> (T, Nq, 1): lanes are ordered [task, query] within each
    # block row, so the reshape is order-preserving and matches per-task
    # linear_out output .view(-1, 1).
    return out_rows.reshape(t, nq, 1)


# Reference in plain JAX (autodiff) for a sanity check (one task).
def melu_reference_single(sx, sy, qx, params, *, local_lr, num_local_update):
    def fwd(p, x):
        w1, b1, w2, b2, w3, b3 = p
        a1 = jnp.maximum(x @ w1.T + b1, 0.0)
        a2 = jnp.maximum(a1 @ w2.T + b2, 0.0)
        return a2 @ w3.T + b3

    def loss_fn(p):
        return jnp.mean((fwd(p, sx) - sy) ** 2)

    p = params
    for _ in range(num_local_update):
        g = jax.grad(loss_fn)(p)
        p = tuple(pi - local_lr * gi for pi, gi in zip(p, g))
    return fwd(p, qx)


# --------------------------------- main ----------------------------------- #

if __name__ == "__main__":
    # Synthetic config (mirrors config['...'] entries of the original module).
    embedding_dim = 8
    item_num_cols = 2
    user_num_cols = 2
    num_features = item_num_cols + user_num_cols        # 4
    fc1_in_dim = embedding_dim * num_features            # 32
    first_fc_hidden_dim = 64
    second_fc_hidden_dim = 32
    local_lr = 0.01
    num_local_update = 3
    vocab = 10
    n_tasks = 4
    n_support, n_query = 8, 8

    key = jax.random.PRNGKey(0)
    keys = jax.random.split(key, 16)

    # Embedding tables (stand-ins for embeddings.item / embeddings.user).
    # TODO(synk): the real item_emb/user_emb come from an external `embeddings`
    # factory over dataset columns; modeled here as one table per feature column.
    item_tables = [jax.random.normal(keys[i], (vocab, embedding_dim), jnp.float32) * 0.1
                   for i in range(item_num_cols)]
    user_tables = [jax.random.normal(keys[4 + i], (vocab, embedding_dim), jnp.float32) * 0.1
                   for i in range(user_num_cols)]

    def init_linear(k, out_dim, in_dim):
        kw, kb = jax.random.split(k)
        bound = 1.0 / jnp.sqrt(in_dim)
        w = jax.random.uniform(kw, (out_dim, in_dim), jnp.float32, -bound, bound)
        b = jax.random.uniform(kb, (1, out_dim), jnp.float32, -bound, bound)
        return w, b

    w1, b1 = init_linear(keys[8], first_fc_hidden_dim, fc1_in_dim)
    w2, b2 = init_linear(keys[9], second_fc_hidden_dim, first_fc_hidden_dim)
    w3, b3 = init_linear(keys[10], 1, second_fc_hidden_dim)
    params = (w1, b1, w2, b2, w3, b3)

    # Raw inputs per task: integer feature ids [item cols | user cols] + ratings.
    support_x = jax.random.randint(keys[11], (n_tasks, n_support, num_features), 0, vocab)
    query_x = jax.random.randint(keys[12], (n_tasks, n_query, num_features), 0, vocab)
    support_y = jax.random.uniform(keys[13], (n_tasks, n_support), jnp.float32, 1.0, 5.0)

    # Embedding lookup + concat (glue, outside the kernel — same role as
    # item_emb / user_emb / torch.cat in user_preference_estimator.forward).
    def embed(x_int):
        items_col = x_int[..., :item_num_cols]
        users_col = x_int[..., item_num_cols:]
        item_emb = jnp.concatenate(
            [item_tables[j][items_col[..., j]] for j in range(item_num_cols)], axis=-1)
        user_emb = jnp.concatenate(
            [user_tables[j][users_col[..., j]] for j in range(user_num_cols)], axis=-1)
        return jnp.concatenate([item_emb, user_emb], axis=-1)   # (..., fc1_in_dim)

    sx_emb = embed(support_x)                      # (T, Ns, 32)
    qx_emb = embed(query_x)                        # (T, Nq, 32)
    sy = support_y[..., None]                      # (T, Ns, 1)  support_set_y.view(-1, 1)

    out = melu_forward(sx_emb, sy, qx_emb, params,
                       local_lr=local_lr, num_local_update=num_local_update)
    out = jax.block_until_ready(out)

    ref_fn = jax.vmap(functools.partial(
        melu_reference_single, params=params,
        local_lr=local_lr, num_local_update=num_local_update))
    ref = ref_fn(sx_emb, sy, qx_emb)               # (T, Nq, 1)

    assert out.shape == (n_tasks, n_query, 1)
    assert jnp.allclose(out, ref, rtol=1e-3, atol=1e-3), (out, ref)

    print("KERNEL_OK")
</pallas_src>

<mosaic_0001>
module attributes {stable_mosaic.version = 11 : i64} {
  func.func @melu_block_kernel(%arg0: i32, %arg1: memref<2x16x32xf32, #tpu.memory_space<vmem>>, %arg2: memref<2x8x1xf32, #tpu.memory_space<vmem>>, %arg3: memref<32x64xf32, #tpu.memory_space<vmem>>, %arg4: memref<1x64xf32, #tpu.memory_space<vmem>>, %arg5: memref<64x32xf32, #tpu.memory_space<vmem>>, %arg6: memref<1x32xf32, #tpu.memory_space<vmem>>, %arg7: memref<1x32xf32, #tpu.memory_space<vmem>>, %arg8: memref<1x1xf32, #tpu.memory_space<vmem>>, %arg9: memref<1x1x16xf32, #tpu.memory_space<vmem>>) attributes {dimension_semantics = [#tpu.dimension_semantics<parallel>], iteration_bounds = array<i64: 2>, scalar_prefetch = 0 : i64, scratch_operands = 0 : i64, tpu.core_type = #tpu.core_type<tc>, window_params = [{transform_indices = @transform_0, window_bounds = array<i64: 2, 16, 32>}, {transform_indices = @transform_1, window_bounds = array<i64: 2, 8, 1>}, {pipeline_mode = #tpu.pipeline_mode<synchronous>, transform_indices = @transform_2, window_bounds = array<i64: 32, 64>}, {pipeline_mode = #tpu.pipeline_mode<synchronous>, transform_indices = @transform_3, window_bounds = array<i64: 1, 64>}, {pipeline_mode = #tpu.pipeline_mode<synchronous>, transform_indices = @transform_4, window_bounds = array<i64: 64, 32>}, {pipeline_mode = #tpu.pipeline_mode<synchronous>, transform_indices = @transform_5, window_bounds = array<i64: 1, 32>}, {pipeline_mode = #tpu.pipeline_mode<synchronous>, transform_indices = @transform_6, window_bounds = array<i64: 1, 32>}, {pipeline_mode = #tpu.pipeline_mode<synchronous>, transform_indices = @transform_7, window_bounds = array<i64: 1, 1>}, {transform_indices = @transform_8, window_bounds = array<i64: 1, 1, 16>}]} {
    %c0 = arith.constant 0 : index
    %c0_0 = arith.constant 0 : index
    %0 = vector.load %arg3[%c0, %c0_0] : memref<32x64xf32, #tpu.memory_space<vmem>>, vector<32x64xf32>
    %c0_1 = arith.constant 0 : index
    %c0_2 = arith.constant 0 : index
    %1 = vector.load %arg4[%c0_1, %c0_2] : memref<1x64xf32, #tpu.memory_space<vmem>>, vector<1x64xf32>
    %c0_3 = arith.constant 0 : index
    %c0_4 = arith.constant 0 : index
    %2 = vector.load %arg5[%c0_3, %c0_4] : memref<64x32xf32, #tpu.memory_space<vmem>>, vector<64x32xf32>
    %c0_5 = arith.constant 0 : index
    %c0_6 = arith.constant 0 : index
    %3 = vector.load %arg6[%c0_5, %c0_6] : memref<1x32xf32, #tpu.memory_space<vmem>>, vector<1x32xf32>
    %c0_7 = arith.constant 0 : index
    %c0_8 = arith.constant 0 : index
    %4 = vector.load %arg7[%c0_7, %c0_8] : memref<1x32xf32, #tpu.memory_space<vmem>>, vector<1x32xf32>
    %c0_9 = arith.constant 0 : index
    %c0_10 = arith.constant 0 : index
    %5 = vector.load %arg8[%c0_9, %c0_10] : memref<1x1xf32, #tpu.memory_space<vmem>>, vector<1x1xf32>
    %c0_11 = arith.constant 0 : index
    %c0_12 = arith.constant 0 : index
    %c0_13 = arith.constant 0 : index
    %6 = vector.load %arg1[%c0_11, %c0_12, %c0_13] : memref<2x16x32xf32, #tpu.memory_space<vmem>>, vector<1x8x32xf32>
    %7 = vector.shape_cast %6 : vector<1x8x32xf32> to vector<8x32xf32>
    %c0_14 = arith.constant 0 : index
    %c8 = arith.constant 8 : index
    %c0_15 = arith.constant 0 : index
    %8 = vector.load %arg1[%c0_14, %c8, %c0_15] : memref<2x16x32xf32, #tpu.memory_space<vmem>>, vector<1x8x32xf32>
    %9 = vector.shape_cast %8 : vector<1x8x32xf32> to vector<8x32xf32>
    %c0_16 = arith.constant 0 : index
    %c0_17 = arith.constant 0 : index
    %c0_18 = arith.constant 0 : index
    %10 = vector.load %arg2[%c0_16, %c0_17, %c0_18] : memref<2x8x1xf32, #tpu.memory_space<vmem>>, vector<1x8x1xf32>
    %11 = vector.shape_cast %10 : vector<1x8x1xf32> to vector<8x1xf32>
    %c1 = arith.constant 1 : index
    %c0_19 = arith.constant 0 : index
    %c0_20 = arith.constant 0 : index
    %12 = vector.load %arg1[%c1, %c0_19, %c0_20] : memref<2x16x32xf32, #tpu.memory_space<vmem>>, vector<1x8x32xf32>
    %13 = vector.shape_cast %12 : vector<1x8x32xf32> to vector<8x32xf32>
    %c1_21 = arith.constant 1 : index
    %c8_22 = arith.constant 8 : index
    %c0_23 = arith.constant 0 : index
    %14 = vector.load %arg1[%c1_21, %c8_22, %c0_23] : memref<2x16x32xf32, #tpu.memory_space<vmem>>, vector<1x8x32xf32>
    %15 = vector.shape_cast %14 : vector<1x8x32xf32> to vector<8x32xf32>
    %c1_24 = arith.constant 1 : index
    %c0_25 = arith.constant 0 : index
    %c0_26 = arith.constant 0 : index
    %16 = vector.load %arg2[%c1_24, %c0_25, %c0_26] : memref<2x8x1xf32, #tpu.memory_space<vmem>>, vector<1x8x1xf32>
    %17 = vector.shape_cast %16 : vector<1x8x1xf32> to vector<8x1xf32>
    %c0_i32 = arith.constant 0 : i32
    %cst = arith.constant dense<0.000000e+00> : vector<8x64xf32>
    %18 = tpu.matmul %7, %0, %cst {dimension_numbers = #tpu.dot_dimension_numbers<[1], [0], [0], [1], [0, 0, 1, 1], [], []>} : vector<8x32xf32>, vector<32x64xf32>, vector<8x64xf32> -> vector<8x64xf32>
    %19 = vector.broadcast %1 : vector<1x64xf32> to vector<8x64xf32>
    %20 = arith.addf %18, %19 : vector<8x64xf32>
    %cst_27 = arith.constant 0.000000e+00 : f32
    %21 = vector.broadcast %cst_27 : f32 to vector<8x64xf32>
    %22 = arith.maximumf %20, %21 : vector<8x64xf32>
    %cst_28 = arith.constant dense<0.000000e+00> : vector<8x32xf32>
    %23 = tpu.matmul %22, %2, %cst_28 {dimension_numbers = #tpu.dot_dimension_numbers<[1], [0], [0], [1], [0, 0, 1, 1], [], []>} : vector<8x64xf32>, vector<64x32xf32>, vector<8x32xf32> -> vector<8x32xf32>
    %24 = vector.broadcast %3 : vector<1x32xf32> to vector<8x32xf32>
    %25 = arith.addf %23, %24 : vector<8x32xf32>
    %cst_29 = arith.constant 0.000000e+00 : f32
    %26 = vector.broadcast %cst_29 : f32 to vector<8x32xf32>
    %27 = arith.maximumf %25, %26 : vector<8x32xf32>
    %28 = vector.broadcast %4 : vector<1x32xf32> to vector<8x32xf32>
    %29 = arith.mulf %27, %28 : vector<8x32xf32>
    %cst_30 = arith.constant dense<0.000000e+00> : vector<8xf32>
    %30 = vector.multi_reduction <add>, %29, %cst_30 [1] : vector<8x32xf32> to vector<8xf32>
    %31 = vector.shape_cast %30 : vector<8xf32> to vector<8x1xf32>
    %32 = vector.broadcast %5 : vector<1x1xf32> to vector<8x1xf32>
    %33 = arith.addf %31, %32 : vector<8x1xf32>
    %34 = arith.subf %33, %11 : vector<8x1xf32>
    %cst_31 = arith.constant 2.500000e-01 : f32
    %35 = vector.broadcast %cst_31 : f32 to vector<8x1xf32>
    %36 = arith.mulf %35, %34 : vector<8x1xf32>
    %37 = vector.broadcast %36 : vector<8x1xf32> to vector<8x32xf32>
    %38 = arith.mulf %37, %27 : vector<8x32xf32>
    %cst_32 = arith.constant dense<0.000000e+00> : vector<32xf32>
    %39 = vector.multi_reduction <add>, %38, %cst_32 [0] : vector<8x32xf32> to vector<32xf32>
    %40 = vector.shape_cast %39 : vector<32xf32> to vector<1x32xf32>
    %cst_33 = arith.constant dense<0.000000e+00> : vector<1xf32>
    %41 = vector.multi_reduction <add>, %36, %cst_33 [0] : vector<8x1xf32> to vector<1xf32>
    %42 = vector.shape_cast %41 : vector<1xf32> to vector<1x1xf32>
    %43 = vector.broadcast %36 : vector<8x1xf32> to vector<8x32xf32>
    %44 = vector.broadcast %4 : vector<1x32xf32> to vector<8x32xf32>
    %45 = arith.mulf %43, %44 : vector<8x32xf32>
    %cst_34 = arith.constant 0.000000e+00 : f32
    %46 = vector.broadcast %cst_34 : f32 to vector<8x32xf32>
    %47 = arith.cmpf ogt, %25, %46 : vector<8x32xf32>
    %cst_35 = arith.constant 0.000000e+00 : f32
    %48 = vector.broadcast %cst_35 : f32 to vector<8x32xf32>
    %49 = arith.select %47, %45, %48 : vector<8x32xi1>, vector<8x32xf32>
    %cst_36 = arith.constant dense<0.000000e+00> : vector<64x32xf32>
    %50 = tpu.matmul %22, %49, %cst_36 {dimension_numbers = #tpu.dot_dimension_numbers<[0], [0], [1], [1], [0, 1, 1, 1], [], []>} : vector<8x64xf32>, vector<8x32xf32>, vector<64x32xf32> -> vector<64x32xf32>
    %cst_37 = arith.constant dense<0.000000e+00> : vector<32xf32>
    %51 = vector.multi_reduction <add>, %49, %cst_37 [0] : vector<8x32xf32> to vector<32xf32>
    %52 = vector.shape_cast %51 : vector<32xf32> to vector<1x32xf32>
    %cst_38 = arith.constant dense<0.000000e+00> : vector<8x64xf32>
    %53 = tpu.matmul %49, %2, %cst_38 {dimension_numbers = #tpu.dot_dimension_numbers<[1], [1], [0], [0], [0, 0, 1, 0], [], []>} : vector<8x32xf32>, vector<64x32xf32>, vector<8x64xf32> -> vector<8x64xf32>
    %cst_39 = arith.constant 0.000000e+00 : f32
    %54 = vector.broadcast %cst_39 : f32 to vector<8x64xf32>
    %55 = arith.cmpf ogt, %20, %54 : vector<8x64xf32>
    %cst_40 = arith.constant 0.000000e+00 : f32
    %56 = vector.broadcast %cst_40 : f32 to vector<8x64xf32>
    %57 = arith.select %55, %53, %56 : vector<8x64xi1>, vector<8x64xf32>
    %cst_41 = arith.constant dense<0.000000e+00> : vector<32x64xf32>
    %58 = tpu.matmul %7, %57, %cst_41 {dimension_numbers = #tpu.dot_dimension_numbers<[0], [0], [1], [1], [0, 1, 1, 1], [], []>} : vector<8x32xf32>, vector<8x64xf32>, vector<32x64xf32> -> vector<32x64xf32>
    %cst_42 = arith.constant dense<0.000000e+00> : vector<64xf32>
    %59 = vector.multi_reduction <add>, %57, %cst_42 [0] : vector<8x64xf32> to vector<64xf32>
    %60 = vector.shape_cast %59 : vector<64xf32> to vector<1x64xf32>
    %cst_43 = arith.constant 0.00999999977 : f32
    %61 = vector.broadcast %cst_43 : f32 to vector<32x64xf32>
    %62 = arith.mulf %61, %58 : vector<32x64xf32>
    %63 = arith.subf %0, %62 : vector<32x64xf32>
    %cst_44 = arith.constant 0.00999999977 : f32
    %64 = vector.broadcast %cst_44 : f32 to vector<1x64xf32>
    %65 = arith.mulf %64, %60 : vector<1x64xf32>
    %66 = arith.subf %1, %65 : vector<1x64xf32>
    %cst_45 = arith.constant 0.00999999977 : f32
    %67 = vector.broadcast %cst_45 : f32 to vector<64x32xf32>
    %68 = arith.mulf %67, %50 : vector<64x32xf32>
    %69 = arith.subf %2, %68 : vector<64x32xf32>
    %cst_46 = arith.constant 0.00999999977 : f32
    %70 = vector.broadcast %cst_46 : f32 to vector<1x32xf32>
    %71 = arith.mulf %70, %52 : vector<1x32xf32>
    %72 = arith.subf %3, %71 : vector<1x32xf32>
    %cst_47 = arith.constant 0.00999999977 : f32
    %73 = vector.broadcast %cst_47 : f32 to vector<1x32xf32>
    %74 = arith.mulf %73, %40 : vector<1x32xf32>
    %75 = arith.subf %4, %74 : vector<1x32xf32>
    %cst_48 = arith.constant 0.00999999977 : f32
    %76 = vector.broadcast %cst_48 : f32 to vector<1x1xf32>
    %77 = arith.mulf %76, %42 : vector<1x1xf32>
    %78 = arith.subf %5, %77 : vector<1x1xf32>
    %cst_49 = arith.constant dense<0.000000e+00> : vector<8x64xf32>
    %79 = tpu.matmul %13, %0, %cst_49 {dimension_numbers = #tpu.dot_dimension_numbers<[1], [0], [0], [1], [0, 0, 1, 1], [], []>} : vector<8x32xf32>, vector<32x64xf32>, vector<8x64xf32> -> vector<8x64xf32>
    %80 = vector.broadcast %1 : vector<1x64xf32> to vector<8x64xf32>
    %81 = arith.addf %79, %80 : vector<8x64xf32>
    %cst_50 = arith.constant 0.000000e+00 : f32
    %82 = vector.broadcast %cst_50 : f32 to vector<8x64xf32>
    %83 = arith.maximumf %81, %82 : vector<8x64xf32>
    %cst_51 = arith.constant dense<0.000000e+00> : vector<8x32xf32>
    %84 = tpu.matmul %83, %2, %cst_51 {dimension_numbers = #tpu.dot_dimension_numbers<[1], [0], [0], [1], [0, 0, 1, 1], [], []>} : vector<8x64xf32>, vector<64x32xf32>, vector<8x32xf32> -> vector<8x32xf32>
    %85 = vector.broadcast %3 : vector<1x32xf32> to vector<8x32xf32>
    %86 = arith.addf %84, %85 : vector<8x32xf32>
    %cst_52 = arith.constant 0.000000e+00 : f32
    %87 = vector.broadcast %cst_52 : f32 to vector<8x32xf32>
    %88 = arith.maximumf %86, %87 : vector<8x32xf32>
    %89 = vector.broadcast %4 : vector<1x32xf32> to vector<8x32xf32>
    %90 = arith.mulf %88, %89 : vector<8x32xf32>
    %cst_53 = arith.constant dense<0.000000e+00> : vector<8xf32>
    %91 = vector.multi_reduction <add>, %90, %cst_53 [1] : vector<8x32xf32> to vector<8xf32>
    %92 = vector.shape_cast %91 : vector<8xf32> to vector<8x1xf32>
    %93 = vector.broadcast %5 : vector<1x1xf32> to vector<8x1xf32>
    %94 = arith.addf %92, %93 : vector<8x1xf32>
    %95 = arith.subf %94, %17 : vector<8x1xf32>
    %cst_54 = arith.constant 2.500000e-01 : f32
    %96 = vector.broadcast %cst_54 : f32 to vector<8x1xf32>
    %97 = arith.mulf %96, %95 : vector<8x1xf32>
    %98 = vector.broadcast %97 : vector<8x1xf32> to vector<8x32xf32>
    %99 = arith.mulf %98, %88 : vector<8x32xf32>
    %cst_55 = arith.constant dense<0.000000e+00> : vector<32xf32>
    %100 = vector.multi_reduction <add>, %99, %cst_55 [0] : vector<8x32xf32> to vector<32xf32>
    %101 = vector.shape_cast %100 : vector<32xf32> to vector<1x32xf32>
    %cst_56 = arith.constant dense<0.000000e+00> : vector<1xf32>
    %102 = vector.multi_reduction <add>, %97, %cst_56 [0] : vector<8x1xf32> to vector<1xf32>
    %103 = vector.shape_cast %102 : vector<1xf32> to vector<1x1xf32>
    %104 = vector.broadcast %97 : vector<8x1xf32> to vector<8x32xf32>
    %105 = vector.broadcast %4 : vector<1x32xf32> to vector<8x32xf32>
    %106 = arith.mulf %104, %105 : vector<8x32xf32>
    %cst_57 = arith.constant 0.000000e+00 : f32
    %107 = vector.broadcast %cst_57 : f32 to vector<8x32xf32>
    %108 = arith.cmpf ogt, %86, %107 : vector<8x32xf32>
    %cst_58 = arith.constant 0.000000e+00 : f32
    %109 = vector.broadcast %cst_58 : f32 to vector<8x32xf32>
    %110 = arith.select %108, %106, %109 : vector<8x32xi1>, vector<8x32xf32>
    %cst_59 = arith.constant dense<0.000000e+00> : vector<64x32xf32>
    %111 = tpu.matmul %83, %110, %cst_59 {dimension_numbers = #tpu.dot_dimension_numbers<[0], [0], [1], [1], [0, 1, 1, 1], [], []>} : vector<8x64xf32>, vector<8x32xf32>, vector<64x32xf32> -> vector<64x32xf32>
    %cst_60 = arith.constant dense<0.000000e+00> : vector<32xf32>
    %112 = vector.multi_reduction <add>, %110, %cst_60 [0] : vector<8x32xf32> to vector<32xf32>
    %113 = vector.shape_cast %112 : vector<32xf32> to vector<1x32xf32>
    %cst_61 = arith.constant dense<0.000000e+00> : vector<8x64xf32>
    %114 = tpu.matmul %110, %2, %cst_61 {dimension_numbers = #tpu.dot_dimension_numbers<[1], [1], [0], [0], [0, 0, 1, 0], [], []>} : vector<8x32xf32>, vector<64x32xf32>, vector<8x64xf32> -> vector<8x64xf32>
    %cst_62 = arith.constant 0.000000e+00 : f32
    %115 = vector.broadcast %cst_62 : f32 to vector<8x64xf32>
    %116 = arith.cmpf ogt, %81, %115 : vector<8x64xf32>
    %cst_63 = arith.constant 0.000000e+00 : f32
    %117 = vector.broadcast %cst_63 : f32 to vector<8x64xf32>
    %118 = arith.select %116, %114, %117 : vector<8x64xi1>, vector<8x64xf32>
    %cst_64 = arith.constant dense<0.000000e+00> : vector<32x64xf32>
    %119 = tpu.matmul %13, %118, %cst_64 {dimension_numbers = #tpu.dot_dimension_numbers<[0], [0], [1], [1], [0, 1, 1, 1], [], []>} : vector<8x32xf32>, vector<8x64xf32>, vector<32x64xf32> -> vector<32x64xf32>
    %cst_65 = arith.constant dense<0.000000e+00> : vector<64xf32>
    %120 = vector.multi_reduction <add>, %118, %cst_65 [0] : vector<8x64xf32> to vector<64xf32>
    %121 = vector.shape_cast %120 : vector<64xf32> to vector<1x64xf32>
    %cst_66 = arith.constant 0.00999999977 : f32
    %122 = vector.broadcast %cst_66 : f32 to vector<32x64xf32>
    %123 = arith.mulf %122, %119 : vector<32x64xf32>
    %124 = arith.subf %0, %123 : vector<32x64xf32>
    %cst_67 = arith.constant 0.00999999977 : f32
    %125 = vector.broadcast %cst_67 : f32 to vector<1x64xf32>
    %126 = arith.mulf %125, %121 : vector<1x64xf32>
    %127 = arith.subf %1, %126 : vector<1x64xf32>
    %cst_68 = arith.constant 0.00999999977 : f32
    %128 = vector.broadcast %cst_68 : f32 to vector<64x32xf32>
    %129 = arith.mulf %128, %111 : vector<64x32xf32>
    %130 = arith.subf %2, %129 : vector<64x32xf32>
    %cst_69 = arith.constant 0.00999999977 : f32
    %131 = vector.broadcast %cst_69 : f32 to vector<1x32xf32>
    %132 = arith.mulf %131, %113 : vector<1x32xf32>
    %133 = arith.subf %3, %132 : vector<1x32xf32>
    %cst_70 = arith.constant 0.00999999977 : f32
    %134 = vector.broadcast %cst_70 : f32 to vector<1x32xf32>
    %135 = arith.mulf %134, %101 : vector<1x32xf32>
    %136 = arith.subf %4, %135 : vector<1x32xf32>
    %cst_71 = arith.constant 0.00999999977 : f32
    %137 = vector.broadcast %cst_71 : f32 to vector<1x1xf32>
    %138 = arith.mulf %137, %103 : vector<1x1xf32>
    %139 = arith.subf %5, %138 : vector<1x1xf32>
    %c1_i32 = arith.constant 1 : i32
    %cst_72 = arith.constant dense<0.000000e+00> : vector<8x64xf32>
    %140 = tpu.matmul %7, %63, %cst_72 {dimension_numbers = #tpu.dot_dimension_numbers<[1], [0], [0], [1], [0, 0, 1, 1], [], []>} : vector<8x32xf32>, vector<32x64xf32>, vector<8x64xf32> -> vector<8x64xf32>
    %141 = vector.broadcast %66 : vector<1x64xf32> to vector<8x64xf32>
    %142 = arith.addf %140, %141 : vector<8x64xf32>
    %cst_73 = arith.constant 0.000000e+00 : f32
    %143 = vector.broadcast %cst_73 : f32 to vector<8x64xf32>
    %144 = arith.maximumf %142, %143 : vector<8x64xf32>
    %cst_74 = arith.constant dense<0.000000e+00> : vector<8x32xf32>
    %145 = tpu.matmul %144, %69, %cst_74 {dimension_numbers = #tpu.dot_dimension_numbers<[1], [0], [0], [1], [0, 0, 1, 1], [], []>} : vector<8x64xf32>, vector<64x32xf32>, vector<8x32xf32> -> vector<8x32xf32>
    %146 = vector.broadcast %72 : vector<1x32xf32> to vector<8x32xf32>
    %147 = arith.addf %145, %146 : vector<8x32xf32>
    %cst_75 = arith.constant 0.000000e+00 : f32
    %148 = vector.broadcast %cst_75 : f32 to vector<8x32xf32>
    %149 = arith.maximumf %147, %148 : vector<8x32xf32>
    %150 = vector.broadcast %75 : vector<1x32xf32> to vector<8x32xf32>
    %151 = arith.mulf %149, %150 : vector<8x32xf32>
    %cst_76 = arith.constant dense<0.000000e+00> : vector<8xf32>
    %152 = vector.multi_reduction <add>, %151, %cst_76 [1] : vector<8x32xf32> to vector<8xf32>
    %153 = vector.shape_cast %152 : vector<8xf32> to vector<8x1xf32>
    %154 = vector.broadcast %78 : vector<1x1xf32> to vector<8x1xf32>
    %155 = arith.addf %153, %154 : vector<8x1xf32>
    %156 = arith.subf %155, %11 : vector<8x1xf32>
    %cst_77 = arith.constant 2.500000e-01 : f32
    %157 = vector.broadcast %cst_77 : f32 to vector<8x1xf32>
    %158 = arith.mulf %157, %156 : vector<8x1xf32>
    %159 = vector.broadcast %158 : vector<8x1xf32> to vector<8x32xf32>
    %160 = arith.mulf %159, %149 : vector<8x32xf32>
    %cst_78 = arith.constant dense<0.000000e+00> : vector<32xf32>
    %161 = vector.multi_reduction <add>, %160, %cst_78 [0] : vector<8x32xf32> to vector<32xf32>
    %162 = vector.shape_cast %161 : vector<32xf32> to vector<1x32xf32>
    %cst_79 = arith.constant dense<0.000000e+00> : vector<1xf32>
    %163 = vector.multi_reduction <add>, %158, %cst_79 [0] : vector<8x1xf32> to vector<1xf32>
    %164 = vector.shape_cast %163 : vector<1xf32> to vector<1x1xf32>
    %165 = vector.broadcast %158 : vector<8x1xf32> to vector<8x32xf32>
    %166 = vector.broadcast %75 : vector<1x32xf32> to vector<8x32xf32>
    %167 = arith.mulf %165, %166 : vector<8x32xf32>
    %cst_80 = arith.constant 0.000000e+00 : f32
    %168 = vector.broadcast %cst_80 : f32 to vector<8x32xf32>
    %169 = arith.cmpf ogt, %147, %168 : vector<8x32xf32>
    %cst_81 = arith.constant 0.000000e+00 : f32
    %170 = vector.broadcast %cst_81 : f32 to vector<8x32xf32>
    %171 = arith.select %169, %167, %170 : vector<8x32xi1>, vector<8x32xf32>
    %cst_82 = arith.constant dense<0.000000e+00> : vector<64x32xf32>
    %172 = tpu.matmul %144, %171, %cst_82 {dimension_numbers = #tpu.dot_dimension_numbers<[0], [0], [1], [1], [0, 1, 1, 1], [], []>} : vector<8x64xf32>, vector<8x32xf32>, vector<64x32xf32> -> vector<64x32xf32>
    %cst_83 = arith.constant dense<0.000000e+00> : vector<32xf32>
    %173 = vector.multi_reduction <add>, %171, %cst_83 [0] : vector<8x32xf32> to vector<32xf32>
    %174 = vector.shape_cast %173 : vector<32xf32> to vector<1x32xf32>
    %cst_84 = arith.constant dense<0.000000e+00> : vector<8x64xf32>
    %175 = tpu.matmul %171, %69, %cst_84 {dimension_numbers = #tpu.dot_dimension_numbers<[1], [1], [0], [0], [0, 0, 1, 0], [], []>} : vector<8x32xf32>, vector<64x32xf32>, vector<8x64xf32> -> vector<8x64xf32>
    %cst_85 = arith.constant 0.000000e+00 : f32
    %176 = vector.broadcast %cst_85 : f32 to vector<8x64xf32>
    %177 = arith.cmpf ogt, %142, %176 : vector<8x64xf32>
    %cst_86 = arith.constant 0.000000e+00 : f32
    %178 = vector.broadcast %cst_86 : f32 to vector<8x64xf32>
    %179 = arith.select %177, %175, %178 : vector<8x64xi1>, vector<8x64xf32>
    %cst_87 = arith.constant dense<0.000000e+00> : vector<32x64xf32>
    %180 = tpu.matmul %7, %179, %cst_87 {dimension_numbers = #tpu.dot_dimension_numbers<[0], [0], [1], [1], [0, 1, 1, 1], [], []>} : vector<8x32xf32>, vector<8x64xf32>, vector<32x64xf32> -> vector<32x64xf32>
    %cst_88 = arith.constant dense<0.000000e+00> : vector<64xf32>
    %181 = vector.multi_reduction <add>, %179, %cst_88 [0] : vector<8x64xf32> to vector<64xf32>
    %182 = vector.shape_cast %181 : vector<64xf32> to vector<1x64xf32>
    %cst_89 = arith.constant 0.00999999977 : f32
    %183 = vector.broadcast %cst_89 : f32 to vector<32x64xf32>
    %184 = arith.mulf %183, %180 : vector<32x64xf32>
    %185 = arith.subf %63, %184 : vector<32x64xf32>
    %cst_90 = arith.constant 0.00999999977 : f32
    %186 = vector.broadcast %cst_90 : f32 to vector<1x64xf32>
    %187 = arith.mulf %186, %182 : vector<1x64xf32>
    %188 = arith.subf %66, %187 : vector<1x64xf32>
    %cst_91 = arith.constant 0.00999999977 : f32
    %189 = vector.broadcast %cst_91 : f32 to vector<64x32xf32>
    %190 = arith.mulf %189, %172 : vector<64x32xf32>
    %191 = arith.subf %69, %190 : vector<64x32xf32>
    %cst_92 = arith.constant 0.00999999977 : f32
    %192 = vector.broadcast %cst_92 : f32 to vector<1x32xf32>
    %193 = arith.mulf %192, %174 : vector<1x32xf32>
    %194 = arith.subf %72, %193 : vector<1x32xf32>
    %cst_93 = arith.constant 0.00999999977 : f32
    %195 = vector.broadcast %cst_93 : f32 to vector<1x32xf32>
    %196 = arith.mulf %195, %162 : vector<1x32xf32>
    %197 = arith.subf %75, %196 : vector<1x32xf32>
    %cst_94 = arith.constant 0.00999999977 : f32
    %198 = vector.broadcast %cst_94 : f32 to vector<1x1xf32>
    %199 = arith.mulf %198, %164 : vector<1x1xf32>
    %200 = arith.subf %78, %199 : vector<1x1xf32>
    %cst_95 = arith.constant dense<0.000000e+00> : vector<8x64xf32>
    %201 = tpu.matmul %13, %124, %cst_95 {dimension_numbers = #tpu.dot_dimension_numbers<[1], [0], [0], [1], [0, 0, 1, 1], [], []>} : vector<8x32xf32>, vector<32x64xf32>, vector<8x64xf32> -> vector<8x64xf32>
    %202 = vector.broadcast %127 : vector<1x64xf32> to vector<8x64xf32>
    %203 = arith.addf %201, %202 : vector<8x64xf32>
    %cst_96 = arith.constant 0.000000e+00 : f32
    %204 = vector.broadcast %cst_96 : f32 to vector<8x64xf32>
    %205 = arith.maximumf %203, %204 : vector<8x64xf32>
    %cst_97 = arith.constant dense<0.000000e+00> : vector<8x32xf32>
    %206 = tpu.matmul %205, %130, %cst_97 {dimension_numbers = #tpu.dot_dimension_numbers<[1], [0], [0], [1], [0, 0, 1, 1], [], []>} : vector<8x64xf32>, vector<64x32xf32>, vector<8x32xf32> -> vector<8x32xf32>
    %207 = vector.broadcast %133 : vector<1x32xf32> to vector<8x32xf32>
    %208 = arith.addf %206, %207 : vector<8x32xf32>
    %cst_98 = arith.constant 0.000000e+00 : f32
    %209 = vector.broadcast %cst_98 : f32 to vector<8x32xf32>
    %210 = arith.maximumf %208, %209 : vector<8x32xf32>
    %211 = vector.broadcast %136 : vector<1x32xf32> to vector<8x32xf32>
    %212 = arith.mulf %210, %211 : vector<8x32xf32>
    %cst_99 = arith.constant dense<0.000000e+00> : vector<8xf32>
    %213 = vector.multi_reduction <add>, %212, %cst_99 [1] : vector<8x32xf32> to vector<8xf32>
    %214 = vector.shape_cast %213 : vector<8xf32> to vector<8x1xf32>
    %215 = vector.broadcast %139 : vector<1x1xf32> to vector<8x1xf32>
    %216 = arith.addf %214, %215 : vector<8x1xf32>
    %217 = arith.subf %216, %17 : vector<8x1xf32>
    %cst_100 = arith.constant 2.500000e-01 : f32
    %218 = vector.broadcast %cst_100 : f32 to vector<8x1xf32>
    %219 = arith.mulf %218, %217 : vector<8x1xf32>
    %220 = vector.broadcast %219 : vector<8x1xf32> to vector<8x32xf32>
    %221 = arith.mulf %220, %210 : vector<8x32xf32>
    %cst_101 = arith.constant dense<0.000000e+00> : vector<32xf32>
    %222 = vector.multi_reduction <add>, %221, %cst_101 [0] : vector<8x32xf32> to vector<32xf32>
    %223 = vector.shape_cast %222 : vector<32xf32> to vector<1x32xf32>
    %cst_102 = arith.constant dense<0.000000e+00> : vector<1xf32>
    %224 = vector.multi_reduction <add>, %219, %cst_102 [0] : vector<8x1xf32> to vector<1xf32>
    %225 = vector.shape_cast %224 : vector<1xf32> to vector<1x1xf32>
    %226 = vector.broadcast %219 : vector<8x1xf32> to vector<8x32xf32>
    %227 = vector.broadcast %136 : vector<1x32xf32> to vector<8x32xf32>
    %228 = arith.mulf %226, %227 : vector<8x32xf32>
    %cst_103 = arith.constant 0.000000e+00 : f32
    %229 = vector.broadcast %cst_103 : f32 to vector<8x32xf32>
    %230 = arith.cmpf ogt, %208, %229 : vector<8x32xf32>
    %cst_104 = arith.constant 0.000000e+00 : f32
    %231 = vector.broadcast %cst_104 : f32 to vector<8x32xf32>
    %232 = arith.select %230, %228, %231 : vector<8x32xi1>, vector<8x32xf32>
    %cst_105 = arith.constant dense<0.000000e+00> : vector<64x32xf32>
    %233 = tpu.matmul %205, %232, %cst_105 {dimension_numbers = #tpu.dot_dimension_numbers<[0], [0], [1], [1], [0, 1, 1, 1], [], []>} : vector<8x64xf32>, vector<8x32xf32>, vector<64x32xf32> -> vector<64x32xf32>
    %cst_106 = arith.constant dense<0.000000e+00> : vector<32xf32>
    %234 = vector.multi_reduction <add>, %232, %cst_106 [0] : vector<8x32xf32> to vector<32xf32>
    %235 = vector.shape_cast %234 : vector<32xf32> to vector<1x32xf32>
    %cst_107 = arith.constant dense<0.000000e+00> : vector<8x64xf32>
    %236 = tpu.matmul %232, %130, %cst_107 {dimension_numbers = #tpu.dot_dimension_numbers<[1], [1], [0], [0], [0, 0, 1, 0], [], []>} : vector<8x32xf32>, vector<64x32xf32>, vector<8x64xf32> -> vector<8x64xf32>
    %cst_108 = arith.constant 0.000000e+00 : f32
    %237 = vector.broadcast %cst_108 : f32 to vector<8x64xf32>
    %238 = arith.cmpf ogt, %203, %237 : vector<8x64xf32>
    %cst_109 = arith.constant 0.000000e+00 : f32
    %239 = vector.broadcast %cst_109 : f32 to vector<8x64xf32>
    %240 = arith.select %238, %236, %239 : vector<8x64xi1>, vector<8x64xf32>
    %cst_110 = arith.constant dense<0.000000e+00> : vector<32x64xf32>
    %241 = tpu.matmul %13, %240, %cst_110 {dimension_numbers = #tpu.dot_dimension_numbers<[0], [0], [1], [1], [0, 1, 1, 1], [], []>} : vector<8x32xf32>, vector<8x64xf32>, vector<32x64xf32> -> vector<32x64xf32>
    %cst_111 = arith.constant dense<0.000000e+00> : vector<64xf32>
    %242 = vector.multi_reduction <add>, %240, %cst_111 [0] : vector<8x64xf32> to vector<64xf32>
    %243 = vector.shape_cast %242 : vector<64xf32> to vector<1x64xf32>
    %cst_112 = arith.constant 0.00999999977 : f32
    %244 = vector.broadcast %cst_112 : f32 to vector<32x64xf32>
    %245 = arith.mulf %244, %241 : vector<32x64xf32>
    %246 = arith.subf %124, %245 : vector<32x64xf32>
    %cst_113 = arith.constant 0.00999999977 : f32
    %247 = vector.broadcast %cst_113 : f32 to vector<1x64xf32>
    %248 = arith.mulf %247, %243 : vector<1x64xf32>
    %249 = arith.subf %127, %248 : vector<1x64xf32>
    %cst_114 = arith.constant 0.00999999977 : f32
    %250 = vector.broadcast %cst_114 : f32 to vector<64x32xf32>
    %251 = arith.mulf %250, %233 : vector<64x32xf32>
    %252 = arith.subf %130, %251 : vector<64x32xf32>
    %cst_115 = arith.constant 0.00999999977 : f32
    %253 = vector.broadcast %cst_115 : f32 to vector<1x32xf32>
    %254 = arith.mulf %253, %235 : vector<1x32xf32>
    %255 = arith.subf %133, %254 : vector<1x32xf32>
    %cst_116 = arith.constant 0.00999999977 : f32
    %256 = vector.broadcast %cst_116 : f32 to vector<1x32xf32>
    %257 = arith.mulf %256, %223 : vector<1x32xf32>
    %258 = arith.subf %136, %257 : vector<1x32xf32>
    %cst_117 = arith.constant 0.00999999977 : f32
    %259 = vector.broadcast %cst_117 : f32 to vector<1x1xf32>
    %260 = arith.mulf %259, %225 : vector<1x1xf32>
    %261 = arith.subf %139, %260 : vector<1x1xf32>
    %c2_i32 = arith.constant 2 : i32
    %cst_118 = arith.constant dense<0.000000e+00> : vector<8x64xf32>
    %262 = tpu.matmul %7, %185, %cst_118 {dimension_numbers = #tpu.dot_dimension_numbers<[1], [0], [0], [1], [0, 0, 1, 1], [], []>} : vector<8x32xf32>, vector<32x64xf32>, vector<8x64xf32> -> vector<8x64xf32>
    %263 = vector.broadcast %188 : vector<1x64xf32> to vector<8x64xf32>
    %264 = arith.addf %262, %263 : vector<8x64xf32>
    %cst_119 = arith.constant 0.000000e+00 : f32
    %265 = vector.broadcast %cst_119 : f32 to vector<8x64xf32>
    %266 = arith.maximumf %264, %265 : vector<8x64xf32>
    %cst_120 = arith.constant dense<0.000000e+00> : vector<8x32xf32>
    %267 = tpu.matmul %266, %191, %cst_120 {dimension_numbers = #tpu.dot_dimension_numbers<[1], [0], [0], [1], [0, 0, 1, 1], [], []>} : vector<8x64xf32>, vector<64x32xf32>, vector<8x32xf32> -> vector<8x32xf32>
    %268 = vector.broadcast %194 : vector<1x32xf32> to vector<8x32xf32>
    %269 = arith.addf %267, %268 : vector<8x32xf32>
    %cst_121 = arith.constant 0.000000e+00 : f32
    %270 = vector.broadcast %cst_121 : f32 to vector<8x32xf32>
    %271 = arith.maximumf %269, %270 : vector<8x32xf32>
    %272 = vector.broadcast %197 : vector<1x32xf32> to vector<8x32xf32>
    %273 = arith.mulf %271, %272 : vector<8x32xf32>
    %cst_122 = arith.constant dense<0.000000e+00> : vector<8xf32>
    %274 = vector.multi_reduction <add>, %273, %cst_122 [1] : vector<8x32xf32> to vector<8xf32>
    %275 = vector.shape_cast %274 : vector<8xf32> to vector<8x1xf32>
    %276 = vector.broadcast %200 : vector<1x1xf32> to vector<8x1xf32>
    %277 = arith.addf %275, %276 : vector<8x1xf32>
    %278 = arith.subf %277, %11 : vector<8x1xf32>
    %cst_123 = arith.constant 2.500000e-01 : f32
    %279 = vector.broadcast %cst_123 : f32 to vector<8x1xf32>
    %280 = arith.mulf %279, %278 : vector<8x1xf32>
    %281 = vector.broadcast %280 : vector<8x1xf32> to vector<8x32xf32>
    %282 = arith.mulf %281, %271 : vector<8x32xf32>
    %cst_124 = arith.constant dense<0.000000e+00> : vector<32xf32>
    %283 = vector.multi_reduction <add>, %282, %cst_124 [0] : vector<8x32xf32> to vector<32xf32>
    %284 = vector.shape_cast %283 : vector<32xf32> to vector<1x32xf32>
    %cst_125 = arith.constant dense<0.000000e+00> : vector<1xf32>
    %285 = vector.multi_reduction <add>, %280, %cst_125 [0] : vector<8x1xf32> to vector<1xf32>
    %286 = vector.shape_cast %285 : vector<1xf32> to vector<1x1xf32>
    %287 = vector.broadcast %280 : vector<8x1xf32> to vector<8x32xf32>
    %288 = vector.broadcast %197 : vector<1x32xf32> to vector<8x32xf32>
    %289 = arith.mulf %287, %288 : vector<8x32xf32>
    %cst_126 = arith.constant 0.000000e+00 : f32
    %290 = vector.broadcast %cst_126 : f32 to vector<8x32xf32>
    %291 = arith.cmpf ogt, %269, %290 : vector<8x32xf32>
    %cst_127 = arith.constant 0.000000e+00 : f32
    %292 = vector.broadcast %cst_127 : f32 to vector<8x32xf32>
    %293 = arith.select %291, %289, %292 : vector<8x32xi1>, vector<8x32xf32>
    %cst_128 = arith.constant dense<0.000000e+00> : vector<64x32xf32>
    %294 = tpu.matmul %266, %293, %cst_128 {dimension_numbers = #tpu.dot_dimension_numbers<[0], [0], [1], [1], [0, 1, 1, 1], [], []>} : vector<8x64xf32>, vector<8x32xf32>, vector<64x32xf32> -> vector<64x32xf32>
    %cst_129 = arith.constant dense<0.000000e+00> : vector<32xf32>
    %295 = vector.multi_reduction <add>, %293, %cst_129 [0] : vector<8x32xf32> to vector<32xf32>
    %296 = vector.shape_cast %295 : vector<32xf32> to vector<1x32xf32>
    %cst_130 = arith.constant dense<0.000000e+00> : vector<8x64xf32>
    %297 = tpu.matmul %293, %191, %cst_130 {dimension_numbers = #tpu.dot_dimension_numbers<[1], [1], [0], [0], [0, 0, 1, 0], [], []>} : vector<8x32xf32>, vector<64x32xf32>, vector<8x64xf32> -> vector<8x64xf32>
    %cst_131 = arith.constant 0.000000e+00 : f32
    %298 = vector.broadcast %cst_131 : f32 to vector<8x64xf32>
    %299 = arith.cmpf ogt, %264, %298 : vector<8x64xf32>
    %cst_132 = arith.constant 0.000000e+00 : f32
    %300 = vector.broadcast %cst_132 : f32 to vector<8x64xf32>
    %301 = arith.select %299, %297, %300 : vector<8x64xi1>, vector<8x64xf32>
    %cst_133 = arith.constant dense<0.000000e+00> : vector<32x64xf32>
    %302 = tpu.matmul %7, %301, %cst_133 {dimension_numbers = #tpu.dot_dimension_numbers<[0], [0], [1], [1], [0, 1, 1, 1], [], []>} : vector<8x32xf32>, vector<8x64xf32>, vector<32x64xf32> -> vector<32x64xf32>
    %cst_134 = arith.constant dense<0.000000e+00> : vector<64xf32>
    %303 = vector.multi_reduction <add>, %301, %cst_134 [0] : vector<8x64xf32> to vector<64xf32>
    %304 = vector.shape_cast %303 : vector<64xf32> to vector<1x64xf32>
    %cst_135 = arith.constant 0.00999999977 : f32
    %305 = vector.broadcast %cst_135 : f32 to vector<32x64xf32>
    %306 = arith.mulf %305, %302 : vector<32x64xf32>
    %307 = arith.subf %185, %306 : vector<32x64xf32>
    %cst_136 = arith.constant 0.00999999977 : f32
    %308 = vector.broadcast %cst_136 : f32 to vector<1x64xf32>
    %309 = arith.mulf %308, %304 : vector<1x64xf32>
    %310 = arith.subf %188, %309 : vector<1x64xf32>
    %cst_137 = arith.constant 0.00999999977 : f32
    %311 = vector.broadcast %cst_137 : f32 to vector<64x32xf32>
    %312 = arith.mulf %311, %294 : vector<64x32xf32>
    %313 = arith.subf %191, %312 : vector<64x32xf32>
    %cst_138 = arith.constant 0.00999999977 : f32
    %314 = vector.broadcast %cst_138 : f32 to vector<1x32xf32>
    %315 = arith.mulf %314, %296 : vector<1x32xf32>
    %316 = arith.subf %194, %315 : vector<1x32xf32>
    %cst_139 = arith.constant 0.00999999977 : f32
    %317 = vector.broadcast %cst_139 : f32 to vector<1x32xf32>
    %318 = arith.mulf %317, %284 : vector<1x32xf32>
    %319 = arith.subf %197, %318 : vector<1x32xf32>
    %cst_140 = arith.constant 0.00999999977 : f32
    %320 = vector.broadcast %cst_140 : f32 to vector<1x1xf32>
    %321 = arith.mulf %320, %286 : vector<1x1xf32>
    %322 = arith.subf %200, %321 : vector<1x1xf32>
    %cst_141 = arith.constant dense<0.000000e+00> : vector<8x64xf32>
    %323 = tpu.matmul %13, %246, %cst_141 {dimension_numbers = #tpu.dot_dimension_numbers<[1], [0], [0], [1], [0, 0, 1, 1], [], []>} : vector<8x32xf32>, vector<32x64xf32>, vector<8x64xf32> -> vector<8x64xf32>
    %324 = vector.broadcast %249 : vector<1x64xf32> to vector<8x64xf32>
    %325 = arith.addf %323, %324 : vector<8x64xf32>
    %cst_142 = arith.constant 0.000000e+00 : f32
    %326 = vector.broadcast %cst_142 : f32 to vector<8x64xf32>
    %327 = arith.maximumf %325, %326 : vector<8x64xf32>
    %cst_143 = arith.constant dense<0.000000e+00> : vector<8x32xf32>
    %328 = tpu.matmul %327, %252, %cst_143 {dimension_numbers = #tpu.dot_dimension_numbers<[1], [0], [0], [1], [0, 0, 1, 1], [], []>} : vector<8x64xf32>, vector<64x32xf32>, vector<8x32xf32> -> vector<8x32xf32>
    %329 = vector.broadcast %255 : vector<1x32xf32> to vector<8x32xf32>
    %330 = arith.addf %328, %329 : vector<8x32xf32>
    %cst_144 = arith.constant 0.000000e+00 : f32
    %331 = vector.broadcast %cst_144 : f32 to vector<8x32xf32>
    %332 = arith.maximumf %330, %331 : vector<8x32xf32>
    %333 = vector.broadcast %258 : vector<1x32xf32> to vector<8x32xf32>
    %334 = arith.mulf %332, %333 : vector<8x32xf32>
    %cst_145 = arith.constant dense<0.000000e+00> : vector<8xf32>
    %335 = vector.multi_reduction <add>, %334, %cst_145 [1] : vector<8x32xf32> to vector<8xf32>
    %336 = vector.shape_cast %335 : vector<8xf32> to vector<8x1xf32>
    %337 = vector.broadcast %261 : vector<1x1xf32> to vector<8x1xf32>
    %338 = arith.addf %336, %337 : vector<8x1xf32>
    %339 = arith.subf %338, %17 : vector<8x1xf32>
    %cst_146 = arith.constant 2.500000e-01 : f32
    %340 = vector.broadcast %cst_146 : f32 to vector<8x1xf32>
    %341 = arith.mulf %340, %339 : vector<8x1xf32>
    %342 = vector.broadcast %341 : vector<8x1xf32> to vector<8x32xf32>
    %343 = arith.mulf %342, %332 : vector<8x32xf32>
    %cst_147 = arith.constant dense<0.000000e+00> : vector<32xf32>
    %344 = vector.multi_reduction <add>, %343, %cst_147 [0] : vector<8x32xf32> to vector<32xf32>
    %345 = vector.shape_cast %344 : vector<32xf32> to vector<1x32xf32>
    %cst_148 = arith.constant dense<0.000000e+00> : vector<1xf32>
    %346 = vector.multi_reduction <add>, %341, %cst_148 [0] : vector<8x1xf32> to vector<1xf32>
    %347 = vector.shape_cast %346 : vector<1xf32> to vector<1x1xf32>
    %348 = vector.broadcast %341 : vector<8x1xf32> to vector<8x32xf32>
    %349 = vector.broadcast %258 : vector<1x32xf32> to vector<8x32xf32>
    %350 = arith.mulf %348, %349 : vector<8x32xf32>
    %cst_149 = arith.constant 0.000000e+00 : f32
    %351 = vector.broadcast %cst_149 : f32 to vector<8x32xf32>
    %352 = arith.cmpf ogt, %330, %351 : vector<8x32xf32>
    %cst_150 = arith.constant 0.000000e+00 : f32
    %353 = vector.broadcast %cst_150 : f32 to vector<8x32xf32>
    %354 = arith.select %352, %350, %353 : vector<8x32xi1>, vector<8x32xf32>
    %cst_151 = arith.constant dense<0.000000e+00> : vector<64x32xf32>
    %355 = tpu.matmul %327, %354, %cst_151 {dimension_numbers = #tpu.dot_dimension_numbers<[0], [0], [1], [1], [0, 1, 1, 1], [], []>} : vector<8x64xf32>, vector<8x32xf32>, vector<64x32xf32> -> vector<64x32xf32>
    %cst_152 = arith.constant dense<0.000000e+00> : vector<32xf32>
    %356 = vector.multi_reduction <add>, %354, %cst_152 [0] : vector<8x32xf32> to vector<32xf32>
    %357 = vector.shape_cast %356 : vector<32xf32> to vector<1x32xf32>
    %cst_153 = arith.constant dense<0.000000e+00> : vector<8x64xf32>
    %358 = tpu.matmul %354, %252, %cst_153 {dimension_numbers = #tpu.dot_dimension_numbers<[1], [1], [0], [0], [0, 0, 1, 0], [], []>} : vector<8x32xf32>, vector<64x32xf32>, vector<8x64xf32> -> vector<8x64xf32>
    %cst_154 = arith.constant 0.000000e+00 : f32
    %359 = vector.broadcast %cst_154 : f32 to vector<8x64xf32>
    %360 = arith.cmpf ogt, %325, %359 : vector<8x64xf32>
    %cst_155 = arith.constant 0.000000e+00 : f32
    %361 = vector.broadcast %cst_155 : f32 to vector<8x64xf32>
    %362 = arith.select %360, %358, %361 : vector<8x64xi1>, vector<8x64xf32>
    %cst_156 = arith.constant dense<0.000000e+00> : vector<32x64xf32>
    %363 = tpu.matmul %13, %362, %cst_156 {dimension_numbers = #tpu.dot_dimension_numbers<[0], [0], [1], [1], [0, 1, 1, 1], [], []>} : vector<8x32xf32>, vector<8x64xf32>, vector<32x64xf32> -> vector<32x64xf32>
    %cst_157 = arith.constant dense<0.000000e+00> : vector<64xf32>
    %364 = vector.multi_reduction <add>, %362, %cst_157 [0] : vector<8x64xf32> to vector<64xf32>
    %365 = vector.shape_cast %364 : vector<64xf32> to vector<1x64xf32>
    %cst_158 = arith.constant 0.00999999977 : f32
    %366 = vector.broadcast %cst_158 : f32 to vector<32x64xf32>
    %367 = arith.mulf %366, %363 : vector<32x64xf32>
    %368 = arith.subf %246, %367 : vector<32x64xf32>
    %cst_159 = arith.constant 0.00999999977 : f32
    %369 = vector.broadcast %cst_159 : f32 to vector<1x64xf32>
    %370 = arith.mulf %369, %365 : vector<1x64xf32>
    %371 = arith.subf %249, %370 : vector<1x64xf32>
    %cst_160 = arith.constant 0.00999999977 : f32
    %372 = vector.broadcast %cst_160 : f32 to vector<64x32xf32>
    %373 = arith.mulf %372, %355 : vector<64x32xf32>
    %374 = arith.subf %252, %373 : vector<64x32xf32>
    %cst_161 = arith.constant 0.00999999977 : f32
    %375 = vector.broadcast %cst_161 : f32 to vector<1x32xf32>
    %376 = arith.mulf %375, %357 : vector<1x32xf32>
    %377 = arith.subf %255, %376 : vector<1x32xf32>
    %cst_162 = arith.constant 0.00999999977 : f32
    %378 = vector.broadcast %cst_162 : f32 to vector<1x32xf32>
    %379 = arith.mulf %378, %345 : vector<1x32xf32>
    %380 = arith.subf %258, %379 : vector<1x32xf32>
    %cst_163 = arith.constant 0.00999999977 : f32
    %381 = vector.broadcast %cst_163 : f32 to vector<1x1xf32>
    %382 = arith.mulf %381, %347 : vector<1x1xf32>
    %383 = arith.subf %261, %382 : vector<1x1xf32>
    %cst_164 = arith.constant dense<0.000000e+00> : vector<8x64xf32>
    %384 = tpu.matmul %9, %307, %cst_164 {dimension_numbers = #tpu.dot_dimension_numbers<[1], [0], [0], [1], [0, 0, 1, 1], [], []>} : vector<8x32xf32>, vector<32x64xf32>, vector<8x64xf32> -> vector<8x64xf32>
    %385 = vector.broadcast %310 : vector<1x64xf32> to vector<8x64xf32>
    %386 = arith.addf %384, %385 : vector<8x64xf32>
    %cst_165 = arith.constant 0.000000e+00 : f32
    %387 = vector.broadcast %cst_165 : f32 to vector<8x64xf32>
    %388 = arith.maximumf %386, %387 : vector<8x64xf32>
    %cst_166 = arith.constant dense<0.000000e+00> : vector<8x32xf32>
    %389 = tpu.matmul %388, %313, %cst_166 {dimension_numbers = #tpu.dot_dimension_numbers<[1], [0], [0], [1], [0, 0, 1, 1], [], []>} : vector<8x64xf32>, vector<64x32xf32>, vector<8x32xf32> -> vector<8x32xf32>
    %390 = vector.broadcast %316 : vector<1x32xf32> to vector<8x32xf32>
    %391 = arith.addf %389, %390 : vector<8x32xf32>
    %cst_167 = arith.constant 0.000000e+00 : f32
    %392 = vector.broadcast %cst_167 : f32 to vector<8x32xf32>
    %393 = arith.maximumf %391, %392 : vector<8x32xf32>
    %cst_168 = arith.constant dense<0.000000e+00> : vector<1x8xf32>
    %394 = tpu.matmul %319, %393, %cst_168 {dimension_numbers = #tpu.dot_dimension_numbers<[1], [1], [0], [0], [0, 0, 1, 0], [], []>} : vector<1x32xf32>, vector<8x32xf32>, vector<1x8xf32> -> vector<1x8xf32>
    %395 = vector.broadcast %322 : vector<1x1xf32> to vector<1x8xf32>
    %396 = arith.addf %394, %395 : vector<1x8xf32>
    %c0_169 = arith.constant 0 : index
    %c0_170 = arith.constant 0 : index
    %c0_171 = arith.constant 0 : index
    %397 = vector.load %arg9[%c0_169, %c0_170, %c0_171] : memref<1x1x16xf32, #tpu.memory_space<vmem>>, vector<1x1x8xf32>
    %398 = vector.shape_cast %397 : vector<1x1x8xf32> to vector<1x8xf32>
    %399 = vector.shape_cast %396 : vector<1x8xf32> to vector<1x1x8xf32>
    tpu.vector_store %arg9[%c0_169, %c0_170, %c0_171], %399 {strides = array<i32>} : memref<1x1x16xf32, #tpu.memory_space<vmem>>, vector<1x1x8xf32>,
    %cst_172 = arith.constant dense<0.000000e+00> : vector<8x64xf32>
    %400 = tpu.matmul %15, %368, %cst_172 {dimension_numbers = #tpu.dot_dimension_numbers<[1], [0], [0], [1], [0, 0, 1, 1], [], []>} : vector<8x32xf32>, vector<32x64xf32>, vector<8x64xf32> -> vector<8x64xf32>
    %401 = vector.broadcast %371 : vector<1x64xf32> to vector<8x64xf32>
    %402 = arith.addf %400, %401 : vector<8x64xf32>
    %cst_173 = arith.constant 0.000000e+00 : f32
    %403 = vector.broadcast %cst_173 : f32 to vector<8x64xf32>
    %404 = arith.maximumf %402, %403 : vector<8x64xf32>
    %cst_174 = arith.constant dense<0.000000e+00> : vector<8x32xf32>
    %405 = tpu.matmul %404, %374, %cst_174 {dimension_numbers = #tpu.dot_dimension_numbers<[1], [0], [0], [1], [0, 0, 1, 1], [], []>} : vector<8x64xf32>, vector<64x32xf32>, vector<8x32xf32> -> vector<8x32xf32>
    %406 = vector.broadcast %377 : vector<1x32xf32> to vector<8x32xf32>
    %407 = arith.addf %405, %406 : vector<8x32xf32>
    %cst_175 = arith.constant 0.000000e+00 : f32
    %408 = vector.broadcast %cst_175 : f32 to vector<8x32xf32>
    %409 = arith.maximumf %407, %408 : vector<8x32xf32>
    %cst_176 = arith.constant dense<0.000000e+00> : vector<1x8xf32>
    %410 = tpu.matmul %380, %409, %cst_176 {dimension_numbers = #tpu.dot_dimension_numbers<[1], [1], [0], [0], [0, 0, 1, 0], [], []>} : vector<1x32xf32>, vector<8x32xf32>, vector<1x8xf32> -> vector<1x8xf32>
    %411 = vector.broadcast %383 : vector<1x1xf32> to vector<1x8xf32>
    %412 = arith.addf %410, %411 : vector<1x8xf32>
    %c0_177 = arith.constant 0 : index
    %c0_178 = arith.constant 0 : index
    %c8_179 = arith.constant 8 : index
    %413 = vector.load %arg9[%c0_177, %c0_178, %c8_179] : memref<1x1x16xf32, #tpu.memory_space<vmem>>, vector<1x1x8xf32>
    %414 = vector.shape_cast %413 : vector<1x1x8xf32> to vector<1x8xf32>
    %415 = vector.shape_cast %412 : vector<1x8xf32> to vector<1x1x8xf32>
    tpu.vector_store %arg9[%c0_177, %c0_178, %c8_179], %415 {strides = array<i32>} : memref<1x1x16xf32, #tpu.memory_space<vmem>>, vector<1x1x8xf32>,
    return
  }
  func.func @transform_0(%arg0: i32) -> (i32, i32, i32) {
    %c0_i32 = arith.constant 0 : i32
    %c0_i32_0 = arith.constant 0 : i32
    %c0_i32_1 = arith.constant 0 : i32
    return %arg0, %c0_i32, %c0_i32_0 : i32, i32, i32
  }
  func.func @transform_1(%arg0: i32) -> (i32, i32, i32) {
    %c0_i32 = arith.constant 0 : i32
    %c0_i32_0 = arith.constant 0 : i32
    %c0_i32_1 = arith.constant 0 : i32
    return %arg0, %c0_i32, %c0_i32_0 : i32, i32, i32
  }
  func.func @transform_2(%arg0: i32) -> (i32, i32) {
    %c0_i32 = arith.constant 0 : i32
    %c0_i32_0 = arith.constant 0 : i32
    %c0_i32_1 = arith.constant 0 : i32
    return %c0_i32, %c0_i32_0 : i32, i32
  }
  func.func @transform_3(%arg0: i32) -> (i32, i32) {
    %c0_i32 = arith.constant 0 : i32
    %c0_i32_0 = arith.constant 0 : i32
    %c0_i32_1 = arith.constant 0 : i32
    return %c0_i32, %c0_i32_0 : i32, i32
  }
  func.func @transform_4(%arg0: i32) -> (i32, i32) {
    %c0_i32 = arith.constant 0 : i32
    %c0_i32_0 = arith.constant 0 : i32
    %c0_i32_1 = arith.constant 0 : i32
    return %c0_i32, %c0_i32_0 : i32, i32
  }
  func.func @transform_5(%arg0: i32) -> (i32, i32) {
    %c0_i32 = arith.constant 0 : i32
    %c0_i32_0 = arith.constant 0 : i32
    %c0_i32_1 = arith.constant 0 : i32
    return %c0_i32, %c0_i32_0 : i32, i32
  }
  func.func @transform_6(%arg0: i32) -> (i32, i32) {
    %c0_i32 = arith.constant 0 : i32
    %c0_i32_0 = arith.constant 0 : i32
    %c0_i32_1 = arith.constant 0 : i32
    return %c0_i32, %c0_i32_0 : i32, i32
  }
  func.func @transform_7(%arg0: i32) -> (i32, i32) {
    %c0_i32 = arith.constant 0 : i32
    %c0_i32_0 = arith.constant 0 : i32
    %c0_i32_1 = arith.constant 0 : i32
    return %c0_i32, %c0_i32_0 : i32, i32
  }
  func.func @transform_8(%arg0: i32) -> (i32, i32, i32) {
    %c0_i32 = arith.constant 0 : i32
    %c0_i32_0 = arith.constant 0 : i32
    %c0_i32_1 = arith.constant 0 : i32
    return %arg0, %c0_i32, %c0_i32_0 : i32, i32, i32
  }
}

</mosaic_0001>

<llo_original>
// kernel: tpu_custom_call.1
$region0: #{tpu_custom_call.1}
  #allocation0 [shape = 'u32[]', space=smem, size = 0x4, offset = 0x4, fixed_abs, tag = 'smem constant byte address 0x4 - core index']
  #allocation1 [shape = 'u32[144,128]{1,0:T(1,128)}', space=vmem, size = 0x12000, scoped, tag = 'internal scratch']
  #allocation2 [shape = 'f32[1,1]{1,0:T(1,128)S(1)}', space=vmem, size = 0x200, scoped, tag = 'scoped memory for tpu_custom_call.1']
  %s0 = inlined_call_operand.vmem [shape: f32[4,16,32], index: 0, kind: input, shape index: {}]
  %s1 = inlined_call_operand.vmem [shape: f32[4,8,1], index: 1, kind: input, shape index: {}]
  %s2 = inlined_call_operand.vmem [shape: f32[32,64], index: 2, kind: input, shape index: {}]
  %s3 = inlined_call_operand.vmem [shape: f32[1,64], index: 3, kind: input, shape index: {}]
  %s4 = inlined_call_operand.vmem [shape: f32[64,32], index: 4, kind: input, shape index: {}]
  %s5 = inlined_call_operand.vmem [shape: f32[1,32], index: 5, kind: input, shape index: {}]
  %s6 = inlined_call_operand.vmem [shape: f32[1,32], index: 6, kind: input, shape index: {}]
  %s7 = inlined_call_operand.<no memory space> [shape: f32[1,1], index: 7, kind: input, shape index: {}]
  %s8 = inlined_call_operand.hbm [shape: f32[2,1,16], index: 8, kind: output, shape index: {}]
  %s9 = sld [smem:[#allocation0]]
  $region65: #{tpu_custom_call.1} parent=0
    _
  %s11 = ssub.s32 1, %s9
  %s12 = scalar_select 0, %s11, %s9
  %v13 = vstv %s7
  %14 = vst [vmem:[#allocation2] sm:$0x1] %v13
  $region1: #{tpu_custom_call.1} parent=0
    #allocation3 [shape = 'u8[1024]{0}', space=vmem, size = 0x400, scoped, tag = 'output window, operand 0']
    #allocation4 [shape = 's32[2]{0}', space=sflag, size = 0x8, scoped, tag = 'scoped memory for tpu_custom_call.1']
    %15 = vsyncpa [#allocation4], 0
    %s16 = scalar_lea.sflag [#allocation4], 1
    %17 = vsyncpa %s16, 0
    loop: start=0, step=1, limit=4
    $region2: #{tpu_custom_call.1} parent=1 // loop_pre_header
      _
    $region3: #{tpu_custom_call.1} parent=1 // loop_header
      %s19 = sphi 0, %s23
      %p20 = scmp.ge.s32.totalorder %s19, 4
      %s29 = sphi 0, %s31
      %s32 = sphi 0, %s29
      %s33 = sphi 0, %s32
      %s49 = sphi 0, %s33
      %s55 = sphi 0, %s57
      %s58 = sphi 0, %s55
      %s59 = sphi 0, %s58
      %s75 = sphi 0, %s59
      %s79 = sphi 0, %s79
      %s81 = sphi 0, %s79
      %s82 = sphi 0, %s81
      %s96 = sphi 0, %s82
      %s100 = sphi 0, %s100
      %s102 = sphi 0, %s100
      %s103 = sphi 0, %s102
      %s117 = sphi 0, %s103
      %s121 = sphi 0, %s121
      %s123 = sphi 0, %s121
      %s124 = sphi 0, %s123
      %s138 = sphi 0, %s124
      %s142 = sphi 0, %s142
      %s144 = sphi 0, %s142
      %s145 = sphi 0, %s144
      %s159 = sphi 0, %s145
      %s163 = sphi 0, %s163
      %s165 = sphi 0, %s163
      %s166 = sphi 0, %s165
      %s180 = sphi 0, %s166
      %s184 = sphi 0, %s184
      %s186 = sphi 0, %s184
      %s187 = sphi 0, %s186
      %s201 = sphi 0, %s187
      %s207 = sphi 0, %s209
      %s210 = sphi 0, %s207
      %s211 = sphi 0, %s210
      %s227 = sphi 0, %s211
    $region4: #{tpu_custom_call.1} parent=1 // loop_header_branch
      %22 = sbr.rel (%p20) target = $region8
    $region5: #{tpu_custom_call.1} parent=1 // loop_body
      %s24 = ssub.s32 %s19, 1
      %s25 = ssub.s32 %s19, 2
      %s26 = sadd.s32 %s19, 1
      %s27 = ssub.s32 %s19, %s26
      %p28 = scmp.eq.s32.totalorder %s27, 0
      %s30 = sadd.s32 %s29, 1
      %s31 = scalar_select %p28, %s29, %s30
      %p34 = pneg %p28
      %p35 = scmp.eq.s32.totalorder %s19, 1
      %p36 = por %p34, %p35
      %p37 = scmp.ne.s32.totalorder %s29, %s32
      %p38 = scmp.eq.s32.totalorder %s19, 0
      %p39 = por %p37, %p38
      %p40 = scmp.ne.s32.totalorder %s29, %s32
      %p41 = scmp.eq.s32.totalorder %s24, 1
      %p42 = por %p40, %p41
      %p43 = scmp.ne.s32.totalorder %s32, %s33
      %p44 = scmp.eq.s32.totalorder %s24, 0
      %p45 = por %p43, %p44
      %p46 = scmp.ne.s32.totalorder %s32, %s33
      %p47 = scmp.eq.s32.totalorder %s25, 1
      %p48 = por %p46, %p47
      %p50 = scmp.ne.s32.totalorder %s33, %s49
      %p51 = scmp.eq.s32.totalorder %s25, 0
      %p52 = por %p50, %p51
      %s53 = ssub.s32 %s19, %s26
      %p54 = scmp.eq.s32.totalorder %s53, 0
      %s56 = sadd.s32 %s55, 1
      %s57 = scalar_select %p54, %s55, %s56
      %p60 = pneg %p54
      %p61 = scmp.eq.s32.totalorder %s19, 1
      %p62 = por %p60, %p61
      %p63 = scmp.ne.s32.totalorder %s55, %s58
      %p64 = scmp.eq.s32.totalorder %s19, 0
      %p65 = por %p63, %p64
      %p66 = scmp.ne.s32.totalorder %s55, %s58
      %p67 = scmp.eq.s32.totalorder %s24, 1
      %p68 = por %p66, %p67
      %p69 = scmp.ne.s32.totalorder %s58, %s59
      %p70 = scmp.eq.s32.totalorder %s24, 0
      %p71 = por %p69, %p70
      %p72 = scmp.ne.s32.totalorder %s58, %s59
      %p73 = scmp.eq.s32.totalorder %s25, 1
      %p74 = por %p72, %p73
      %p76 = scmp.ne.s32.totalorder %s59, %s75
      %p77 = scmp.eq.s32.totalorder %s25, 0
      %p78 = por %p76, %p77
      %s80 = sadd.s32 %s79, 1
      %p83 = scmp.eq.s32.totalorder %s19, 1
      %p84 = scmp.ne.s32.totalorder %s79, %s81
      %p85 = scmp.eq.s32.totalorder %s19, 0
      %p86 = por %p84, %p85
      %p87 = scmp.ne.s32.totalorder %s79, %s81
      %p88 = scmp.eq.s32.totalorder %s24, 1
      %p89 = por %p87, %p88
      %p90 = scmp.ne.s32.totalorder %s81, %s82
      %p91 = scmp.eq.s32.totalorder %s24, 0
      %p92 = por %p90, %p91
      %p93 = scmp.ne.s32.totalorder %s81, %s82
      %p94 = scmp.eq.s32.totalorder %s25, 1
      %p95 = por %p93, %p94
      %p97 = scmp.ne.s32.totalorder %s82, %s96
      %p98 = scmp.eq.s32.totalorder %s25, 0
      %p99 = por %p97, %p98
      %s101 = sadd.s32 %s100, 1
      %p104 = scmp.eq.s32.totalorder %s19, 1
      %p105 = scmp.ne.s32.totalorder %s100, %s102
      %p106 = scmp.eq.s32.totalorder %s19, 0
      %p107 = por %p105, %p106
      %p108 = scmp.ne.s32.totalorder %s100, %s102
      %p109 = scmp.eq.s32.totalorder %s24, 1
      %p110 = por %p108, %p109
      %p111 = scmp.ne.s32.totalorder %s102, %s103
      %p112 = scmp.eq.s32.totalorder %s24, 0
      %p113 = por %p111, %p112
      %p114 = scmp.ne.s32.totalorder %s102, %s103
      %p115 = scmp.eq.s32.totalorder %s25, 1
      %p116 = por %p114, %p115
      %p118 = scmp.ne.s32.totalorder %s103, %s117
      %p119 = scmp.eq.s32.totalorder %s25, 0
      %p120 = por %p118, %p119
      %s122 = sadd.s32 %s121, 1
      %p125 = scmp.eq.s32.totalorder %s19, 1
      %p126 = scmp.ne.s32.totalorder %s121, %s123
      %p127 = scmp.eq.s32.totalorder %s19, 0
      %p128 = por %p126, %p127
      %p129 = scmp.ne.s32.totalorder %s121, %s123
      %p130 = scmp.eq.s32.totalorder %s24, 1
      %p131 = por %p129, %p130
      %p132 = scmp.ne.s32.totalorder %s123, %s124
      %p133 = scmp.eq.s32.totalorder %s24, 0
      %p134 = por %p132, %p133
      %p135 = scmp.ne.s32.totalorder %s123, %s124
      %p136 = scmp.eq.s32.totalorder %s25, 1
      %p137 = por %p135, %p136
      %p139 = scmp.ne.s32.totalorder %s124, %s138
      %p140 = scmp.eq.s32.totalorder %s25, 0
      %p141 = por %p139, %p140
      %s143 = sadd.s32 %s142, 1
      %p146 = scmp.eq.s32.totalorder %s19, 1
      %p147 = scmp.ne.s32.totalorder %s142, %s144
      %p148 = scmp.eq.s32.totalorder %s19, 0
      %p149 = por %p147, %p148
      %p150 = scmp.ne.s32.totalorder %s142, %s144
      %p151 = scmp.eq.s32.totalorder %s24, 1
      %p152 = por %p150, %p151
      %p153 = scmp.ne.s32.totalorder %s144, %s145
      %p154 = scmp.eq.s32.totalorder %s24, 0
      %p155 = por %p153, %p154
      %p156 = scmp.ne.s32.totalorder %s144, %s145
      %p157 = scmp.eq.s32.totalorder %s25, 1
      %p158 = por %p156, %p157
      %p160 = scmp.ne.s32.totalorder %s145, %s159
      %p161 = scmp.eq.s32.totalorder %s25, 0
      %p162 = por %p160, %p161
      %s164 = sadd.s32 %s163, 1
      %p167 = scmp.eq.s32.totalorder %s19, 1
      %p168 = scmp.ne.s32.totalorder %s163, %s165
      %p169 = scmp.eq.s32.totalorder %s19, 0
      %p170 = por %p168, %p169
      %p171 = scmp.ne.s32.totalorder %s163, %s165
      %p172 = scmp.eq.s32.totalorder %s24, 1
      %p173 = por %p171, %p172
      %p174 = scmp.ne.s32.totalorder %s165, %s166
      %p175 = scmp.eq.s32.totalorder %s24, 0
      %p176 = por %p174, %p175
      %p177 = scmp.ne.s32.totalorder %s165, %s166
      %p178 = scmp.eq.s32.totalorder %s25, 1
      %p179 = por %p177, %p178
      %p181 = scmp.ne.s32.totalorder %s166, %s180
      %p182 = scmp.eq.s32.totalorder %s25, 0
      %p183 = por %p181, %p182
      %s185 = sadd.s32 %s184, 1
      %p188 = scmp.eq.s32.totalorder %s19, 1
      %p189 = scmp.ne.s32.totalorder %s184, %s186
      %p190 = scmp.eq.s32.totalorder %s19, 0
      %p191 = por %p189, %p190
      %p192 = scmp.ne.s32.totalorder %s184, %s186
      %p193 = scmp.eq.s32.totalorder %s24, 1
      %p194 = por %p192, %p193
      %p195 = scmp.ne.s32.totalorder %s186, %s187
      %p196 = scmp.eq.s32.totalorder %s24, 0
      %p197 = por %p195, %p196
      %p198 = scmp.ne.s32.totalorder %s186, %s187
      %p199 = scmp.eq.s32.totalorder %s25, 1
      %p200 = por %p198, %p199
      %p202 = scmp.ne.s32.totalorder %s187, %s201
      %p203 = scmp.eq.s32.totalorder %s25, 0
      %p204 = por %p202, %p203
      %s205 = ssub.s32 %s19, %s26
      %p206 = scmp.eq.s32.totalorder %s205, 0
      %s208 = sadd.s32 %s207, 1
      %s209 = scalar_select %p206, %s207, %s208
      %p212 = pneg %p206
      %p213 = scmp.eq.s32.totalorder %s19, 1
      %p214 = por %p212, %p213
      %p215 = scmp.ne.s32.totalorder %s207, %s210
      %p216 = scmp.eq.s32.totalorder %s19, 0
      %p217 = por %p215, %p216
      %p218 = scmp.ne.s32.totalorder %s207, %s210
      %p219 = scmp.eq.s32.totalorder %s24, 1
      %p220 = por %p218, %p219
      %p221 = scmp.ne.s32.totalorder %s210, %s211
      %p222 = scmp.eq.s32.totalorder %s24, 0
      %p223 = por %p221, %p222
      %p224 = scmp.ne.s32.totalorder %s210, %s211
      %p225 = scmp.eq.s32.totalorder %s25, 1
      %p226 = por %p224, %p225
      %p228 = scmp.ne.s32.totalorder %s211, %s227
      %p229 = scmp.eq.s32.totalorder %s25, 0
      %p230 = por %p228, %p229
      %p231 = scmp.le.s32.totalorder 1, %s19
      %p232 = scmp.lt.s32.totalorder %s19, 3
      %p233 = pnand %p231, %p232
      %p234 = pneg %p233
      // Predicated region
      $region9: #{tpu_custom_call.1} parent=5 // pred_check
        _
      $region10: #{tpu_custom_call.1} parent=5 // pred_check_branch
        %236 = sbr.rel (%p233) target = $region12
      $region11: #{tpu_custom_call.1} parent=5 // pred_region
        %s237 = ssub.s32 %s19, 1
        // Predicated region
        $region13: #{tpu_custom_call.1} parent=11 // pred_check
          %p238 = pneg %p92
        $region14: #{tpu_custom_call.1} parent=11 // pred_check_branch
          %240 = sbr.rel (%p238) target = $region16
        $region15: #{tpu_custom_call.1} parent=11 // pred_region
          _
        $region16: #{tpu_custom_call.1} parent=11 // pred_fallthru
          _
        // Predicated region
        $region17: #{tpu_custom_call.1} parent=11 // pred_check
          %p241 = pneg %p113
        $region18: #{tpu_custom_call.1} parent=11 // pred_check_branch
          %243 = sbr.rel (%p241) target = $region20
        $region19: #{tpu_custom_call.1} parent=11 // pred_region
          _
        $region20: #{tpu_custom_call.1} parent=11 // pred_fallthru
          _
        // Predicated region
        $region21: #{tpu_custom_call.1} parent=11 // pred_check
          %p244 = pneg %p134
        $region22: #{tpu_custom_call.1} parent=11 // pred_check_branch
          %246 = sbr.rel (%p244) target = $region24
        $region23: #{tpu_custom_call.1} parent=11 // pred_region
          _
        $region24: #{tpu_custom_call.1} parent=11 // pred_fallthru
          _
        // Predicated region
        $region25: #{tpu_custom_call.1} parent=11 // pred_check
          %p247 = pneg %p155
        $region26: #{tpu_custom_call.1} parent=11 // pred_check_branch
          %249 = sbr.rel (%p247) target = $region28
        $region27: #{tpu_custom_call.1} parent=11 // pred_region
          _
        $region28: #{tpu_custom_call.1} parent=11 // pred_fallthru
          _
        // Predicated region
        $region29: #{tpu_custom_call.1} parent=11 // pred_check
          %p250 = pneg %p176
        $region30: #{tpu_custom_call.1} parent=11 // pred_check_branch
          %252 = sbr.rel (%p250) target = $region32
        $region31: #{tpu_custom_call.1} parent=11 // pred_region
          _
        $region32: #{tpu_custom_call.1} parent=11 // pred_fallthru
          _
        // Predicated region
        $region33: #{tpu_custom_call.1} parent=11 // pred_check
          %p253 = pneg %p197
        $region34: #{tpu_custom_call.1} parent=11 // pred_check_branch
          %255 = sbr.rel (%p253) target = $region36
        $region35: #{tpu_custom_call.1} parent=11 // pred_region
          _
        $region36: #{tpu_custom_call.1} parent=11 // pred_fallthru
          _
      $region12: #{tpu_custom_call.1} parent=5 // pred_fallthru
        _
      %p256 = scmp.lt.s32.totalorder %s19, 2
      // Predicated region
      $region37: #{tpu_custom_call.1} parent=5 // pred_check
        %p257 = pneg %p256
      $region38: #{tpu_custom_call.1} parent=5 // pred_check_branch
        %259 = sbr.rel (%p257) target = $region40
      $region39: #{tpu_custom_call.1} parent=5 // pred_region
        // Predicated region
        $region41: #{tpu_custom_call.1} parent=39 // pred_check
          %p260 = pneg %p39
        $region42: #{tpu_custom_call.1} parent=39 // pred_check_branch
          %262 = sbr.rel (%p260) target = $region44
        $region43: #{tpu_custom_call.1} parent=39 // pred_region
          %s263 = smul.u32 2, %s19
          %p264 = scmp.lt.s32.totalorder %s263, 3
          %s265 = scalar_select %p264, %s263, 3
          %s266 = smul.addr %s265, 2
          %s267 = smul.addr %s266, 8
          %s268 = scalar_lea.vmem %s0, %s267
          %s269 = smul.u32 2, %s19
        $region44: #{tpu_custom_call.1} parent=39 // pred_fallthru
          _
        // Predicated region
        $region45: #{tpu_custom_call.1} parent=39 // pred_check
          %p270 = pneg %p65
        $region46: #{tpu_custom_call.1} parent=39 // pred_check_branch
          %272 = sbr.rel (%p270) target = $region48
        $region47: #{tpu_custom_call.1} parent=39 // pred_region
          %s273 = smul.u32 2, %s19
          %p274 = scmp.lt.s32.totalorder %s273, 3
          %s275 = scalar_select %p274, %s273, 3
          %s276 = smul.addr %s275, 8
          %s277 = scalar_lea.vmem %s1, %s276
          %s278 = smul.u32 2, %s19
        $region48: #{tpu_custom_call.1} parent=39 // pred_fallthru
          _
      $region40: #{tpu_custom_call.1} parent=5 // pred_fallthru
        _
      %p279 = scmp.le.s32.totalorder 1, %s19
      %p280 = scmp.lt.s32.totalorder %s19, 3
      %p281 = pnand %p279, %p280
      %p282 = pneg %p281
      // Predicated region
      $region49: #{tpu_custom_call.1} parent=5 // pred_check
        _
      $region50: #{tpu_custom_call.1} parent=5 // pred_check_branch
        %284 = sbr.rel (%p281) target = $region52
      $region51: #{tpu_custom_call.1} parent=5 // pred_region
        %s285 = ssub.s32 %s19, 1
        %s286 = smul.u32 2, %s24
        %p287 = scmp.lt.s32.totalorder %s286, 3
        %s288 = scalar_select %p287, %s286, 3
        %s289 = smul.addr %s288, 2
        %s290 = smul.addr %s289, 8
        %s291 = scalar_lea.vmem %s0, %s290
        %p292 = pneg %p45
        %p293 = pneg %p42
        %s294 = smul.u32 2, %s24
        %p295 = scmp.lt.s32.totalorder %s294, 3
        %s296 = scalar_select %p295, %s294, 3
        %s297 = smul.addr %s296, 8
        %s298 = scalar_lea.vmem %s1, %s297
        %p299 = pneg %p71
        %p300 = pneg %p68
        %p301 = pneg %p92
        %p302 = pneg %p89
        %p303 = pneg %p113
        %p304 = pneg %p110
        %p305 = pneg %p134
        %p306 = pneg %p131
        %p307 = pneg %p155
        %p308 = pneg %p152
        %p309 = pneg %p176
        %p310 = pneg %p173
        %p311 = pneg %p197
        %p312 = pneg %p194
        %p313 = pneg %p223
        %p314 = pneg %p220
        %s315 = sand.u32 %s210, 1
        %s316 = scalar_lea.sflag [#allocation4], %s315
        %s317 = sand.u32 %s210, 1
        %s318 = scalar_lea.vmem [#allocation3], %s317
        %s319 = smul.u32 2, %s24
        %p320 = scmp.lt.s32.totalorder %s319, 3
        %s321 = scalar_select %p320, %s319, 3
        %s322 = smul.addr %s321, 2
        %s323 = smul.addr %s322, 8
        %s324 = scalar_lea.vmem %s0, %s323
        %s325 = smul.u32 2, %s24
        %s326 = smul.u32 2, %s24
        %p327 = scmp.lt.s32.totalorder %s326, 3
        %s328 = scalar_select %p327, %s326, 3
        %s329 = smul.addr %s328, 8
        %s330 = scalar_lea.vmem %s1, %s329
        %s331 = smul.u32 2, %s24
        %v332 = vld [vmem:[%s2] sm:$0xff]
        %v333 = vld [vmem:[%s2 + $0x8] sm:$0xff]
        %v334 = vld [vmem:[%s2 + $0x10] sm:$0xff]
        %v335 = vld [vmem:[%s2 + $0x18] sm:$0xff]
        %v336 = vld [vmem:[%s3] sm:$0x1]
        %v337 = vld [vmem:[%s4] sm:$0xff]
        %v338 = vld [vmem:[%s4 + $0x8] sm:$0xff]
        %v339 = vld [vmem:[%s4 + $0x10] sm:$0xff]
        %v340 = vld [vmem:[%s4 + $0x18] sm:$0xff]
        %v341 = vld [vmem:[%s4 + $0x20] sm:$0xff]
        %v342 = vld [vmem:[%s4 + $0x28] sm:$0xff]
        %v343 = vld [vmem:[%s4 + $0x30] sm:$0xff]
        %v344 = vld [vmem:[%s4 + $0x38] sm:$0xff]
        %v345 = vld [vmem:[%s5] sm:$0x1]
        %v346 = vld [vmem:[%s6] sm:$0x1]
        %v347 = vld [vmem:[#allocation2] sm:$0x1]
        %v348 = vld [vmem:[%s324] sm:$0xff]
        %v349 = vld [vmem:[%s324 + $0x8] sm:$0xff]
        %v350 = vld [vmem:[%s330] sm:$0xff]
        %s351 = scalar_lea.vmem %s324, 16
        %v352 = vld [vmem:[%s351] sm:$0xff]
        %v353 = vld [vmem:[%s351 + $0x8] sm:$0xff]
        %s354 = scalar_lea.vmem %s330, 8
        %v355 = vld [vmem:[%s354] sm:$0xff]
        %v357 = vlaneseq
        %v358 = vshrl.u32 %v357, 7
        %v359 = vsub.s32 0, %v358
        %v360 = vrot.slane %v336, %v359
        %vm362 = vcmask 261120
        %v364 = vsel %vm362, %v348, 0
        %366 = vmatprep.subr.mxu0 0.0
        %367 = vmatpush1.msra.mxu0 %v332
        %368 = vmatprep.subr.mxu0 0.0
        %369 = vmatpush1.msra.mxu0 %v333
        %370 = vmatprep.subr.mxu0 0.0
        %371 = vmatpush1.msra.mxu0 %v334
        %372 = vmatprep.subr.mxu0 0.0
        %373 = vmatpush1.msra.mxu0 %v335
        %374 = vmatprep.subr.mxu0 0.0
        %375 = vmatpush1.msra.mxu0 0.0
        %376 = vmatprep.subr.mxu0 0.0
        %377 = vmatpush1.msra.mxu0 0.0
        %378 = vmatprep.subr.mxu0 0.0
        %379 = vmatpush1.msra.mxu0 0.0
        %380 = vmatprep.subr.mxu0 0.0
        %381 = vmatpush1.msra.mxu0 0.0
        %382 = vmatprep.subr.mxu0 0.0
        %383 = vmatpush1.msra.mxu0 0.0
        %384 = vmatprep.subr.mxu0 0.0
        %385 = vmatpush1.msra.mxu0 0.0
        %386 = vmatprep.subr.mxu0 0.0
        %387 = vmatpush1.msra.mxu0 0.0
        %388 = vmatprep.subr.mxu0 0.0
        %389 = vmatpush1.msra.mxu0 0.0
        %390 = vmatprep.subr.mxu0 0.0
        %391 = vmatpush1.msra.mxu0 0.0
        %392 = vmatprep.subr.mxu0 0.0
        %393 = vmatpush1.msra.mxu0 0.0
        %394 = vmatprep.subr.mxu0 0.0
        %395 = vmatpush1.msra.mxu0 0.0
        %396 = vmatprep.subr.mxu0 0.0
        %397 = vmatpush1.msra.mxu0 0.0
        %398 = vmatprep.subr.mxu0 0.0
        %399 = vmatpush1.msra.mxu0 0.0
        %400 = vmatprep.subr.mxu0 0.0
        %401 = vmatpush1.msra.mxu0 0.0
        %402 = vmatprep.subr.mxu0 0.0
        %403 = vmatpush1.msra.mxu0 0.0
        %404 = vmatprep.subr.mxu0 0.0
        %405 = vmatpush1.msra.mxu0 0.0
        %406 = vmatprep.subr.mxu0 0.0
        %407 = vmatpush1.msra.mxu0 0.0
        %408 = vmatprep.subr.mxu0 0.0
        %409 = vmatpush1.msra.mxu0 0.0
        %410 = vmatprep.subr.mxu0 0.0
        %411 = vmatpush1.msra.mxu0 0.0
        %412 = vmatprep.subr.mxu0 0.0
        %413 = vmatpush1.msra.mxu0 0.0
        %414 = vmatprep.subr.mxu0 0.0
        %415 = vmatpush1.msra.mxu0 0.0
        %416 = vmatprep.subr.mxu0 0.0
        %417 = vmatpush1.msra.mxu0 0.0
        %418 = vmatprep.subr.mxu0 0.0
        %419 = vmatpush1.msra.mxu0 0.0
        %420 = vmatprep.subr.mxu0 0.0
        %421 = vmatpush1.msra.mxu0 0.0
        %422 = vmatprep.subr.mxu0 0.0
        %423 = vmatpush1.msra.mxu0 0.0
        %424 = vmatprep.subr.mxu0 0.0
        %425 = vmatpush1.msra.mxu0 0.0
        %426 = vmatprep.subr.mxu0 0.0
        %427 = vmatpush1.msra.mxu0 0.0
        %428 = vmatprep.subr.mxu0 0.0
        %429 = vmatpush1.msra.mxu0 0.0
        %430 = vmatprep.mubr.f32.mxu0 0.0
        %431 = vmatmul.mubr.f32.gmra.mrb[0].mxu0 %v364
        %v432 = vpop.f32.mrb[0].mxu0
        %v433 = vadd.f32 %v360, %v432
        %v434 = vpop.f32.mrb[0].mxu0
        %435 = vdwg.mxu0
        %v436 = vmax.f32 %v433, 0.0
        %v438 = vlaneseq
        %v439 = vshrl.u32 %v438, 7
        %v440 = vsub.s32 0, %v439
        %v441 = vrot.slane %v345, %v440
        %vm443 = vcmask 523264
        %v445 = vsel %vm443, %v436, 0
        %447 = vmatprep.subr.mxu0 0.0
        %448 = vmatpush1.msra.mxu0 %v337
        %449 = vmatprep.subr.mxu0 0.0
        %450 = vmatpush1.msra.mxu0 %v338
        %451 = vmatprep.subr.mxu0 0.0
        %452 = vmatpush1.msra.mxu0 %v339
        %453 = vmatprep.subr.mxu0 0.0
        %454 = vmatpush1.msra.mxu0 %v340
        %455 = vmatprep.subr.mxu0 0.0
        %456 = vmatpush1.msra.mxu0 %v341
        %457 = vmatprep.subr.mxu0 0.0
        %458 = vmatpush1.msra.mxu0 %v342
        %459 = vmatprep.subr.mxu0 0.0
        %460 = vmatpush1.msra.mxu0 %v343
        %461 = vmatprep.subr.mxu0 0.0
        %462 = vmatpush1.msra.mxu0 %v344
        %463 = vmatprep.subr.mxu0 0.0
        %464 = vmatpush1.msra.mxu0 0.0
        %465 = vmatprep.subr.mxu0 0.0
        %466 = vmatpush1.msra.mxu0 0.0
        %467 = vmatprep.subr.mxu0 0.0
        %468 = vmatpush1.msra.mxu0 0.0
        %469 = vmatprep.subr.mxu0 0.0
        %470 = vmatpush1.msra.mxu0 0.0
        %471 = vmatprep.subr.mxu0 0.0
        %472 = vmatpush1.msra.mxu0 0.0
        %473 = vmatprep.subr.mxu0 0.0
        %474 = vmatpush1.msra.mxu0 0.0
        %475 = vmatprep.subr.mxu0 0.0
        %476 = vmatpush1.msra.mxu0 0.0
        %477 = vmatprep.subr.mxu0 0.0
        %478 = vmatpush1.msra.mxu0 0.0
        %479 = vmatprep.subr.mxu0 0.0
        %480 = vmatpush1.msra.mxu0 0.0
        %481 = vmatprep.subr.mxu0 0.0
        %482 = vmatpush1.msra.mxu0 0.0
        %483 = vmatprep.subr.mxu0 0.0
        %484 = vmatpush1.msra.mxu0 0.0
        %485 = vmatprep.subr.mxu0 0.0
        %486 = vmatpush1.msra.mxu0 0.0
        %487 = vmatprep.subr.mxu0 0.0
        %488 = vmatpush1.msra.mxu0 0.0
        %489 = vmatprep.subr.mxu0 0.0
        %490 = vmatpush1.msra.mxu0 0.0
        %491 = vmatprep.subr.mxu0 0.0
        %492 = vmatpush1.msra.mxu0 0.0
        %493 = vmatprep.subr.mxu0 0.0
        %494 = vmatpush1.msra.mxu0 0.0
        %495 = vmatprep.subr.mxu0 0.0
        %496 = vmatpush1.msra.mxu0 0.0
        %497 = vmatprep.subr.mxu0 0.0
        %498 = vmatpush1.msra.mxu0 0.0
        %499 = vmatprep.subr.mxu0 0.0
        %500 = vmatpush1.msra.mxu0 0.0
        %501 = vmatprep.subr.mxu0 0.0
        %502 = vmatpush1.msra.mxu0 0.0
        %503 = vmatprep.subr.mxu0 0.0
        %504 = vmatpush1.msra.mxu0 0.0
        %505 = vmatprep.subr.mxu0 0.0
        %506 = vmatpush1.msra.mxu0 0.0
        %507 = vmatprep.subr.mxu0 0.0
        %508 = vmatpush1.msra.mxu0 0.0
        %509 = vmatprep.subr.mxu0 0.0
        %510 = vmatpush1.msra.mxu0 0.0
        %511 = vmatprep.mubr.f32.mxu0 0.0
        %512 = vmatmul.mubr.f32.gmra.mrb[0].mxu0 %v445
        %v513 = vpop.f32.mrb[0].mxu0
        %v514 = vadd.f32 %v441, %v513
        %v515 = vpop.f32.mrb[0].mxu0
        %516 = vdwg.mxu0
        %v517 = vmax.f32 %v514, 0.0
        %v519 = vlaneseq
        %v520 = vshrl.u32 %v519, 7
        %v521 = vsub.s32 0, %v520
        %v522 = vrot.slane %v346, %v521
        %v524 = vmul.f32 %v517, %v522
        %v525 = vsel %vm362, %v524, 0.0
        %526 = vadd.xlane.f32.xlu0 %v525
        %v527 = vpop.xlane.xlu0 %526
        %v529 = vlaneseq
        %v530 = vshrl.u32 %v529, 7
        %v531 = vsub.s32 0, %v530
        %v532 = vrot.slane %v347, %v531
        %v534 = vadd.f32 %v527, %v532
        %v535 = vsub.f32 %v534, %v350
        %v536 = vmul.f32 %v535, 0.25
        %538 = vset.pattern.permute.xlu0 0
        %539 = vperm.xlu0 %538, %v536
        %v540 = vpop.permute.xlu0 %539
        %v542 = vmul.f32 %v540, %v517
        %v543 = vsel %vm362, %v542, 0.0
        %v544 = vrot.slane %v543, 4
        %v545 = vadd.f32 %v543, %v544
        %v546 = vrot.slane %v545, 2
        %v547 = vadd.f32 %v545, %v546
        %v548 = vrot.slane %v547, 1
        %v549 = vadd.f32 %v547, %v548
        %vm550 = vcmask 7168
        %v551 = vsel %vm550, %v536, 0.0
        %v552 = vrot.slane %v551, 4
        %v553 = vadd.f32 %v551, %v552
        %v554 = vrot.slane %v553, 2
        %v555 = vadd.f32 %v553, %v554
        %v556 = vrot.slane %v555, 1
        %v557 = vadd.f32 %v555, %v556
        %v558 = vmul.f32 %v540, %v522
        %vm559 = vcmp.gt.f32.partialorder %v514, 0.0
        %v560 = vsel %vm559, %v558, 0.0
        %561 = vxpose.xlu0.b32.start [1/16] %v436, 128
        %562 = vxpose.xlu0.b32.cont [2/16] 0.0, 128
        %563 = vxpose.xlu0.b32.cont [3/16] 0.0, 128
        %564 = vxpose.xlu0.b32.cont [4/16] 0.0, 128
        %565 = vxpose.xlu0.b32.cont [5/16] 0.0, 128
        %566 = vxpose.xlu0.b32.cont [6/16] 0.0, 128
        %567 = vxpose.xlu0.b32.cont [7/16] 0.0, 128
        %568 = vxpose.xlu0.b32.cont [8/16] 0.0, 128
        %569 = vxpose.xlu0.b32.cont [9/16] 0.0, 128
        %570 = vxpose.xlu0.b32.cont [10/16] 0.0, 128
        %571 = vxpose.xlu0.b32.cont [11/16] 0.0, 128
        %572 = vxpose.xlu0.b32.cont [12/16] 0.0, 128
        %573 = vxpose.xlu0.b32.cont [13/16] 0.0, 128
        %574 = vxpose.xlu0.b32.cont [14/16] 0.0, 128
        %575 = vxpose.xlu0.b32.cont [15/16] 0.0, 128
        %576 = vxpose.xlu0.b32.end [16/16] 0.0, 128
        %v577 = vpop.trf.xlu0
        %v578 = vpop.trf.xlu0
        %v579 = vpop.trf.xlu0
        %v580 = vpop.trf.xlu0
        %v581 = vpop.trf.xlu0
        %v582 = vpop.trf.xlu0
        %v583 = vpop.trf.xlu0
        %v584 = vpop.trf.xlu0
        %v585 = vpop.trf.xlu0
        %v586 = vpop.trf.xlu0
        %v587 = vpop.trf.xlu0
        %v588 = vpop.trf.xlu0
        %v589 = vpop.trf.xlu0
        %v590 = vpop.trf.xlu0
        %v591 = vpop.trf.xlu0
        %v592 = vpop.trf.xlu0
        %vm593 = vcmask 64512
        %v595 = vsel %vm593, %v577, 0
        %v598 = vsel %vm593, %v578, 0
        %v601 = vsel %vm593, %v579, 0
        %v604 = vsel %vm593, %v580, 0
        %v607 = vsel %vm593, %v581, 0
        %v610 = vsel %vm593, %v582, 0
        %v613 = vsel %vm593, %v583, 0
        %v616 = vsel %vm593, %v584, 0
        %618 = vmatprep.subr.mxu0 0.0
        %619 = vmatpush1.msra.mxu0 %v560
        %620 = vmatprep.subr.mxu0 0.0
        %621 = vmatpush1.msra.mxu0 0.0
        %622 = vmatprep.subr.mxu0 0.0
        %623 = vmatpush1.msra.mxu0 0.0
        %624 = vmatprep.subr.mxu0 0.0
        %625 = vmatpush1.msra.mxu0 0.0
        %626 = vmatprep.subr.mxu0 0.0
        %627 = vmatpush1.msra.mxu0 0.0
        %628 = vmatprep.subr.mxu0 0.0
        %629 = vmatpush1.msra.mxu0 0.0
        %630 = vmatprep.subr.mxu0 0.0
        %631 = vmatpush1.msra.mxu0 0.0
        %632 = vmatprep.subr.mxu0 0.0
        %633 = vmatpush1.msra.mxu0 0.0
        %634 = vmatprep.subr.mxu0 0.0
        %635 = vmatpush1.msra.mxu0 0.0
        %636 = vmatprep.subr.mxu0 0.0
        %637 = vmatpush1.msra.mxu0 0.0
        %638 = vmatprep.subr.mxu0 0.0
        %639 = vmatpush1.msra.mxu0 0.0
        %640 = vmatprep.subr.mxu0 0.0
        %641 = vmatpush1.msra.mxu0 0.0
        %642 = vmatprep.subr.mxu0 0.0
        %643 = vmatpush1.msra.mxu0 0.0
        %644 = vmatprep.subr.mxu0 0.0
        %645 = vmatpush1.msra.mxu0 0.0
        %646 = vmatprep.subr.mxu0 0.0
        %647 = vmatpush1.msra.mxu0 0.0
        %648 = vmatprep.subr.mxu0 0.0
        %649 = vmatpush1.msra.mxu0 0.0
        %650 = vmatprep.subr.mxu0 0.0
        %651 = vmatpush1.msra.mxu0 0.0
        %652 = vmatprep.subr.mxu0 0.0
        %653 = vmatpush1.msra.mxu0 0.0
        %654 = vmatprep.subr.mxu0 0.0
        %655 = vmatpush1.msra.mxu0 0.0
        %656 = vmatprep.subr.mxu0 0.0
        %657 = vmatpush1.msra.mxu0 0.0
        %658 = vmatprep.subr.mxu0 0.0
        %659 = vmatpush1.msra.mxu0 0.0
        %660 = vmatprep.subr.mxu0 0.0
        %661 = vmatpush1.msra.mxu0 0.0
        %662 = vmatprep.subr.mxu0 0.0
        %663 = vmatpush1.msra.mxu0 0.0
        %664 = vmatprep.subr.mxu0 0.0
        %665 = vmatpush1.msra.mxu0 0.0
        %666 = vmatprep.subr.mxu0 0.0
        %667 = vmatpush1.msra.mxu0 0.0
        %668 = vmatprep.subr.mxu0 0.0
        %669 = vmatpush1.msra.mxu0 0.0
        %670 = vmatprep.subr.mxu0 0.0
        %671 = vmatpush1.msra.mxu0 0.0
        %672 = vmatprep.subr.mxu0 0.0
        %673 = vmatpush1.msra.mxu0 0.0
        %674 = vmatprep.subr.mxu0 0.0
        %675 = vmatpush1.msra.mxu0 0.0
        %676 = vmatprep.subr.mxu0 0.0
        %677 = vmatpush1.msra.mxu0 0.0
        %678 = vmatprep.subr.mxu0 0.0
        %679 = vmatpush1.msra.mxu0 0.0
        %680 = vmatprep.subr.mxu0 0.0
        %681 = vmatpush1.msra.mxu0 0.0
        %682 = vmatprep.mubr.f32.mxu0 0.0
        %683 = vmatmul.mubr.f32.gmra.mrb[0].mxu0 %v595
        %v684 = vpop.f32.mrb[0].mxu0
        %v685 = vadd.f32 0.0, %v684
        %v686 = vpop.f32.mrb[0].mxu0
        %687 = vmatprep.mubr.f32.mxu0 0.0
        %688 = vmatmul.mubr.f32.gmra.mrb[0].mxu0 %v598
        %v689 = vpop.f32.mrb[0].mxu0
        %v690 = vadd.f32 0.0, %v689
        %v691 = vpop.f32.mrb[0].mxu0
        %692 = vmatprep.mubr.f32.mxu0 0.0
        %693 = vmatmul.mubr.f32.gmra.mrb[0].mxu0 %v601
        %v694 = vpop.f32.mrb[0].mxu0
        %v695 = vadd.f32 0.0, %v694
        %v696 = vpop.f32.mrb[0].mxu0
        %697 = vmatprep.mubr.f32.mxu0 0.0
        %698 = vmatmul.mubr.f32.gmra.mrb[0].mxu0 %v604
        %v699 = vpop.f32.mrb[0].mxu0
        %v700 = vadd.f32 0.0, %v699
        %v701 = vpop.f32.mrb[0].mxu0
        %702 = vmatprep.mubr.f32.mxu0 0.0
        %703 = vmatmul.mubr.f32.gmra.mrb[0].mxu0 %v607
        %v704 = vpop.f32.mrb[0].mxu0
        %v705 = vadd.f32 0.0, %v704
        %v706 = vpop.f32.mrb[0].mxu0
        %707 = vmatprep.mubr.f32.mxu0 0.0
        %708 = vmatmul.mubr.f32.gmra.mrb[0].mxu0 %v610
        %v709 = vpop.f32.mrb[0].mxu0
        %v710 = vadd.f32 0.0, %v709
        %v711 = vpop.f32.mrb[0].mxu0
        %712 = vmatprep.mubr.f32.mxu0 0.0
        %713 = vmatmul.mubr.f32.gmra.mrb[0].mxu0 %v613
        %v714 = vpop.f32.mrb[0].mxu0
        %v715 = vadd.f32 0.0, %v714
        %v716 = vpop.f32.mrb[0].mxu0
        %717 = vmatprep.mubr.f32.mxu0 0.0
        %718 = vmatmul.mubr.f32.gmra.mrb[0].mxu0 %v616
        %v719 = vpop.f32.mrb[0].mxu0
        %v720 = vadd.f32 0.0, %v719
        %v721 = vpop.f32.mrb[0].mxu0
        %722 = vdwg.mxu0
        %v723 = vsel %vm362, %v560, 0.0
        %v724 = vrot.slane %v723, 4
        %v725 = vadd.f32 %v723, %v724
        %v726 = vrot.slane %v725, 2
        %v727 = vadd.f32 %v725, %v726
        %v728 = vrot.slane %v727, 1
        %v729 = vadd.f32 %v727, %v728
        %v731 = vsel %vm362, %v560, 0
        %v734 = vsel %vm362, %v337, 0
        %v737 = vsel %vm362, %v338, 0
        %v740 = vsel %vm362, %v339, 0
        %v743 = vsel %vm362, %v340, 0
        %v746 = vsel %vm362, %v341, 0
        %v749 = vsel %vm362, %v342, 0
        %v752 = vsel %vm362, %v343, 0
        %v755 = vsel %vm362, %v344, 0
        %757 = vmatprep.subr.mxu0 0.0
        %758 = vmatpush1.xpose.msra.mxu0 %v734
        %759 = vmatprep.subr.mxu0 0.0
        %760 = vmatpush1.xpose.msra.mxu0 %v737
        %761 = vmatprep.subr.mxu0 0.0
        %762 = vmatpush1.xpose.msra.mxu0 %v740
        %763 = vmatprep.subr.mxu0 0.0
        %764 = vmatpush1.xpose.msra.mxu0 %v743
        %765 = vmatprep.subr.mxu0 0.0
        %766 = vmatpush1.xpose.msra.mxu0 %v746
        %767 = vmatprep.subr.mxu0 0.0
        %768 = vmatpush1.xpose.msra.mxu0 %v749
        %769 = vmatprep.subr.mxu0 0.0
        %770 = vmatpush1.xpose.msra.mxu0 %v752
        %771 = vmatprep.subr.mxu0 0.0
        %772 = vmatpush1.xpose.msra.mxu0 %v755
        %773 = vmatprep.subr.mxu0 0.0
        %774 = vmatpush1.xpose.msra.mxu0 0.0
        %775 = vmatprep.subr.mxu0 0.0
        %776 = vmatpush1.xpose.msra.mxu0 0.0
        %777 = vmatprep.subr.mxu0 0.0
        %778 = vmatpush1.xpose.msra.mxu0 0.0
        %779 = vmatprep.subr.mxu0 0.0
        %780 = vmatpush1.xpose.msra.mxu0 0.0
        %781 = vmatprep.subr.mxu0 0.0
        %782 = vmatpush1.xpose.msra.mxu0 0.0
        %783 = vmatprep.subr.mxu0 0.0
        %784 = vmatpush1.xpose.msra.mxu0 0.0
        %785 = vmatprep.subr.mxu0 0.0
        %786 = vmatpush1.xpose.msra.mxu0 0.0
        %787 = vmatprep.subr.mxu0 0.0
        %788 = vmatpush1.xpose.msra.mxu0 0.0
        %789 = vmatprep.subr.mxu0 0.0
        %790 = vmatpush1.xpose.msra.mxu0 0.0
        %791 = vmatprep.subr.mxu0 0.0
        %792 = vmatpush1.xpose.msra.mxu0 0.0
        %793 = vmatprep.subr.mxu0 0.0
        %794 = vmatpush1.xpose.msra.mxu0 0.0
        %795 = vmatprep.subr.mxu0 0.0
        %796 = vmatpush1.xpose.msra.mxu0 0.0
        %797 = vmatprep.subr.mxu0 0.0
        %798 = vmatpush1.xpose.msra.mxu0 0.0
        %799 = vmatprep.subr.mxu0 0.0
        %800 = vmatpush1.xpose.msra.mxu0 0.0
        %801 = vmatprep.subr.mxu0 0.0
        %802 = vmatpush1.xpose.msra.mxu0 0.0
        %803 = vmatprep.subr.mxu0 0.0
        %804 = vmatpush1.xpose.msra.mxu0 0.0
        %805 = vmatprep.subr.mxu0 0.0
        %806 = vmatpush1.xpose.msra.mxu0 0.0
        %807 = vmatprep.subr.mxu0 0.0
        %808 = vmatpush1.xpose.msra.mxu0 0.0
        %809 = vmatprep.subr.mxu0 0.0
        %810 = vmatpush1.xpose.msra.mxu0 0.0
        %811 = vmatprep.subr.mxu0 0.0
        %812 = vmatpush1.xpose.msra.mxu0 0.0
        %813 = vmatprep.subr.mxu0 0.0
        %814 = vmatpush1.xpose.msra.mxu0 0.0
        %815 = vmatprep.subr.mxu0 0.0
        %816 = vmatpush1.xpose.msra.mxu0 0.0
        %817 = vmatprep.subr.mxu0 0.0
        %818 = vmatpush1.xpose.msra.mxu0 0.0
        %819 = vmatprep.subr.mxu0 0.0
        %820 = vmatpush1.xpose.msra.mxu0 0.0
        %821 = vmatprep.mubr.f32.mxu0 0.0
        %822 = vmatmul.mubr.f32.gmra.mrb[0].mxu0 %v731
        %v823 = vpop.f32.mrb[0].mxu0
        %v824 = vadd.f32 0.0, %v823
        %v825 = vpop.f32.mrb[0].mxu0
        %826 = vdwg.mxu0
        %vm827 = vcmp.gt.f32.partialorder %v433, 0.0
        %v828 = vsel %vm827, %v824, 0.0
        %829 = vxpose.xlu0.b32.start [1/16] %v348, 128
        %830 = vxpose.xlu0.b32.cont [2/16] 0.0, 128
        %831 = vxpose.xlu0.b32.cont [3/16] 0.0, 128
        %832 = vxpose.xlu0.b32.cont [4/16] 0.0, 128
        %833 = vxpose.xlu0.b32.cont [5/16] 0.0, 128
        %834 = vxpose.xlu0.b32.cont [6/16] 0.0, 128
        %835 = vxpose.xlu0.b32.cont [7/16] 0.0, 128
        %836 = vxpose.xlu0.b32.cont [8/16] 0.0, 128
        %837 = vxpose.xlu0.b32.cont [9/16] 0.0, 128
        %838 = vxpose.xlu0.b32.cont [10/16] 0.0, 128
        %839 = vxpose.xlu0.b32.cont [11/16] 0.0, 128
        %840 = vxpose.xlu0.b32.cont [12/16] 0.0, 128
        %841 = vxpose.xlu0.b32.cont [13/16] 0.0, 128
        %842 = vxpose.xlu0.b32.cont [14/16] 0.0, 128
        %843 = vxpose.xlu0.b32.cont [15/16] 0.0, 128
        %844 = vxpose.xlu0.b32.end [16/16] 0.0, 128
        %v845 = vpop.trf.xlu0
        %v846 = vpop.trf.xlu0
        %v847 = vpop.trf.xlu0
        %v848 = vpop.trf.xlu0
        %v849 = vpop.trf.xlu0
        %v850 = vpop.trf.xlu0
        %v851 = vpop.trf.xlu0
        %v852 = vpop.trf.xlu0
        %v853 = vpop.trf.xlu0
        %v854 = vpop.trf.xlu0
        %v855 = vpop.trf.xlu0
        %v856 = vpop.trf.xlu0
        %v857 = vpop.trf.xlu0
        %v858 = vpop.trf.xlu0
        %v859 = vpop.trf.xlu0
        %v860 = vpop.trf.xlu0
        %v862 = vsel %vm593, %v845, 0
        %v865 = vsel %vm593, %v846, 0
        %v868 = vsel %vm593, %v847, 0
        %v871 = vsel %vm593, %v848, 0
        %873 = vmatprep.subr.mxu0 0.0
        %874 = vmatpush1.msra.mxu0 %v828
        %875 = vmatprep.subr.mxu0 0.0
        %876 = vmatpush1.msra.mxu0 0.0
        %877 = vmatprep.subr.mxu0 0.0
        %878 = vmatpush1.msra.mxu0 0.0
        %879 = vmatprep.subr.mxu0 0.0
        %880 = vmatpush1.msra.mxu0 0.0
        %881 = vmatprep.subr.mxu0 0.0
        %882 = vmatpush1.msra.mxu0 0.0
        %883 = vmatprep.subr.mxu0 0.0
        %884 = vmatpush1.msra.mxu0 0.0
        %885 = vmatprep.subr.mxu0 0.0
        %886 = vmatpush1.msra.mxu0 0.0
        %887 = vmatprep.subr.mxu0 0.0
        %888 = vmatpush1.msra.mxu0 0.0
        %889 = vmatprep.subr.mxu0 0.0
        %890 = vmatpush1.msra.mxu0 0.0
        %891 = vmatprep.subr.mxu0 0.0
        %892 = vmatpush1.msra.mxu0 0.0
        %893 = vmatprep.subr.mxu0 0.0
        %894 = vmatpush1.msra.mxu0 0.0
        %895 = vmatprep.subr.mxu0 0.0
        %896 = vmatpush1.msra.mxu0 0.0
        %897 = vmatprep.subr.mxu0 0.0
        %898 = vmatpush1.msra.mxu0 0.0
        %899 = vmatprep.subr.mxu0 0.0
        %900 = vmatpush1.msra.mxu0 0.0
        %901 = vmatprep.subr.mxu0 0.0
        %902 = vmatpush1.msra.mxu0 0.0
        %903 = vmatprep.subr.mxu0 0.0
        %904 = vmatpush1.msra.mxu0 0.0
        %905 = vmatprep.subr.mxu0 0.0
        %906 = vmatpush1.msra.mxu0 0.0
        %907 = vmatprep.subr.mxu0 0.0
        %908 = vmatpush1.msra.mxu0 0.0
        %909 = vmatprep.subr.mxu0 0.0
        %910 = vmatpush1.msra.mxu0 0.0
        %911 = vmatprep.subr.mxu0 0.0
        %912 = vmatpush1.msra.mxu0 0.0
        %913 = vmatprep.subr.mxu0 0.0
        %914 = vmatpush1.msra.mxu0 0.0
        %915 = vmatprep.subr.mxu0 0.0
        %916 = vmatpush1.msra.mxu0 0.0
        %917 = vmatprep.subr.mxu0 0.0
        %918 = vmatpush1.msra.mxu0 0.0
        %919 = vmatprep.subr.mxu0 0.0
        %920 = vmatpush1.msra.mxu0 0.0
        %921 = vmatprep.subr.mxu0 0.0
        %922 = vmatpush1.msra.mxu0 0.0
        %923 = vmatprep.subr.mxu0 0.0
        %924 = vmatpush1.msra.mxu0 0.0
        %925 = vmatprep.subr.mxu0 0.0
        %926 = vmatpush1.msra.mxu0 0.0
        %927 = vmatprep.subr.mxu0 0.0
        %928 = vmatpush1.msra.mxu0 0.0
        %929 = vmatprep.subr.mxu0 0.0
        %930 = vmatpush1.msra.mxu0 0.0
        %931 = vmatprep.subr.mxu0 0.0
        %932 = vmatpush1.msra.mxu0 0.0
        %933 = vmatprep.subr.mxu0 0.0
        %934 = vmatpush1.msra.mxu0 0.0
        %935 = vmatprep.subr.mxu0 0.0
        %936 = vmatpush1.msra.mxu0 0.0
        %937 = vmatprep.mubr.f32.mxu0 0.0
        %938 = vmatmul.mubr.f32.gmra.mrb[0].mxu0 %v862
        %v939 = vpop.f32.mrb[0].mxu0
        %v940 = vadd.f32 0.0, %v939
        %v941 = vpop.f32.mrb[0].mxu0
        %942 = vmatprep.mubr.f32.mxu0 0.0
        %943 = vmatmul.mubr.f32.gmra.mrb[0].mxu0 %v865
        %v944 = vpop.f32.mrb[0].mxu0
        %v945 = vadd.f32 0.0, %v944
        %v946 = vpop.f32.mrb[0].mxu0
        %947 = vmatprep.mubr.f32.mxu0 0.0
        %948 = vmatmul.mubr.f32.gmra.mrb[0].mxu0 %v868
        %v949 = vpop.f32.mrb[0].mxu0
        %v950 = vadd.f32 0.0, %v949
        %v951 = vpop.f32.mrb[0].mxu0
        %952 = vmatprep.mubr.f32.mxu0 0.0
        %953 = vmatmul.mubr.f32.gmra.mrb[0].mxu0 %v871
        %v954 = vpop.f32.mrb[0].mxu0
        %v955 = vadd.f32 0.0, %v954
        %v956 = vpop.f32.mrb[0].mxu0
        %957 = vdwg.mxu0
        %v958 = vsel %vm443, %v828, 0.0
        %v959 = vrot.slane %v958, 4
        %v960 = vadd.f32 %v958, %v959
        %v961 = vrot.slane %v960, 2
        %v962 = vadd.f32 %v960, %v961
        %v963 = vrot.slane %v962, 1
        %v964 = vadd.f32 %v962, %v963
        %v965 = vmul.f32 %v940, 0.01
        %v966 = vmul.f32 %v945, 0.01
        %v967 = vmul.f32 %v950, 0.01
        %v968 = vmul.f32 %v955, 0.01
        %v969 = vsub.f32 %v332, %v965
        %v970 = vsub.f32 %v333, %v966
        %v971 = vsub.f32 %v334, %v967
        %v972 = vsub.f32 %v335, %v968
        %v973 = vmul.f32 %v964, 0.01
        %v974 = vsub.f32 %v336, %v973
        %v975 = vmul.f32 %v685, 0.01
        %v976 = vmul.f32 %v690, 0.01
        %v977 = vmul.f32 %v695, 0.01
        %v978 = vmul.f32 %v700, 0.01
        %v979 = vmul.f32 %v705, 0.01
        %v980 = vmul.f32 %v710, 0.01
        %v981 = vmul.f32 %v715, 0.01
        %v982 = vmul.f32 %v720, 0.01
        %v983 = vsub.f32 %v337, %v975
        %v984 = vsub.f32 %v338, %v976
        %v985 = vsub.f32 %v339, %v977
        %v986 = vsub.f32 %v340, %v978
        %v987 = vsub.f32 %v341, %v979
        %v988 = vsub.f32 %v342, %v980
        %v989 = vsub.f32 %v343, %v981
        %v990 = vsub.f32 %v344, %v982
        %v991 = vmul.f32 %v729, 0.01
        %v992 = vsub.f32 %v345, %v991
        %v993 = vmul.f32 %v549, 0.01
        %v994 = vsub.f32 %v346, %v993
        %v995 = vmul.f32 %v557, 0.01
        %v996 = vsub.f32 %v347, %v995
        %v998 = vsel %vm362, %v352, 0
        %1000 = vmatprep.subr.mxu0 0.0
        %1001 = vmatpush1.msra.mxu0 %v332
        %1002 = vmatprep.subr.mxu0 0.0
        %1003 = vmatpush1.msra.mxu0 %v333
        %1004 = vmatprep.subr.mxu0 0.0
        %1005 = vmatpush1.msra.mxu0 %v334
        %1006 = vmatprep.subr.mxu0 0.0
        %1007 = vmatpush1.msra.mxu0 %v335
        %1008 = vmatprep.subr.mxu0 0.0
        %1009 = vmatpush1.msra.mxu0 0.0
        %1010 = vmatprep.subr.mxu0 0.0
        %1011 = vmatpush1.msra.mxu0 0.0
        %1012 = vmatprep.subr.mxu0 0.0
        %1013 = vmatpush1.msra.mxu0 0.0
        %1014 = vmatprep.subr.mxu0 0.0
        %1015 = vmatpush1.msra.mxu0 0.0
        %1016 = vmatprep.subr.mxu0 0.0
        %1017 = vmatpush1.msra.mxu0 0.0
        %1018 = vmatprep.subr.mxu0 0.0
        %1019 = vmatpush1.msra.mxu0 0.0
        %1020 = vmatprep.subr.mxu0 0.0
        %1021 = vmatpush1.msra.mxu0 0.0
        %1022 = vmatprep.subr.mxu0 0.0
        %1023 = vmatpush1.msra.mxu0 0.0
        %1024 = vmatprep.subr.mxu0 0.0
        %1025 = vmatpush1.msra.mxu0 0.0
        %1026 = vmatprep.subr.mxu0 0.0
        %1027 = vmatpush1.msra.mxu0 0.0
        %1028 = vmatprep.subr.mxu0 0.0
        %1029 = vmatpush1.msra.mxu0 0.0
        %1030 = vmatprep.subr.mxu0 0.0
        %1031 = vmatpush1.msra.mxu0 0.0
        %1032 = vmatprep.subr.mxu0 0.0
        %1033 = vmatpush1.msra.mxu0 0.0
        %1034 = vmatprep.subr.mxu0 0.0
        %1035 = vmatpush1.msra.mxu0 0.0
        %1036 = vmatprep.subr.mxu0 0.0
        %1037 = vmatpush1.msra.mxu0 0.0
        %1038 = vmatprep.subr.mxu0 0.0
        %1039 = vmatpush1.msra.mxu0 0.0
        %1040 = vmatprep.subr.mxu0 0.0
        %1041 = vmatpush1.msra.mxu0 0.0
        %1042 = vmatprep.subr.mxu0 0.0
        %1043 = vmatpush1.msra.mxu0 0.0
        %1044 = vmatprep.subr.mxu0 0.0
        %1045 = vmatpush1.msra.mxu0 0.0
        %1046 = vmatprep.subr.mxu0 0.0
        %1047 = vmatpush1.msra.mxu0 0.0
        %1048 = vmatprep.subr.mxu0 0.0
        %1049 = vmatpush1.msra.mxu0 0.0
        %1050 = vmatprep.subr.mxu0 0.0
        %1051 = vmatpush1.msra.mxu0 0.0
        %1052 = vmatprep.subr.mxu0 0.0
        %1053 = vmatpush1.msra.mxu0 0.0
        %1054 = vmatprep.subr.mxu0 0.0
        %1055 = vmatpush1.msra.mxu0 0.0
        %1056 = vmatprep.subr.mxu0 0.0
        %1057 = vmatpush1.msra.mxu0 0.0
        %1058 = vmatprep.subr.mxu0 0.0
        %1059 = vmatpush1.msra.mxu0 0.0
        %1060 = vmatprep.subr.mxu0 0.0
        %1061 = vmatpush1.msra.mxu0 0.0
        %1062 = vmatprep.subr.mxu0 0.0
        %1063 = vmatpush1.msra.mxu0 0.0
        %1064 = vmatprep.mubr.f32.mxu0 0.0
        %1065 = vmatmul.mubr.f32.gmra.mrb[0].mxu0 %v998
        %v1066 = vpop.f32.mrb[0].mxu0
        %v1067 = vadd.f32 %v360, %v1066
        %v1068 = vpop.f32.mrb[0].mxu0
        %1069 = vdwg.mxu0
        %v1070 = vmax.f32 %v1067, 0.0
        %v1072 = vsel %vm443, %v1070, 0
        %1074 = vmatprep.subr.mxu0 0.0
        %1075 = vmatpush1.msra.mxu0 %v337
        %1076 = vmatprep.subr.mxu0 0.0
        %1077 = vmatpush1.msra.mxu0 %v338
        %1078 = vmatprep.subr.mxu0 0.0
        %1079 = vmatpush1.msra.mxu0 %v339
        %1080 = vmatprep.subr.mxu0 0.0
        %1081 = vmatpush1.msra.mxu0 %v340
        %1082 = vmatprep.subr.mxu0 0.0
        %1083 = vmatpush1.msra.mxu0 %v341
        %1084 = vmatprep.subr.mxu0 0.0
        %1085 = vmatpush1.msra.mxu0 %v342
        %1086 = vmatprep.subr.mxu0 0.0
        %1087 = vmatpush1.msra.mxu0 %v343
        %1088 = vmatprep.subr.mxu0 0.0
        %1089 = vmatpush1.msra.mxu0 %v344
        %1090 = vmatprep.subr.mxu0 0.0
        %1091 = vmatpush1.msra.mxu0 0.0
        %1092 = vmatprep.subr.mxu0 0.0
        %1093 = vmatpush1.msra.mxu0 0.0
        %1094 = vmatprep.subr.mxu0 0.0
        %1095 = vmatpush1.msra.mxu0 0.0
        %1096 = vmatprep.subr.mxu0 0.0
        %1097 = vmatpush1.msra.mxu0 0.0
        %1098 = vmatprep.subr.mxu0 0.0
        %1099 = vmatpush1.msra.mxu0 0.0
        %1100 = vmatprep.subr.mxu0 0.0
        %1101 = vmatpush1.msra.mxu0 0.0
        %1102 = vmatprep.subr.mxu0 0.0
        %1103 = vmatpush1.msra.mxu0 0.0
        %1104 = vmatprep.subr.mxu0 0.0
        %1105 = vmatpush1.msra.mxu0 0.0
        %1106 = vmatprep.subr.mxu0 0.0
        %1107 = vmatpush1.msra.mxu0 0.0
        %1108 = vmatprep.subr.mxu0 0.0
        %1109 = vmatpush1.msra.mxu0 0.0
        %1110 = vmatprep.subr.mxu0 0.0
        %1111 = vmatpush1.msra.mxu0 0.0
        %1112 = vmatprep.subr.mxu0 0.0
        %1113 = vmatpush1.msra.mxu0 0.0
        %1114 = vmatprep.subr.mxu0 0.0
        %1115 = vmatpush1.msra.mxu0 0.0
        %1116 = vmatprep.subr.mxu0 0.0
        %1117 = vmatpush1.msra.mxu0 0.0
        %1118 = vmatprep.subr.mxu0 0.0
        %1119 = vmatpush1.msra.mxu0 0.0
        %1120 = vmatprep.subr.mxu0 0.0
        %1121 = vmatpush1.msra.mxu0 0.0
        %1122 = vmatprep.subr.mxu0 0.0
        %1123 = vmatpush1.msra.mxu0 0.0
        %1124 = vmatprep.subr.mxu0 0.0
        %1125 = vmatpush1.msra.mxu0 0.0
        %1126 = vmatprep.subr.mxu0 0.0
        %1127 = vmatpush1.msra.mxu0 0.0
        %1128 = vmatprep.subr.mxu0 0.0
        %1129 = vmatpush1.msra.mxu0 0.0
        %1130 = vmatprep.subr.mxu0 0.0
        %1131 = vmatpush1.msra.mxu0 0.0
        %1132 = vmatprep.subr.mxu0 0.0
        %1133 = vmatpush1.msra.mxu0 0.0
        %1134 = vmatprep.subr.mxu0 0.0
        %1135 = vmatpush1.msra.mxu0 0.0
        %1136 = vmatprep.subr.mxu0 0.0
        %1137 = vmatpush1.msra.mxu0 0.0
        %1138 = vmatprep.mubr.f32.mxu0 0.0
        %1139 = vmatmul.mubr.f32.gmra.mrb[0].mxu0 %v1072
        %v1140 = vpop.f32.mrb[0].mxu0
        %v1141 = vadd.f32 %v441, %v1140
        %v1142 = vpop.f32.mrb[0].mxu0
        %1143 = vdwg.mxu0
        %v1144 = vmax.f32 %v1141, 0.0
        %v1145 = vmul.f32 %v1144, %v522
        %v1146 = vsel %vm362, %v1145, 0.0
        %1147 = vadd.xlane.f32.xlu0 %v1146
        %v1148 = vpop.xlane.xlu0 %1147
        %v1149 = vadd.f32 %v1148, %v532
        %v1150 = vsub.f32 %v1149, %v355
        %v1151 = vmul.f32 %v1150, 0.25
        %1153 = vset.pattern.permute.xlu0 0
        %1154 = vperm.xlu0 %1153, %v1151
        %v1155 = vpop.permute.xlu0 %1154
        %v1157 = vmul.f32 %v1155, %v1144
        %v1158 = vsel %vm362, %v1157, 0.0
        %v1159 = vrot.slane %v1158, 4
        %v1160 = vadd.f32 %v1158, %v1159
        %v1161 = vrot.slane %v1160, 2
        %v1162 = vadd.f32 %v1160, %v1161
        %v1163 = vrot.slane %v1162, 1
        %v1164 = vadd.f32 %v1162, %v1163
        %v1165 = vsel %vm550, %v1151, 0.0
        %v1166 = vrot.slane %v1165, 4
        %v1167 = vadd.f32 %v1165, %v1166
        %v1168 = vrot.slane %v1167, 2
        %v1169 = vadd.f32 %v1167, %v1168
        %v1170 = vrot.slane %v1169, 1
        %v1171 = vadd.f32 %v1169, %v1170
        %v1172 = vmul.f32 %v1155, %v522
        %vm1173 = vcmp.gt.f32.partialorder %v1141, 0.0
        %v1174 = vsel %vm1173, %v1172, 0.0
        %1175 = vxpose.xlu0.b32.start [1/16] %v1070, 128
        %1176 = vxpose.xlu0.b32.cont [2/16] 0.0, 128
        %1177 = vxpose.xlu0.b32.cont [3/16] 0.0, 128
        %1178 = vxpose.xlu0.b32.cont [4/16] 0.0, 128
        %1179 = vxpose.xlu0.b32.cont [5/16] 0.0, 128
        %1180 = vxpose.xlu0.b32.cont [6/16] 0.0, 128
        %1181 = vxpose.xlu0.b32.cont [7/16] 0.0, 128
        %1182 = vxpose.xlu0.b32.cont [8/16] 0.0, 128
        %1183 = vxpose.xlu0.b32.cont [9/16] 0.0, 128
        %1184 = vxpose.xlu0.b32.cont [10/16] 0.0, 128
        %1185 = vxpose.xlu0.b32.cont [11/16] 0.0, 128
        %1186 = vxpose.xlu0.b32.cont [12/16] 0.0, 128
        %1187 = vxpose.xlu0.b32.cont [13/16] 0.0, 128
        %1188 = vxpose.xlu0.b32.cont [14/16] 0.0, 128
        %1189 = vxpose.xlu0.b32.cont [15/16] 0.0, 128
        %1190 = vxpose.xlu0.b32.end [16/16] 0.0, 128
        %v1191 = vpop.trf.xlu0
        %v1192 = vpop.trf.xlu0
        %v1193 = vpop.trf.xlu0
        %v1194 = vpop.trf.xlu0
        %v1195 = vpop.trf.xlu0
        %v1196 = vpop.trf.xlu0
        %v1197 = vpop.trf.xlu0
        %v1198 = vpop.trf.xlu0
        %v1199 = vpop.trf.xlu0
        %v1200 = vpop.trf.xlu0
        %v1201 = vpop.trf.xlu0
        %v1202 = vpop.trf.xlu0
        %v1203 = vpop.trf.xlu0
        %v1204 = vpop.trf.xlu0
        %v1205 = vpop.trf.xlu0
        %v1206 = vpop.trf.xlu0
        %v1208 = vsel %vm593, %v1191, 0
        %v1211 = vsel %vm593, %v1192, 0
        %v1214 = vsel %vm593, %v1193, 0
        %v1217 = vsel %vm593, %v1194, 0
        %v1220 = vsel %vm593, %v1195, 0
        %v1223 = vsel %vm593, %v1196, 0
        %v1226 = vsel %vm593, %v1197, 0
        %v1229 = vsel %vm593, %v1198, 0
        %1231 = vmatprep.subr.mxu0 0.0
        %1232 = vmatpush1.msra.mxu0 %v1174
        %1233 = vmatprep.subr.mxu0 0.0
        %1234 = vmatpush1.msra.mxu0 0.0
        %1235 = vmatprep.subr.mxu0 0.0
        %1236 = vmatpush1.msra.mxu0 0.0
        %1237 = vmatprep.subr.mxu0 0.0
        %1238 = vmatpush1.msra.mxu0 0.0
        %1239 = vmatprep.subr.mxu0 0.0
        %1240 = vmatpush1.msra.mxu0 0.0
        %1241 = vmatprep.subr.mxu0 0.0
        %1242 = vmatpush1.msra.mxu0 0.0
        %1243 = vmatprep.subr.mxu0 0.0
        %1244 = vmatpush1.msra.mxu0 0.0
        %1245 = vmatprep.subr.mxu0 0.0
        %1246 = vmatpush1.msra.mxu0 0.0
        %1247 = vmatprep.subr.mxu0 0.0
        %1248 = vmatpush1.msra.mxu0 0.0
        %1249 = vmatprep.subr.mxu0 0.0
        %1250 = vmatpush1.msra.mxu0 0.0
        %1251 = vmatprep.subr.mxu0 0.0
        %1252 = vmatpush1.msra.mxu0 0.0
        %1253 = vmatprep.subr.mxu0 0.0
        %1254 = vmatpush1.msra.mxu0 0.0
        %1255 = vmatprep.subr.mxu0 0.0
        %1256 = vmatpush1.msra.mxu0 0.0
        %1257 = vmatprep.subr.mxu0 0.0
        %1258 = vmatpush1.msra.mxu0 0.0
        %1259 = vmatprep.subr.mxu0 0.0
        %1260 = vmatpush1.msra.mxu0 0.0
        %1261 = vmatprep.subr.mxu0 0.0
        %1262 = vmatpush1.msra.mxu0 0.0
        %1263 = vmatprep.subr.mxu0 0.0
        %1264 = vmatpush1.msra.mxu0 0.0
        %1265 = vmatprep.subr.mxu0 0.0
        %1266 = vmatpush1.msra.mxu0 0.0
        %1267 = vmatprep.subr.mxu0 0.0
        %1268 = vmatpush1.msra.mxu0 0.0
        %1269 = vmatprep.subr.mxu0 0.0
        %1270 = vmatpush1.msra.mxu0 0.0
        %1271 = vmatprep.subr.mxu0 0.0
        %1272 = vmatpush1.msra.mxu0 0.0
        %1273 = vmatprep.subr.mxu0 0.0
        %1274 = vmatpush1.msra.mxu0 0.0
        %1275 = vmatprep.subr.mxu0 0.0
        %1276 = vmatpush1.msra.mxu0 0.0
        %1277 = vmatprep.subr.mxu0 0.0
        %1278 = vmatpush1.msra.mxu0 0.0
        %1279 = vmatprep.subr.mxu0 0.0
        %1280 = vmatpush1.msra.mxu0 0.0
        %1281 = vmatprep.subr.mxu0 0.0
        %1282 = vmatpush1.msra.mxu0 0.0
        %1283 = vmatprep.subr.mxu0 0.0
        %1284 = vmatpush1.msra.mxu0 0.0
        %1285 = vmatprep.subr.mxu0 0.0
        %1286 = vmatpush1.msra.mxu0 0.0
        %1287 = vmatprep.subr.mxu0 0.0
        %1288 = vmatpush1.msra.mxu0 0.0
        %1289 = vmatprep.subr.mxu0 0.0
        %1290 = vmatpush1.msra.mxu0 0.0
        %1291 = vmatprep.subr.mxu0 0.0
        %1292 = vmatpush1.msra.mxu0 0.0
        %1293 = vmatprep.subr.mxu0 0.0
        %1294 = vmatpush1.msra.mxu0 0.0
        %1295 = vmatprep.mubr.f32.mxu0 0.0
        %1296 = vmatmul.mubr.f32.gmra.mrb[0].mxu0 %v1208
        %v1297 = vpop.f32.mrb[0].mxu0
        %v1298 = vadd.f32 0.0, %v1297
        %v1299 = vpop.f32.mrb[0].mxu0
        %1300 = vmatprep.mubr.f32.mxu0 0.0
        %1301 = vmatmul.mubr.f32.gmra.mrb[0].mxu0 %v1211
        %v1302 = vpop.f32.mrb[0].mxu0
        %v1303 = vadd.f32 0.0, %v1302
        %v1304 = vpop.f32.mrb[0].mxu0
        %1305 = vmatprep.mubr.f32.mxu0 0.0
        %1306 = vmatmul.mubr.f32.gmra.mrb[0].mxu0 %v1214
        %v1307 = vpop.f32.mrb[0].mxu0
        %v1308 = vadd.f32 0.0, %v1307
        %v1309 = vpop.f32.mrb[0].mxu0
        %1310 = vmatprep.mubr.f32.mxu0 0.0
        %1311 = vmatmul.mubr.f32.gmra.mrb[0].mxu0 %v1217
        %v1312 = vpop.f32.mrb[0].mxu0
        %v1313 = vadd.f32 0.0, %v1312
        %v1314 = vpop.f32.mrb[0].mxu0
        %1315 = vmatprep.mubr.f32.mxu0 0.0
        %1316 = vmatmul.mubr.f32.gmra.mrb[0].mxu0 %v1220
        %v1317 = vpop.f32.mrb[0].mxu0
        %v1318 = vadd.f32 0.0, %v1317
        %v1319 = vpop.f32.mrb[0].mxu0
        %1320 = vmatprep.mubr.f32.mxu0 0.0
        %1321 = vmatmul.mubr.f32.gmra.mrb[0].mxu0 %v1223
        %v1322 = vpop.f32.mrb[0].mxu0
        %v1323 = vadd.f32 0.0, %v1322
        %v1324 = vpop.f32.mrb[0].mxu0
        %1325 = vmatprep.mubr.f32.mxu0 0.0
        %1326 = vmatmul.mubr.f32.gmra.mrb[0].mxu0 %v1226
        %v1327 = vpop.f32.mrb[0].mxu0
        %v1328 = vadd.f32 0.0, %v1327
        %v1329 = vpop.f32.mrb[0].mxu0
        %1330 = vmatprep.mubr.f32.mxu0 0.0
        %1331 = vmatmul.mubr.f32.gmra.mrb[0].mxu0 %v1229
        %v1332 = vpop.f32.mrb[0].mxu0
        %v1333 = vadd.f32 0.0, %v1332
        %v1334 = vpop.f32.mrb[0].mxu0
        %1335 = vdwg.mxu0
        %v1336 = vsel %vm362, %v1174, 0.0
        %v1337 = vrot.slane %v1336, 4
        %v1338 = vadd.f32 %v1336, %v1337
        %v1339 = vrot.slane %v1338, 2
        %v1340 = vadd.f32 %v1338, %v1339
        %v1341 = vrot.slane %v1340, 1
        %v1342 = vadd.f32 %v1340, %v1341
        %v1344 = vsel %vm362, %v1174, 0
        %1346 = vmatprep.subr.mxu0 0.0
        %1347 = vmatpush1.xpose.msra.mxu0 %v734
        %1348 = vmatprep.subr.mxu0 0.0
        %1349 = vmatpush1.xpose.msra.mxu0 %v737
        %1350 = vmatprep.subr.mxu0 0.0
        %1351 = vmatpush1.xpose.msra.mxu0 %v740
        %1352 = vmatprep.subr.mxu0 0.0
        %1353 = vmatpush1.xpose.msra.mxu0 %v743
        %1354 = vmatprep.subr.mxu0 0.0
        %1355 = vmatpush1.xpose.msra.mxu0 %v746
        %1356 = vmatprep.subr.mxu0 0.0
        %1357 = vmatpush1.xpose.msra.mxu0 %v749
        %1358 = vmatprep.subr.mxu0 0.0
        %1359 = vmatpush1.xpose.msra.mxu0 %v752
        %1360 = vmatprep.subr.mxu0 0.0
        %1361 = vmatpush1.xpose.msra.mxu0 %v755
        %1362 = vmatprep.subr.mxu0 0.0
        %1363 = vmatpush1.xpose.msra.mxu0 0.0
        %1364 = vmatprep.subr.mxu0 0.0
        %1365 = vmatpush1.xpose.msra.mxu0 0.0
        %1366 = vmatprep.subr.mxu0 0.0
        %1367 = vmatpush1.xpose.msra.mxu0 0.0
        %1368 = vmatprep.subr.mxu0 0.0
        %1369 = vmatpush1.xpose.msra.mxu0 0.0
        %1370 = vmatprep.subr.mxu0 0.0
        %1371 = vmatpush1.xpose.msra.mxu0 0.0
        %1372 = vmatprep.subr.mxu0 0.0
        %1373 = vmatpush1.xpose.msra.mxu0 0.0
        %1374 = vmatprep.subr.mxu0 0.0
        %1375 = vmatpush1.xpose.msra.mxu0 0.0
        %1376 = vmatprep.subr.mxu0 0.0
        %1377 = vmatpush1.xpose.msra.mxu0 0.0
        %1378 = vmatprep.subr.mxu0 0.0
        %1379 = vmatpush1.xpose.msra.mxu0 0.0
        %1380 = vmatprep.subr.mxu0 0.0
        %1381 = vmatpush1.xpose.msra.mxu0 0.0
        %1382 = vmatprep.subr.mxu0 0.0
        %1383 = vmatpush1.xpose.msra.mxu0 0.0
        %1384 = vmatprep.subr.mxu0 0.0
        %1385 = vmatpush1.xpose.msra.mxu0 0.0
        %1386 = vmatprep.subr.mxu0 0.0
        %1387 = vmatpush1.xpose.msra.mxu0 0.0
        %1388 = vmatprep.subr.mxu0 0.0
        %1389 = vmatpush1.xpose.msra.mxu0 0.0
        %1390 = vmatprep.subr.mxu0 0.0
        %1391 = vmatpush1.xpose.msra.mxu0 0.0
        %1392 = vmatprep.subr.mxu0 0.0
        %1393 = vmatpush1.xpose.msra.mxu0 0.0
        %1394 = vmatprep.subr.mxu0 0.0
        %1395 = vmatpush1.xpose.msra.mxu0 0.0
        %1396 = vmatprep.subr.mxu0 0.0
        %1397 = vmatpush1.xpose.msra.mxu0 0.0
        %1398 = vmatprep.subr.mxu0 0.0
        %1399 = vmatpush1.xpose.msra.mxu0 0.0
        %1400 = vmatprep.subr.mxu0 0.0
        %1401 = vmatpush1.xpose.msra.mxu0 0.0
        %1402 = vmatprep.subr.mxu0 0.0
        %1403 = vmatpush1.xpose.msra.mxu0 0.0
        %1404 = vmatprep.subr.mxu0 0.0
        %1405 = vmatpush1.xpose.msra.mxu0 0.0
        %1406 = vmatprep.subr.mxu0 0.0
        %1407 = vmatpush1.xpose.msra.mxu0 0.0
        %1408 = vmatprep.subr.mxu0 0.0
        %1409 = vmatpush1.xpose.msra.mxu0 0.0
        %1410 = vmatprep.mubr.f32.mxu0 0.0
        %1411 = vmatmul.mubr.f32.gmra.mrb[0].mxu0 %v1344
        %v1412 = vpop.f32.mrb[0].mxu0
        %v1413 = vadd.f32 0.0, %v1412
        %v1414 = vpop.f32.mrb[0].mxu0
        %1415 = vdwg.mxu0
        %vm1416 = vcmp.gt.f32.partialorder %v1067, 0.0
        %v1417 = vsel %vm1416, %v1413, 0.0
        %1418 = vxpose.xlu0.b32.start [1/16] %v352, 128
        %1419 = vxpose.xlu0.b32.cont [2/16] 0.0, 128
        %1420 = vxpose.xlu0.b32.cont [3/16] 0.0, 128
        %1421 = vxpose.xlu0.b32.cont [4/16] 0.0, 128
        %1422 = vxpose.xlu0.b32.cont [5/16] 0.0, 128
        %1423 = vxpose.xlu0.b32.cont [6/16] 0.0, 128
        %1424 = vxpose.xlu0.b32.cont [7/16] 0.0, 128
        %1425 = vxpose.xlu0.b32.cont [8/16] 0.0, 128
        %1426 = vxpose.xlu0.b32.cont [9/16] 0.0, 128
        %1427 = vxpose.xlu0.b32.cont [10/16] 0.0, 128
        %1428 = vxpose.xlu0.b32.cont [11/16] 0.0, 128
        %1429 = vxpose.xlu0.b32.cont [12/16] 0.0, 128
        %1430 = vxpose.xlu0.b32.cont [13/16] 0.0, 128
        %1431 = vxpose.xlu0.b32.cont [14/16] 0.0, 128
        %1432 = vxpose.xlu0.b32.cont [15/16] 0.0, 128
        %1433 = vxpose.xlu0.b32.end [16/16] 0.0, 128
        %v1434 = vpop.trf.xlu0
        %v1435 = vpop.trf.xlu0
        %v1436 = vpop.trf.xlu0
        %v1437 = vpop.trf.xlu0
        %v1438 = vpop.trf.xlu0
        %v1439 = vpop.trf.xlu0
        %v1440 = vpop.trf.xlu0
        %v1441 = vpop.trf.xlu0
        %v1442 = vpop.trf.xlu0
        %v1443 = vpop.trf.xlu0
        %v1444 = vpop.trf.xlu0
        %v1445 = vpop.trf.xlu0
        %v1446 = vpop.trf.xlu0
        %v1447 = vpop.trf.xlu0
        %v1448 = vpop.trf.xlu0
        %v1449 = vpop.trf.xlu0
        %v1451 = vsel %vm593, %v1434, 0
        %v1454 = vsel %vm593, %v1435, 0
        %v1457 = vsel %vm593, %v1436, 0
        %v1460 = vsel %vm593, %v1437, 0
        %1462 = vmatprep.subr.mxu0 0.0
        %1463 = vmatpush1.msra.mxu0 %v1417
        %1464 = vmatprep.subr.mxu0 0.0
        %1465 = vmatpush1.msra.mxu0 0.0
        %1466 = vmatprep.subr.mxu0 0.0
        %1467 = vmatpush1.msra.mxu0 0.0
        %1468 = vmatprep.subr.mxu0 0.0
        %1469 = vmatpush1.msra.mxu0 0.0
        %1470 = vmatprep.subr.mxu0 0.0
        %1471 = vmatpush1.msra.mxu0 0.0
        %1472 = vmatprep.subr.mxu0 0.0
        %1473 = vmatpush1.msra.mxu0 0.0
        %1474 = vmatprep.subr.mxu0 0.0
        %1475 = vmatpush1.msra.mxu0 0.0
        %1476 = vmatprep.subr.mxu0 0.0
        %1477 = vmatpush1.msra.mxu0 0.0
        %1478 = vmatprep.subr.mxu0 0.0
        %1479 = vmatpush1.msra.mxu0 0.0
        %1480 = vmatprep.subr.mxu0 0.0
        %1481 = vmatpush1.msra.mxu0 0.0
        %1482 = vmatprep.subr.mxu0 0.0
        %1483 = vmatpush1.msra.mxu0 0.0
        %1484 = vmatprep.subr.mxu0 0.0
        %1485 = vmatpush1.msra.mxu0 0.0
        %1486 = vmatprep.subr.mxu0 0.0
        %1487 = vmatpush1.msra.mxu0 0.0
        %1488 = vmatprep.subr.mxu0 0.0
        %1489 = vmatpush1.msra.mxu0 0.0
        %1490 = vmatprep.subr.mxu0 0.0
        %1491 = vmatpush1.msra.mxu0 0.0
        %1492 = vmatprep.subr.mxu0 0.0
        %1493 = vmatpush1.msra.mxu0 0.0
        %1494 = vmatprep.subr.mxu0 0.0
        %1495 = vmatpush1.msra.mxu0 0.0
        %1496 = vmatprep.subr.mxu0 0.0
        %1497 = vmatpush1.msra.mxu0 0.0
        %1498 = vmatprep.subr.mxu0 0.0
        %1499 = vmatpush1.msra.mxu0 0.0
        %1500 = vmatprep.subr.mxu0 0.0
        %1501 = vmatpush1.msra.mxu0 0.0
        %1502 = vmatprep.subr.mxu0 0.0
        %1503 = vmatpush1.msra.mxu0 0.0
        %1504 = vmatprep.subr.mxu0 0.0
        %1505 = vmatpush1.msra.mxu0 0.0
        %1506 = vmatprep.subr.mxu0 0.0
        %1507 = vmatpush1.msra.mxu0 0.0
        %1508 = vmatprep.subr.mxu0 0.0
        %1509 = vmatpush1.msra.mxu0 0.0
        %1510 = vmatprep.subr.mxu0 0.0
        %1511 = vmatpush1.msra.mxu0 0.0
        %1512 = vmatprep.subr.mxu0 0.0
        %1513 = vmatpush1.msra.mxu0 0.0
        %1514 = vmatprep.subr.mxu0 0.0
        %1515 = vmatpush1.msra.mxu0 0.0
        %1516 = vmatprep.subr.mxu0 0.0
        %1517 = vmatpush1.msra.mxu0 0.0
        %1518 = vmatprep.subr.mxu0 0.0
        %1519 = vmatpush1.msra.mxu0 0.0
        %1520 = vmatprep.subr.mxu0 0.0
        %1521 = vmatpush1.msra.mxu0 0.0
        %1522 = vmatprep.subr.mxu0 0.0
        %1523 = vmatpush1.msra.mxu0 0.0
        %1524 = vmatprep.subr.mxu0 0.0
        %1525 = vmatpush1.msra.mxu0 0.0
        %1526 = vmatprep.mubr.f32.mxu0 0.0
        %1527 = vmatmul.mubr.f32.gmra.mrb[0].mxu0 %v1451
        %v1528 = vpop.f32.mrb[0].mxu0
        %v1529 = vadd.f32 0.0, %v1528
        %v1530 = vpop.f32.mrb[0].mxu0
        %1531 = vmatprep.mubr.f32.mxu0 0.0
        %1532 = vmatmul.mubr.f32.gmra.mrb[0].mxu0 %v1454
        %v1533 = vpop.f32.mrb[0].mxu0
        %v1534 = vadd.f32 0.0, %v1533
        %v1535 = vpop.f32.mrb[0].mxu0
        %1536 = vmatprep.mubr.f32.mxu0 0.0
        %1537 = vmatmul.mubr.f32.gmra.mrb[0].mxu0 %v1457
        %v1538 = vpop.f32.mrb[0].mxu0
        %v1539 = vadd.f32 0.0, %v1538
        %v1540 = vpop.f32.mrb[0].mxu0
        %1541 = vmatprep.mubr.f32.mxu0 0.0
        %1542 = vmatmul.mubr.f32.gmra.mrb[0].mxu0 %v1460
        %v1543 = vpop.f32.mrb[0].mxu0
        %v1544 = vadd.f32 0.0, %v1543
        %v1545 = vpop.f32.mrb[0].mxu0
        %1546 = vdwg.mxu0
        %v1547 = vsel %vm443, %v1417, 0.0
        %v1548 = vrot.slane %v1547, 4
        %v1549 = vadd.f32 %v1547, %v1548
        %v1550 = vrot.slane %v1549, 2
        %v1551 = vadd.f32 %v1549, %v1550
        %v1552 = vrot.slane %v1551, 1
        %v1553 = vadd.f32 %v1551, %v1552
        %v1554 = vmul.f32 %v1529, 0.01
        %v1555 = vmul.f32 %v1534, 0.01
        %v1556 = vmul.f32 %v1539, 0.01
        %v1557 = vmul.f32 %v1544, 0.01
        %v1558 = vsub.f32 %v332, %v1554
        %v1559 = vsub.f32 %v333, %v1555
        %v1560 = vsub.f32 %v334, %v1556
        %v1561 = vsub.f32 %v335, %v1557
        %v1562 = vmul.f32 %v1553, 0.01
        %v1563 = vsub.f32 %v336, %v1562
        %v1564 = vmul.f32 %v1298, 0.01
        %v1565 = vmul.f32 %v1303, 0.01
        %v1566 = vmul.f32 %v1308, 0.01
        %v1567 = vmul.f32 %v1313, 0.01
        %v1568 = vmul.f32 %v1318, 0.01
        %v1569 = vmul.f32 %v1323, 0.01
        %v1570 = vmul.f32 %v1328, 0.01
        %v1571 = vmul.f32 %v1333, 0.01
        %v1572 = vsub.f32 %v337, %v1564
        %v1573 = vsub.f32 %v338, %v1565
        %v1574 = vsub.f32 %v339, %v1566
        %v1575 = vsub.f32 %v340, %v1567
        %v1576 = vsub.f32 %v341, %v1568
        %v1577 = vsub.f32 %v342, %v1569
        %v1578 = vsub.f32 %v343, %v1570
        %v1579 = vsub.f32 %v344, %v1571
        %v1580 = vmul.f32 %v1342, 0.01
        %v1581 = vsub.f32 %v345, %v1580
        %v1582 = vmul.f32 %v1164, 0.01
        %v1583 = vsub.f32 %v346, %v1582
        %v1584 = vmul.f32 %v1171, 0.01
        %v1585 = vsub.f32 %v347, %v1584
        %v1587 = vlaneseq
        %v1588 = vshrl.u32 %v1587, 7
        %v1589 = vsub.s32 0, %v1588
        %v1590 = vrot.slane %v974, %v1589
        %1592 = vmatprep.subr.mxu0 0.0
        %1593 = vmatpush1.msra.mxu0 %v969
        %1594 = vmatprep.subr.mxu0 0.0
        %1595 = vmatpush1.msra.mxu0 %v970
        %1596 = vmatprep.subr.mxu0 0.0
        %1597 = vmatpush1.msra.mxu0 %v971
        %1598 = vmatprep.subr.mxu0 0.0
        %1599 = vmatpush1.msra.mxu0 %v972
        %1600 = vmatprep.subr.mxu0 0.0
        %1601 = vmatpush1.msra.mxu0 0.0
        %1602 = vmatprep.subr.mxu0 0.0
        %1603 = vmatpush1.msra.mxu0 0.0
        %1604 = vmatprep.subr.mxu0 0.0
        %1605 = vmatpush1.msra.mxu0 0.0
        %1606 = vmatprep.subr.mxu0 0.0
        %1607 = vmatpush1.msra.mxu0 0.0
        %1608 = vmatprep.subr.mxu0 0.0
        %1609 = vmatpush1.msra.mxu0 0.0
        %1610 = vmatprep.subr.mxu0 0.0
        %1611 = vmatpush1.msra.mxu0 0.0
        %1612 = vmatprep.subr.mxu0 0.0
        %1613 = vmatpush1.msra.mxu0 0.0
        %1614 = vmatprep.subr.mxu0 0.0
        %1615 = vmatpush1.msra.mxu0 0.0
        %1616 = vmatprep.subr.mxu0 0.0
        %1617 = vmatpush1.msra.mxu0 0.0
        %1618 = vmatprep.subr.mxu0 0.0
        %1619 = vmatpush1.msra.mxu0 0.0
        %1620 = vmatprep.subr.mxu0 0.0
        %1621 = vmatpush1.msra.mxu0 0.0
        %1622 = vmatprep.subr.mxu0 0.0
        %1623 = vmatpush1.msra.mxu0 0.0
        %1624 = vmatprep.subr.mxu0 0.0
        %1625 = vmatpush1.msra.mxu0 0.0
        %1626 = vmatprep.subr.mxu0 0.0
        %1627 = vmatpush1.msra.mxu0 0.0
        %1628 = vmatprep.subr.mxu0 0.0
        %1629 = vmatpush1.msra.mxu0 0.0
        %1630 = vmatprep.subr.mxu0 0.0
        %1631 = vmatpush1.msra.mxu0 0.0
        %1632 = vmatprep.subr.mxu0 0.0
        %1633 = vmatpush1.msra.mxu0 0.0
        %1634 = vmatprep.subr.mxu0 0.0
        %1635 = vmatpush1.msra.mxu0 0.0
        %1636 = vmatprep.subr.mxu0 0.0
        %1637 = vmatpush1.msra.mxu0 0.0
        %1638 = vmatprep.subr.mxu0 0.0
        %1639 = vmatpush1.msra.mxu0 0.0
        %1640 = vmatprep.subr.mxu0 0.0
        %1641 = vmatpush1.msra.mxu0 0.0
        %1642 = vmatprep.subr.mxu0 0.0
        %1643 = vmatpush1.msra.mxu0 0.0
        %1644 = vmatprep.subr.mxu0 0.0
        %1645 = vmatpush1.msra.mxu0 0.0
        %1646 = vmatprep.subr.mxu0 0.0
        %1647 = vmatpush1.msra.mxu0 0.0
        %1648 = vmatprep.subr.mxu0 0.0
        %1649 = vmatpush1.msra.mxu0 0.0
        %1650 = vmatprep.subr.mxu0 0.0
        %1651 = vmatpush1.msra.mxu0 0.0
        %1652 = vmatprep.subr.mxu0 0.0
        %1653 = vmatpush1.msra.mxu0 0.0
        %1654 = vmatprep.subr.mxu0 0.0
        %1655 = vmatpush1.msra.mxu0 0.0
        %1656 = vmatprep.mubr.f32.mxu0 0.0
        %1657 = vmatmul.mubr.f32.gmra.mrb[0].mxu0 %v364
        %v1658 = vpop.f32.mrb[0].mxu0
        %v1659 = vadd.f32 %v1590, %v1658
        %v1660 = vpop.f32.mrb[0].mxu0
        %1661 = vdwg.mxu0
        %v1662 = vmax.f32 %v1659, 0.0
        %v1664 = vlaneseq
        %v1665 = vshrl.u32 %v1664, 7
        %v1666 = vsub.s32 0, %v1665
        %v1667 = vrot.slane %v992, %v1666
        %v1670 = vsel %vm443, %v1662, 0
        %1672 = vmatprep.subr.mxu0 0.0
        %1673 = vmatpush1.msra.mxu0 %v983
        %1674 = vmatprep.subr.mxu0 0.0
        %1675 = vmatpush1.msra.mxu0 %v984
        %1676 = vmatprep.subr.mxu0 0.0
        %1677 = vmatpush1.msra.mxu0 %v985
        %1678 = vmatprep.subr.mxu0 0.0
        %1679 = vmatpush1.msra.mxu0 %v986
        %1680 = vmatprep.subr.mxu0 0.0
        %1681 = vmatpush1.msra.mxu0 %v987
        %1682 = vmatprep.subr.mxu0 0.0
        %1683 = vmatpush1.msra.mxu0 %v988
        %1684 = vmatprep.subr.mxu0 0.0
        %1685 = vmatpush1.msra.mxu0 %v989
        %1686 = vmatprep.subr.mxu0 0.0
        %1687 = vmatpush1.msra.mxu0 %v990
        %1688 = vmatprep.subr.mxu0 0.0
        %1689 = vmatpush1.msra.mxu0 0.0
        %1690 = vmatprep.subr.mxu0 0.0
        %1691 = vmatpush1.msra.mxu0 0.0
        %1692 = vmatprep.subr.mxu0 0.0
        %1693 = vmatpush1.msra.mxu0 0.0
        %1694 = vmatprep.subr.mxu0 0.0
        %1695 = vmatpush1.msra.mxu0 0.0
        %1696 = vmatprep.subr.mxu0 0.0
        %1697 = vmatpush1.msra.mxu0 0.0
        %1698 = vmatprep.subr.mxu0 0.0
        %1699 = vmatpush1.msra.mxu0 0.0
        %1700 = vmatprep.subr.mxu0 0.0
        %1701 = vmatpush1.msra.mxu0 0.0
        %1702 = vmatprep.subr.mxu0 0.0
        %1703 = vmatpush1.msra.mxu0 0.0
        %1704 = vmatprep.subr.mxu0 0.0
        %1705 = vmatpush1.msra.mxu0 0.0
        %1706 = vmatprep.subr.mxu0 0.0
        %1707 = vmatpush1.msra.mxu0 0.0
        %1708 = vmatprep.subr.mxu0 0.0
        %1709 = vmatpush1.msra.mxu0 0.0
        %1710 = vmatprep.subr.mxu0 0.0
        %1711 = vmatpush1.msra.mxu0 0.0
        %1712 = vmatprep.subr.mxu0 0.0
        %1713 = vmatpush1.msra.mxu0 0.0
        %1714 = vmatprep.subr.mxu0 0.0
        %1715 = vmatpush1.msra.mxu0 0.0
        %1716 = vmatprep.subr.mxu0 0.0
        %1717 = vmatpush1.msra.mxu0 0.0
        %1718 = vmatprep.subr.mxu0 0.0
        %1719 = vmatpush1.msra.mxu0 0.0
        %1720 = vmatprep.subr.mxu0 0.0
        %1721 = vmatpush1.msra.mxu0 0.0
        %1722 = vmatprep.subr.mxu0 0.0
        %1723 = vmatpush1.msra.mxu0 0.0
        %1724 = vmatprep.subr.mxu0 0.0
        %1725 = vmatpush1.msra.mxu0 0.0
        %1726 = vmatprep.subr.mxu0 0.0
        %1727 = vmatpush1.msra.mxu0 0.0
        %1728 = vmatprep.subr.mxu0 0.0
        %1729 = vmatpush1.msra.mxu0 0.0
        %1730 = vmatprep.subr.mxu0 0.0
        %1731 = vmatpush1.msra.mxu0 0.0
        %1732 = vmatprep.subr.mxu0 0.0
        %1733 = vmatpush1.msra.mxu0 0.0
        %1734 = vmatprep.subr.mxu0 0.0
        %1735 = vmatpush1.msra.mxu0 0.0
        %1736 = vmatprep.mubr.f32.mxu0 0.0
        %1737 = vmatmul.mubr.f32.gmra.mrb[0].mxu0 %v1670
        %v1738 = vpop.f32.mrb[0].mxu0
        %v1739 = vadd.f32 %v1667, %v1738
        %v1740 = vpop.f32.mrb[0].mxu0
        %1741 = vdwg.mxu0
        %v1742 = vmax.f32 %v1739, 0.0
        %v1744 = vlaneseq
        %v1745 = vshrl.u32 %v1744, 7
        %v1746 = vsub.s32 0, %v1745
        %v1747 = vrot.slane %v994, %v1746
        %v1749 = vmul.f32 %v1742, %v1747
        %v1750 = vsel %vm362, %v1749, 0.0
        %1751 = vadd.xlane.f32.xlu0 %v1750
        %v1752 = vpop.xlane.xlu0 %1751
        %v1754 = vlaneseq
        %v1755 = vshrl.u32 %v1754, 7
        %v1756 = vsub.s32 0, %v1755
        %v1757 = vrot.slane %v996, %v1756
        %v1759 = vadd.f32 %v1752, %v1757
        %v1760 = vsub.f32 %v1759, %v350
        %v1761 = vmul.f32 %v1760, 0.25
        %1763 = vset.pattern.permute.xlu0 0
        %1764 = vperm.xlu0 %1763, %v1761
        %v1765 = vpop.permute.xlu0 %1764
        %v1767 = vmul.f32 %v1765, %v1742
        %v1768 = vsel %vm362, %v1767, 0.0
        %v1769 = vrot.slane %v1768, 4
        %v1770 = vadd.f32 %v1768, %v1769
        %v1771 = vrot.slane %v1770, 2
        %v1772 = vadd.f32 %v1770, %v1771
        %v1773 = vrot.slane %v1772, 1
        %v1774 = vadd.f32 %v1772, %v1773
        %v1775 = vsel %vm550, %v1761, 0.0
        %v1776 = vrot.slane %v1775, 4
        %v1777 = vadd.f32 %v1775, %v1776
        %v1778 = vrot.slane %v1777, 2
        %v1779 = vadd.f32 %v1777, %v1778
        %v1780 = vrot.slane %v1779, 1
        %v1781 = vadd.f32 %v1779, %v1780
        %v1782 = vmul.f32 %v1765, %v1747
        %vm1783 = vcmp.gt.f32.partialorder %v1739, 0.0
        %v1784 = vsel %vm1783, %v1782, 0.0
        %1785 = vxpose.xlu0.b32.start [1/16] %v1662, 128
        %1786 = vxpose.xlu0.b32.cont [2/16] 0.0, 128
        %1787 = vxpose.xlu0.b32.cont [3/16] 0.0, 128
        %1788 = vxpose.xlu0.b32.cont [4/16] 0.0, 128
        %1789 = vxpose.xlu0.b32.cont [5/16] 0.0, 128
        %1790 = vxpose.xlu0.b32.cont [6/16] 0.0, 128
        %1791 = vxpose.xlu0.b32.cont [7/16] 0.0, 128
        %1792 = vxpose.xlu0.b32.cont [8/16] 0.0, 128
        %1793 = vxpose.xlu0.b32.cont [9/16] 0.0, 128
        %1794 = vxpose.xlu0.b32.cont [10/16] 0.0, 128
        %1795 = vxpose.xlu0.b32.cont [11/16] 0.0, 128
        %1796 = vxpose.xlu0.b32.cont [12/16] 0.0, 128
        %1797 = vxpose.xlu0.b32.cont [13/16] 0.0, 128
        %1798 = vxpose.xlu0.b32.cont [14/16] 0.0, 128
        %1799 = vxpose.xlu0.b32.cont [15/16] 0.0, 128
        %1800 = vxpose.xlu0.b32.end [16/16] 0.0, 128
        %v1801 = vpop.trf.xlu0
        %v1802 = vpop.trf.xlu0
        %v1803 = vpop.trf.xlu0
        %v1804 = vpop.trf.xlu0
        %v1805 = vpop.trf.xlu0
        %v1806 = vpop.trf.xlu0
        %v1807 = vpop.trf.xlu0
        %v1808 = vpop.trf.xlu0
        %v1809 = vpop.trf.xlu0
        %v1810 = vpop.trf.xlu0
        %v1811 = vpop.trf.xlu0
        %v1812 = vpop.trf.xlu0
        %v1813 = vpop.trf.xlu0
        %v1814 = vpop.trf.xlu0
        %v1815 = vpop.trf.xlu0
        %v1816 = vpop.trf.xlu0
        %v1818 = vsel %vm593, %v1801, 0
        %v1821 = vsel %vm593, %v1802, 0
        %v1824 = vsel %vm593, %v1803, 0
        %v1827 = vsel %vm593, %v1804, 0
        %v1830 = vsel %vm593, %v1805, 0
        %v1833 = vsel %vm593, %v1806, 0
        %v1836 = vsel %vm593, %v1807, 0
        %v1839 = vsel %vm593, %v1808, 0
        %1841 = vmatprep.subr.mxu0 0.0
        %1842 = vmatpush1.msra.mxu0 %v1784
        %1843 = vmatprep.subr.mxu0 0.0
        %1844 = vmatpush1.msra.mxu0 0.0
        %1845 = vmatprep.subr.mxu0 0.0
        %1846 = vmatpush1.msra.mxu0 0.0
        %1847 = vmatprep.subr.mxu0 0.0
        %1848 = vmatpush1.msra.mxu0 0.0
        %1849 = vmatprep.subr.mxu0 0.0
        %1850 = vmatpush1.msra.mxu0 0.0
        %1851 = vmatprep.subr.mxu0 0.0
        %1852 = vmatpush1.msra.mxu0 0.0
        %1853 = vmatprep.subr.mxu0 0.0
        %1854 = vmatpush1.msra.mxu0 0.0
        %1855 = vmatprep.subr.mxu0 0.0
        %1856 = vmatpush1.msra.mxu0 0.0
        %1857 = vmatprep.subr.mxu0 0.0
        %1858 = vmatpush1.msra.mxu0 0.0
        %1859 = vmatprep.subr.mxu0 0.0
        %1860 = vmatpush1.msra.mxu0 0.0
        %1861 = vmatprep.subr.mxu0 0.0
        %1862 = vmatpush1.msra.mxu0 0.0
        %1863 = vmatprep.subr.mxu0 0.0
        %1864 = vmatpush1.msra.mxu0 0.0
        %1865 = vmatprep.subr.mxu0 0.0
        %1866 = vmatpush1.msra.mxu0 0.0
        %1867 = vmatprep.subr.mxu0 0.0
        %1868 = vmatpush1.msra.mxu0 0.0
        %1869 = vmatprep.subr.mxu0 0.0
        %1870 = vmatpush1.msra.mxu0 0.0
        %1871 = vmatprep.subr.mxu0 0.0
        %1872 = vmatpush1.msra.mxu0 0.0
        %1873 = vmatprep.subr.mxu0 0.0
        %1874 = vmatpush1.msra.mxu0 0.0
        %1875 = vmatprep.subr.mxu0 0.0
        %1876 = vmatpush1.msra.mxu0 0.0
        %1877 = vmatprep.subr.mxu0 0.0
        %1878 = vmatpush1.msra.mxu0 0.0
        %1879 = vmatprep.subr.mxu0 0.0
        %1880 = vmatpush1.msra.mxu0 0.0
        %1881 = vmatprep.subr.mxu0 0.0
        %1882 = vmatpush1.msra.mxu0 0.0
        %1883 = vmatprep.subr.mxu0 0.0
        %1884 = vmatpush1.msra.mxu0 0.0
        %1885 = vmatprep.subr.mxu0 0.0
        %1886 = vmatpush1.msra.mxu0 0.0
        %1887 = vmatprep.subr.mxu0 0.0
        %1888 = vmatpush1.msra.mxu0 0.0
        %1889 = vmatprep.subr.mxu0 0.0
        %1890 = vmatpush1.msra.mxu0 0.0
        %1891 = vmatprep.subr.mxu0 0.0
        %1892 = vmatpush1.msra.mxu0 0.0
        %1893 = vmatprep.subr.mxu0 0.0
        %1894 = vmatpush1.msra.mxu0 0.0
        %1895 = vmatprep.subr.mxu0 0.0
        %1896 = vmatpush1.msra.mxu0 0.0
        %1897 = vmatprep.subr.mxu0 0.0
        %1898 = vmatpush1.msra.mxu0 0.0
        %1899 = vmatprep.subr.mxu0 0.0
        %1900 = vmatpush1.msra.mxu0 0.0
        %1901 = vmatprep.subr.mxu0 0.0
        %1902 = vmatpush1.msra.mxu0 0.0
        %1903 = vmatprep.subr.mxu0 0.0
        %1904 = vmatpush1.msra.mxu0 0.0
        %1905 = vmatprep.mubr.f32.mxu0 0.0
        %1906 = vmatmul.mubr.f32.gmra.mrb[0].mxu0 %v1818
        %v1907 = vpop.f32.mrb[0].mxu0
        %v1908 = vadd.f32 0.0, %v1907
        %v1909 = vpop.f32.mrb[0].mxu0
        %1910 = vmatprep.mubr.f32.mxu0 0.0
        %1911 = vmatmul.mubr.f32.gmra.mrb[0].mxu0 %v1821
        %v1912 = vpop.f32.mrb[0].mxu0
        %v1913 = vadd.f32 0.0, %v1912
        %v1914 = vpop.f32.mrb[0].mxu0
        %1915 = vmatprep.mubr.f32.mxu0 0.0
        %1916 = vmatmul.mubr.f32.gmra.mrb[0].mxu0 %v1824
        %v1917 = vpop.f32.mrb[0].mxu0
        %v1918 = vadd.f32 0.0, %v1917
        %v1919 = vpop.f32.mrb[0].mxu0
        %1920 = vmatprep.mubr.f32.mxu0 0.0
        %1921 = vmatmul.mubr.f32.gmra.mrb[0].mxu0 %v1827
        %v1922 = vpop.f32.mrb[0].mxu0
        %v1923 = vadd.f32 0.0, %v1922
        %v1924 = vpop.f32.mrb[0].mxu0
        %1925 = vmatprep.mubr.f32.mxu0 0.0
        %1926 = vmatmul.mubr.f32.gmra.mrb[0].mxu0 %v1830
        %v1927 = vpop.f32.mrb[0].mxu0
        %v1928 = vadd.f32 0.0, %v1927
        %v1929 = vpop.f32.mrb[0].mxu0
        %1930 = vmatprep.mubr.f32.mxu0 0.0
        %1931 = vmatmul.mubr.f32.gmra.mrb[0].mxu0 %v1833
        %v1932 = vpop.f32.mrb[0].mxu0
        %v1933 = vadd.f32 0.0, %v1932
        %v1934 = vpop.f32.mrb[0].mxu0
        %1935 = vmatprep.mubr.f32.mxu0 0.0
        %1936 = vmatmul.mubr.f32.gmra.mrb[0].mxu0 %v1836
        %v1937 = vpop.f32.mrb[0].mxu0
        %v1938 = vadd.f32 0.0, %v1937
        %v1939 = vpop.f32.mrb[0].mxu0
        %1940 = vmatprep.mubr.f32.mxu0 0.0
        %1941 = vmatmul.mubr.f32.gmra.mrb[0].mxu0 %v1839
        %v1942 = vpop.f32.mrb[0].mxu0
        %v1943 = vadd.f32 0.0, %v1942
        %v1944 = vpop.f32.mrb[0].mxu0
        %1945 = vdwg.mxu0
        %v1946 = vsel %vm362, %v1784, 0.0
        %v1947 = vrot.slane %v1946, 4
        %v1948 = vadd.f32 %v1946, %v1947
        %v1949 = vrot.slane %v1948, 2
        %v1950 = vadd.f32 %v1948, %v1949
        %v1951 = vrot.slane %v1950, 1
        %v1952 = vadd.f32 %v1950, %v1951
        %v1954 = vsel %vm362, %v1784, 0
        %v1957 = vsel %vm362, %v983, 0
        %v1960 = vsel %vm362, %v984, 0
        %v1963 = vsel %vm362, %v985, 0
        %v1966 = vsel %vm362, %v986, 0
        %v1969 = vsel %vm362, %v987, 0
        %v1972 = vsel %vm362, %v988, 0
        %v1975 = vsel %vm362, %v989, 0
        %v1978 = vsel %vm362, %v990, 0
        %1980 = vmatprep.subr.mxu0 0.0
        %1981 = vmatpush1.xpose.msra.mxu0 %v1957
        %1982 = vmatprep.subr.mxu0 0.0
        %1983 = vmatpush1.xpose.msra.mxu0 %v1960
        %1984 = vmatprep.subr.mxu0 0.0
        %1985 = vmatpush1.xpose.msra.mxu0 %v1963
        %1986 = vmatprep.subr.mxu0 0.0
        %1987 = vmatpush1.xpose.msra.mxu0 %v1966
        %1988 = vmatprep.subr.mxu0 0.0
        %1989 = vmatpush1.xpose.msra.mxu0 %v1969
        %1990 = vmatprep.subr.mxu0 0.0
        %1991 = vmatpush1.xpose.msra.mxu0 %v1972
        %1992 = vmatprep.subr.mxu0 0.0
        %1993 = vmatpush1.xpose.msra.mxu0 %v1975
        %1994 = vmatprep.subr.mxu0 0.0
        %1995 = vmatpush1.xpose.msra.mxu0 %v1978
        %1996 = vmatprep.subr.mxu0 0.0
        %1997 = vmatpush1.xpose.msra.mxu0 0.0
        %1998 = vmatprep.subr.mxu0 0.0
        %1999 = vmatpush1.xpose.msra.mxu0 0.0
        %2000 = vmatprep.subr.mxu0 0.0
        %2001 = vmatpush1.xpose.msra.mxu0 0.0
        %2002 = vmatprep.subr.mxu0 0.0
        %2003 = vmatpush1.xpose.msra.mxu0 0.0
        %2004 = vmatprep.subr.mxu0 0.0
        %2005 = vmatpush1.xpose.msra.mxu0 0.0
        %2006 = vmatprep.subr.mxu0 0.0
        %2007 = vmatpush1.xpose.msra.mxu0 0.0
        %2008 = vmatprep.subr.mxu0 0.0
        %2009 = vmatpush1.xpose.msra.mxu0 0.0
        %2010 = vmatprep.subr.mxu0 0.0
        %2011 = vmatpush1.xpose.msra.mxu0 0.0
        %2012 = vmatprep.subr.mxu0 0.0
        %2013 = vmatpush1.xpose.msra.mxu0 0.0
        %2014 = vmatprep.subr.mxu0 0.0
        %2015 = vmatpush1.xpose.msra.mxu0 0.0
        %2016 = vmatprep.subr.mxu0 0.0
        %2017 = vmatpush1.xpose.msra.mxu0 0.0
        %2018 = vmatprep.subr.mxu0 0.0
        %2019 = vmatpush1.xpose.msra.mxu0 0.0
        %2020 = vmatprep.subr.mxu0 0.0
        %2021 = vmatpush1.xpose.msra.mxu0 0.0
        %2022 = vmatprep.subr.mxu0 0.0
        %2023 = vmatpush1.xpose.msra.mxu0 0.0
        %2024 = vmatprep.subr.mxu0 0.0
        %2025 = vmatpush1.xpose.msra.mxu0 0.0
        %2026 = vmatprep.subr.mxu0 0.0
        %2027 = vmatpush1.xpose.msra.mxu0 0.0
        %2028 = vmatprep.subr.mxu0 0.0
        %2029 = vmatpush1.xpose.msra.mxu0 0.0
        %2030 = vmatprep.subr.mxu0 0.0
        %2031 = vmatpush1.xpose.msra.mxu0 0.0
        %2032 = vmatprep.subr.mxu0 0.0
        %2033 = vmatpush1.xpose.msra.mxu0 0.0
        %2034 = vmatprep.subr.mxu0 0.0
        %2035 = vmatpush1.xpose.msra.mxu0 0.0
        %2036 = vmatprep.subr.mxu0 0.0
        %2037 = vmatpush1.xpose.msra.mxu0 0.0
        %2038 = vmatprep.subr.mxu0 0.0
        %2039 = vmatpush1.xpose.msra.mxu0 0.0
        %2040 = vmatprep.subr.mxu0 0.0
        %2041 = vmatpush1.xpose.msra.mxu0 0.0
        %2042 = vmatprep.subr.mxu0 0.0
        %2043 = vmatpush1.xpose.msra.mxu0 0.0
        %2044 = vmatprep.mubr.f32.mxu0 0.0
        %2045 = vmatmul.mubr.f32.gmra.mrb[0].mxu0 %v1954
        %v2046 = vpop.f32.mrb[0].mxu0
        %v2047 = vadd.f32 0.0, %v2046
        %v2048 = vpop.f32.mrb[0].mxu0
        %2049 = vdwg.mxu0
        %vm2050 = vcmp.gt.f32.partialorder %v1659, 0.0
        %v2051 = vsel %vm2050, %v2047, 0.0
        %2052 = vmatprep.subr.mxu0 0.0
        %2053 = vmatpush1.msra.mxu0 %v2051
        %2054 = vmatprep.subr.mxu0 0.0
        %2055 = vmatpush1.msra.mxu0 0.0
        %2056 = vmatprep.subr.mxu0 0.0
        %2057 = vmatpush1.msra.mxu0 0.0
        %2058 = vmatprep.subr.mxu0 0.0
        %2059 = vmatpush1.msra.mxu0 0.0
        %2060 = vmatprep.subr.mxu0 0.0
        %2061 = vmatpush1.msra.mxu0 0.0
        %2062 = vmatprep.subr.mxu0 0.0
        %2063 = vmatpush1.msra.mxu0 0.0
        %2064 = vmatprep.subr.mxu0 0.0
        %2065 = vmatpush1.msra.mxu0 0.0
        %2066 = vmatprep.subr.mxu0 0.0
        %2067 = vmatpush1.msra.mxu0 0.0
        %2068 = vmatprep.subr.mxu0 0.0
        %2069 = vmatpush1.msra.mxu0 0.0
        %2070 = vmatprep.subr.mxu0 0.0
        %2071 = vmatpush1.msra.mxu0 0.0
        %2072 = vmatprep.subr.mxu0 0.0
        %2073 = vmatpush1.msra.mxu0 0.0
        %2074 = vmatprep.subr.mxu0 0.0
        %2075 = vmatpush1.msra.mxu0 0.0
        %2076 = vmatprep.subr.mxu0 0.0
        %2077 = vmatpush1.msra.mxu0 0.0
        %2078 = vmatprep.subr.mxu0 0.0
        %2079 = vmatpush1.msra.mxu0 0.0
        %2080 = vmatprep.subr.mxu0 0.0
        %2081 = vmatpush1.msra.mxu0 0.0
        %2082 = vmatprep.subr.mxu0 0.0
        %2083 = vmatpush1.msra.mxu0 0.0
        %2084 = vmatprep.subr.mxu0 0.0
        %2085 = vmatpush1.msra.mxu0 0.0
        %2086 = vmatprep.subr.mxu0 0.0
        %2087 = vmatpush1.msra.mxu0 0.0
        %2088 = vmatprep.subr.mxu0 0.0
        %2089 = vmatpush1.msra.mxu0 0.0
        %2090 = vmatprep.subr.mxu0 0.0
        %2091 = vmatpush1.msra.mxu0 0.0
        %2092 = vmatprep.subr.mxu0 0.0
        %2093 = vmatpush1.msra.mxu0 0.0
        %2094 = vmatprep.subr.mxu0 0.0
        %2095 = vmatpush1.msra.mxu0 0.0
        %2096 = vmatprep.subr.mxu0 0.0
        %2097 = vmatpush1.msra.mxu0 0.0
        %2098 = vmatprep.subr.mxu0 0.0
        %2099 = vmatpush1.msra.mxu0 0.0
        %2100 = vmatprep.subr.mxu0 0.0
        %2101 = vmatpush1.msra.mxu0 0.0
        %2102 = vmatprep.subr.mxu0 0.0
        %2103 = vmatpush1.msra.mxu0 0.0
        %2104 = vmatprep.subr.mxu0 0.0
        %2105 = vmatpush1.msra.mxu0 0.0
        %2106 = vmatprep.subr.mxu0 0.0
        %2107 = vmatpush1.msra.mxu0 0.0
        %2108 = vmatprep.subr.mxu0 0.0
        %2109 = vmatpush1.msra.mxu0 0.0
        %2110 = vmatprep.subr.mxu0 0.0
        %2111 = vmatpush1.msra.mxu0 0.0
        %2112 = vmatprep.subr.mxu0 0.0
        %2113 = vmatpush1.msra.mxu0 0.0
        %2114 = vmatprep.subr.mxu0 0.0
        %2115 = vmatpush1.msra.mxu0 0.0
        %2116 = vmatprep.mubr.f32.mxu0 0.0
        %2117 = vmatmul.mubr.f32.gmra.mrb[0].mxu0 %v862
        %v2118 = vpop.f32.mrb[0].mxu0
        %v2119 = vadd.f32 0.0, %v2118
        %v2120 = vpop.f32.mrb[0].mxu0
        %2121 = vmatprep.mubr.f32.mxu0 0.0
        %2122 = vmatmul.mubr.f32.gmra.mrb[0].mxu0 %v865
        %v2123 = vpop.f32.mrb[0].mxu0
        %v2124 = vadd.f32 0.0, %v2123
        %v2125 = vpop.f32.mrb[0].mxu0
        %2126 = vmatprep.mubr.f32.mxu0 0.0
        %2127 = vmatmul.mubr.f32.gmra.mrb[0].mxu0 %v868
        %v2128 = vpop.f32.mrb[0].mxu0
        %v2129 = vadd.f32 0.0, %v2128
        %v2130 = vpop.f32.mrb[0].mxu0
        %2131 = vmatprep.mubr.f32.mxu0 0.0
        %2132 = vmatmul.mubr.f32.gmra.mrb[0].mxu0 %v871
        %v2133 = vpop.f32.mrb[0].mxu0
        %v2134 = vadd.f32 0.0, %v2133
        %v2135 = vpop.f32.mrb[0].mxu0
        %2136 = vdwg.mxu0
        %v2137 = vsel %vm443, %v2051, 0.0
        %v2138 = vrot.slane %v2137, 4
        %v2139 = vadd.f32 %v2137, %v2138
        %v2140 = vrot.slane %v2139, 2
        %v2141 = vadd.f32 %v2139, %v2140
        %v2142 = vrot.slane %v2141, 1
        %v2143 = vadd.f32 %v2141, %v2142
        %v2144 = vmul.f32 %v2119, 0.01
        %v2145 = vmul.f32 %v2124, 0.01
        %v2146 = vmul.f32 %v2129, 0.01
        %v2147 = vmul.f32 %v2134, 0.01
        %v2148 = vsub.f32 %v969, %v2144
        %v2149 = vsub.f32 %v970, %v2145
        %v2150 = vsub.f32 %v971, %v2146
        %v2151 = vsub.f32 %v972, %v2147
        %v2152 = vmul.f32 %v2143, 0.01
        %v2153 = vsub.f32 %v974, %v2152
        %v2154 = vmul.f32 %v1908, 0.01
        %v2155 = vmul.f32 %v1913, 0.01
        %v2156 = vmul.f32 %v1918, 0.01
        %v2157 = vmul.f32 %v1923, 0.01
        %v2158 = vmul.f32 %v1928, 0.01
        %v2159 = vmul.f32 %v1933, 0.01
        %v2160 = vmul.f32 %v1938, 0.01
        %v2161 = vmul.f32 %v1943, 0.01
        %v2162 = vsub.f32 %v983, %v2154
        %v2163 = vsub.f32 %v984, %v2155
        %v2164 = vsub.f32 %v985, %v2156
        %v2165 = vsub.f32 %v986, %v2157
        %v2166 = vsub.f32 %v987, %v2158
        %v2167 = vsub.f32 %v988, %v2159
        %v2168 = vsub.f32 %v989, %v2160
        %v2169 = vsub.f32 %v990, %v2161
        %v2170 = vmul.f32 %v1952, 0.01
        %v2171 = vsub.f32 %v992, %v2170
        %v2172 = vmul.f32 %v1774, 0.01
        %v2173 = vsub.f32 %v994, %v2172
        %v2174 = vmul.f32 %v1781, 0.01
        %v2175 = vsub.f32 %v996, %v2174
        %v2177 = vlaneseq
        %v2178 = vshrl.u32 %v2177, 7
        %v2179 = vsub.s32 0, %v2178
        %v2180 = vrot.slane %v1563, %v2179
        %2182 = vmatprep.subr.mxu0 0.0
        %2183 = vmatpush1.msra.mxu0 %v1558
        %2184 = vmatprep.subr.mxu0 0.0
        %2185 = vmatpush1.msra.mxu0 %v1559
        %2186 = vmatprep.subr.mxu0 0.0
        %2187 = vmatpush1.msra.mxu0 %v1560
        %2188 = vmatprep.subr.mxu0 0.0
        %2189 = vmatpush1.msra.mxu0 %v1561
        %2190 = vmatprep.subr.mxu0 0.0
        %2191 = vmatpush1.msra.mxu0 0.0
        %2192 = vmatprep.subr.mxu0 0.0
        %2193 = vmatpush1.msra.mxu0 0.0
        %2194 = vmatprep.subr.mxu0 0.0
        %2195 = vmatpush1.msra.mxu0 0.0
        %2196 = vmatprep.subr.mxu0 0.0
        %2197 = vmatpush1.msra.mxu0 0.0
        %2198 = vmatprep.subr.mxu0 0.0
        %2199 = vmatpush1.msra.mxu0 0.0
        %2200 = vmatprep.subr.mxu0 0.0
        %2201 = vmatpush1.msra.mxu0 0.0
        %2202 = vmatprep.subr.mxu0 0.0
        %2203 = vmatpush1.msra.mxu0 0.0
        %2204 = vmatprep.subr.mxu0 0.0
        %2205 = vmatpush1.msra.mxu0 0.0
        %2206 = vmatprep.subr.mxu0 0.0
        %2207 = vmatpush1.msra.mxu0 0.0
        %2208 = vmatprep.subr.mxu0 0.0
        %2209 = vmatpush1.msra.mxu0 0.0
        %2210 = vmatprep.subr.mxu0 0.0
        %2211 = vmatpush1.msra.mxu0 0.0
        %2212 = vmatprep.subr.mxu0 0.0
        %2213 = vmatpush1.msra.mxu0 0.0
        %2214 = vmatprep.subr.mxu0 0.0
        %2215 = vmatpush1.msra.mxu0 0.0
        %2216 = vmatprep.subr.mxu0 0.0
        %2217 = vmatpush1.msra.mxu0 0.0
        %2218 = vmatprep.subr.mxu0 0.0
        %2219 = vmatpush1.msra.mxu0 0.0
        %2220 = vmatprep.subr.mxu0 0.0
        %2221 = vmatpush1.msra.mxu0 0.0
        %2222 = vmatprep.subr.mxu0 0.0
        %2223 = vmatpush1.msra.mxu0 0.0
        %2224 = vmatprep.subr.mxu0 0.0
        %2225 = vmatpush1.msra.mxu0 0.0
        %2226 = vmatprep.subr.mxu0 0.0
        %2227 = vmatpush1.msra.mxu0 0.0
        %2228 = vmatprep.subr.mxu0 0.0
        %2229 = vmatpush1.msra.mxu0 0.0
        %2230 = vmatprep.subr.mxu0 0.0
        %2231 = vmatpush1.msra.mxu0 0.0
        %2232 = vmatprep.subr.mxu0 0.0
        %2233 = vmatpush1.msra.mxu0 0.0
        %2234 = vmatprep.subr.mxu0 0.0
        %2235 = vmatpush1.msra.mxu0 0.0
        %2236 = vmatprep.subr.mxu0 0.0
        %2237 = vmatpush1.msra.mxu0 0.0
        %2238 = vmatprep.subr.mxu0 0.0
        %2239 = vmatpush1.msra.mxu0 0.0
        %2240 = vmatprep.subr.mxu0 0.0
        %2241 = vmatpush1.msra.mxu0 0.0
        %2242 = vmatprep.subr.mxu0 0.0
        %2243 = vmatpush1.msra.mxu0 0.0
        %2244 = vmatprep.subr.mxu0 0.0
        %2245 = vmatpush1.msra.mxu0 0.0
        %2246 = vmatprep.mubr.f32.mxu0 0.0
        %2247 = vmatmul.mubr.f32.gmra.mrb[0].mxu0 %v998
        %v2248 = vpop.f32.mrb[0].mxu0
        %v2249 = vadd.f32 %v2180, %v2248
        %v2250 = vpop.f32.mrb[0].mxu0
        %2251 = vdwg.mxu0
        %v2252 = vmax.f32 %v2249, 0.0
        %v2254 = vlaneseq
        %v2255 = vshrl.u32 %v2254, 7
        %v2256 = vsub.s32 0, %v2255
        %v2257 = vrot.slane %v1581, %v2256
        %v2260 = vsel %vm443, %v2252, 0
        %2262 = vmatprep.subr.mxu0 0.0
        %2263 = vmatpush1.msra.mxu0 %v1572
        %2264 = vmatprep.subr.mxu0 0.0
        %2265 = vmatpush1.msra.mxu0 %v1573
        %2266 = vmatprep.subr.mxu0 0.0
        %2267 = vmatpush1.msra.mxu0 %v1574
        %2268 = vmatprep.subr.mxu0 0.0
        %2269 = vmatpush1.msra.mxu0 %v1575
        %2270 = vmatprep.subr.mxu0 0.0
        %2271 = vmatpush1.msra.mxu0 %v1576
        %2272 = vmatprep.subr.mxu0 0.0
        %2273 = vmatpush1.msra.mxu0 %v1577
        %2274 = vmatprep.subr.mxu0 0.0
        %2275 = vmatpush1.msra.mxu0 %v1578
        %2276 = vmatprep.subr.mxu0 0.0
        %2277 = vmatpush1.msra.mxu0 %v1579
        %2278 = vmatprep.subr.mxu0 0.0
        %2279 = vmatpush1.msra.mxu0 0.0
        %2280 = vmatprep.subr.mxu0 0.0
        %2281 = vmatpush1.msra.mxu0 0.0
        %2282 = vmatprep.subr.mxu0 0.0
        %2283 = vmatpush1.msra.mxu0 0.0
        %2284 = vmatprep.subr.mxu0 0.0
        %2285 = vmatpush1.msra.mxu0 0.0
        %2286 = vmatprep.subr.mxu0 0.0
        %2287 = vmatpush1.msra.mxu0 0.0
        %2288 = vmatprep.subr.mxu0 0.0
        %2289 = vmatpush1.msra.mxu0 0.0
        %2290 = vmatprep.subr.mxu0 0.0
        %2291 = vmatpush1.msra.mxu0 0.0
        %2292 = vmatprep.subr.mxu0 0.0
        %2293 = vmatpush1.msra.mxu0 0.0
        %2294 = vmatprep.subr.mxu0 0.0
        %2295 = vmatpush1.msra.mxu0 0.0
        %2296 = vmatprep.subr.mxu0 0.0
        %2297 = vmatpush1.msra.mxu0 0.0
        %2298 = vmatprep.subr.mxu0 0.0
        %2299 = vmatpush1.msra.mxu0 0.0
        %2300 = vmatprep.subr.mxu0 0.0
        %2301 = vmatpush1.msra.mxu0 0.0
        %2302 = vmatprep.subr.mxu0 0.0
        %2303 = vmatpush1.msra.mxu0 0.0
        %2304 = vmatprep.subr.mxu0 0.0
        %2305 = vmatpush1.msra.mxu0 0.0
        %2306 = vmatprep.subr.mxu0 0.0
        %2307 = vmatpush1.msra.mxu0 0.0
        %2308 = vmatprep.subr.mxu0 0.0
        %2309 = vmatpush1.msra.mxu0 0.0
        %2310 = vmatprep.subr.mxu0 0.0
        %2311 = vmatpush1.msra.mxu0 0.0
        %2312 = vmatprep.subr.mxu0 0.0
        %2313 = vmatpush1.msra.mxu0 0.0
        %2314 = vmatprep.subr.mxu0 0.0
        %2315 = vmatpush1.msra.mxu0 0.0
        %2316 = vmatprep.subr.mxu0 0.0
        %2317 = vmatpush1.msra.mxu0 0.0
        %2318 = vmatprep.subr.mxu0 0.0
        %2319 = vmatpush1.msra.mxu0 0.0
        %2320 = vmatprep.subr.mxu0 0.0
        %2321 = vmatpush1.msra.mxu0 0.0
        %2322 = vmatprep.subr.mxu0 0.0
        %2323 = vmatpush1.msra.mxu0 0.0
        %2324 = vmatprep.subr.mxu0 0.0
        %2325 = vmatpush1.msra.mxu0 0.0
        %2326 = vmatprep.mubr.f32.mxu0 0.0
        %2327 = vmatmul.mubr.f32.gmra.mrb[0].mxu0 %v2260
        %v2328 = vpop.f32.mrb[0].mxu0
        %v2329 = vadd.f32 %v2257, %v2328
        %v2330 = vpop.f32.mrb[0].mxu0
        %2331 = vdwg.mxu0
        %v2332 = vmax.f32 %v2329, 0.0
        %v2334 = vlaneseq
        %v2335 = vshrl.u32 %v2334, 7
        %v2336 = vsub.s32 0, %v2335
        %v2337 = vrot.slane %v1583, %v2336
        %v2339 = vmul.f32 %v2332, %v2337
        %v2340 = vsel %vm362, %v2339, 0.0
        %2341 = vadd.xlane.f32.xlu0 %v2340
        %v2342 = vpop.xlane.xlu0 %2341
        %v2344 = vlaneseq
        %v2345 = vshrl.u32 %v2344, 7
        %v2346 = vsub.s32 0, %v2345
        %v2347 = vrot.slane %v1585, %v2346
        %v2349 = vadd.f32 %v2342, %v2347
        %v2350 = vsub.f32 %v2349, %v355
        %v2351 = vmul.f32 %v2350, 0.25
        %2353 = vset.pattern.permute.xlu0 0
        %2354 = vperm.xlu0 %2353, %v2351
        %v2355 = vpop.permute.xlu0 %2354
        %v2357 = vmul.f32 %v2355, %v2332
        %v2358 = vsel %vm362, %v2357, 0.0
        %v2359 = vrot.slane %v2358, 4
        %v2360 = vadd.f32 %v2358, %v2359
        %v2361 = vrot.slane %v2360, 2
        %v2362 = vadd.f32 %v2360, %v2361
        %v2363 = vrot.slane %v2362, 1
        %v2364 = vadd.f32 %v2362, %v2363
        %v2365 = vsel %vm550, %v2351, 0.0
        %v2366 = vrot.slane %v2365, 4
        %v2367 = vadd.f32 %v2365, %v2366
        %v2368 = vrot.slane %v2367, 2
        %v2369 = vadd.f32 %v2367, %v2368
        %v2370 = vrot.slane %v2369, 1
        %v2371 = vadd.f32 %v2369, %v2370
        %v2372 = vmul.f32 %v2355, %v2337
        %vm2373 = vcmp.gt.f32.partialorder %v2329, 0.0
        %v2374 = vsel %vm2373, %v2372, 0.0
        %2375 = vxpose.xlu0.b32.start [1/16] %v2252, 128
        %2376 = vxpose.xlu0.b32.cont [2/16] 0.0, 128
        %2377 = vxpose.xlu0.b32.cont [3/16] 0.0, 128
        %2378 = vxpose.xlu0.b32.cont [4/16] 0.0, 128
        %2379 = vxpose.xlu0.b32.cont [5/16] 0.0, 128
        %2380 = vxpose.xlu0.b32.cont [6/16] 0.0, 128
        %2381 = vxpose.xlu0.b32.cont [7/16] 0.0, 128
        %2382 = vxpose.xlu0.b32.cont [8/16] 0.0, 128
        %2383 = vxpose.xlu0.b32.cont [9/16] 0.0, 128
        %2384 = vxpose.xlu0.b32.cont [10/16] 0.0, 128
        %2385 = vxpose.xlu0.b32.cont [11/16] 0.0, 128
        %2386 = vxpose.xlu0.b32.cont [12/16] 0.0, 128
        %2387 = vxpose.xlu0.b32.cont [13/16] 0.0, 128
        %2388 = vxpose.xlu0.b32.cont [14/16] 0.0, 128
        %2389 = vxpose.xlu0.b32.cont [15/16] 0.0, 128
        %2390 = vxpose.xlu0.b32.end [16/16] 0.0, 128
        %v2391 = vpop.trf.xlu0
        %v2392 = vpop.trf.xlu0
        %v2393 = vpop.trf.xlu0
        %v2394 = vpop.trf.xlu0
        %v2395 = vpop.trf.xlu0
        %v2396 = vpop.trf.xlu0
        %v2397 = vpop.trf.xlu0
        %v2398 = vpop.trf.xlu0
        %v2399 = vpop.trf.xlu0
        %v2400 = vpop.trf.xlu0
        %v2401 = vpop.trf.xlu0
        %v2402 = vpop.trf.xlu0
        %v2403 = vpop.trf.xlu0
        %v2404 = vpop.trf.xlu0
        %v2405 = vpop.trf.xlu0
        %v2406 = vpop.trf.xlu0
        %v2408 = vsel %vm593, %v2391, 0
        %v2411 = vsel %vm593, %v2392, 0
        %v2414 = vsel %vm593, %v2393, 0
        %v2417 = vsel %vm593, %v2394, 0
        %v2420 = vsel %vm593, %v2395, 0
        %v2423 = vsel %vm593, %v2396, 0
        %v2426 = vsel %vm593, %v2397, 0
        %v2429 = vsel %vm593, %v2398, 0
        %2431 = vmatprep.subr.mxu0 0.0
        %2432 = vmatpush1.msra.mxu0 %v2374
        %2433 = vmatprep.subr.mxu0 0.0
        %2434 = vmatpush1.msra.mxu0 0.0
        %2435 = vmatprep.subr.mxu0 0.0
        %2436 = vmatpush1.msra.mxu0 0.0
        %2437 = vmatprep.subr.mxu0 0.0
        %2438 = vmatpush1.msra.mxu0 0.0
        %2439 = vmatprep.subr.mxu0 0.0
        %2440 = vmatpush1.msra.mxu0 0.0
        %2441 = vmatprep.subr.mxu0 0.0
        %2442 = vmatpush1.msra.mxu0 0.0
        %2443 = vmatprep.subr.mxu0 0.0
        %2444 = vmatpush1.msra.mxu0 0.0
        %2445 = vmatprep.subr.mxu0 0.0
        %2446 = vmatpush1.msra.mxu0 0.0
        %2447 = vmatprep.subr.mxu0 0.0
        %2448 = vmatpush1.msra.mxu0 0.0
        %2449 = vmatprep.subr.mxu0 0.0
        %2450 = vmatpush1.msra.mxu0 0.0
        %2451 = vmatprep.subr.mxu0 0.0
        %2452 = vmatpush1.msra.mxu0 0.0
        %2453 = vmatprep.subr.mxu0 0.0
        %2454 = vmatpush1.msra.mxu0 0.0
        %2455 = vmatprep.subr.mxu0 0.0
        %2456 = vmatpush1.msra.mxu0 0.0
        %2457 = vmatprep.subr.mxu0 0.0
        %2458 = vmatpush1.msra.mxu0 0.0
        %2459 = vmatprep.subr.mxu0 0.0
        %2460 = vmatpush1.msra.mxu0 0.0
        %2461 = vmatprep.subr.mxu0 0.0
        %2462 = vmatpush1.msra.mxu0 0.0
        %2463 = vmatprep.subr.mxu0 0.0
        %2464 = vmatpush1.msra.mxu0 0.0
        %2465 = vmatprep.subr.mxu0 0.0
        %2466 = vmatpush1.msra.mxu0 0.0
        %2467 = vmatprep.subr.mxu0 0.0
        %2468 = vmatpush1.msra.mxu0 0.0
        %2469 = vmatprep.subr.mxu0 0.0
        %2470 = vmatpush1.msra.mxu0 0.0
        %2471 = vmatprep.subr.mxu0 0.0
        %2472 = vmatpush1.msra.mxu0 0.0
        %2473 = vmatprep.subr.mxu0 0.0
        %2474 = vmatpush1.msra.mxu0 0.0
        %2475 = vmatprep.subr.mxu0 0.0
        %2476 = vmatpush1.msra.mxu0 0.0
        %2477 = vmatprep.subr.mxu0 0.0
        %2478 = vmatpush1.msra.mxu0 0.0
        %2479 = vmatprep.subr.mxu0 0.0
        %2480 = vmatpush1.msra.mxu0 0.0
        %2481 = vmatprep.subr.mxu0 0.0
        %2482 = vmatpush1.msra.mxu0 0.0
        %2483 = vmatprep.subr.mxu0 0.0
        %2484 = vmatpush1.msra.mxu0 0.0
        %2485 = vmatprep.subr.mxu0 0.0
        %2486 = vmatpush1.msra.mxu0 0.0
        %2487 = vmatprep.subr.mxu0 0.0
        %2488 = vmatpush1.msra.mxu0 0.0
        %2489 = vmatprep.subr.mxu0 0.0
        %2490 = vmatpush1.msra.mxu0 0.0
        %2491 = vmatprep.subr.mxu0 0.0
        %2492 = vmatpush1.msra.mxu0 0.0
        %2493 = vmatprep.subr.mxu0 0.0
        %2494 = vmatpush1.msra.mxu0 0.0
        %2495 = vmatprep.mubr.f32.mxu0 0.0
        %2496 = vmatmul.mubr.f32.gmra.mrb[0].mxu0 %v2408
        %v2497 = vpop.f32.mrb[0].mxu0
        %v2498 = vadd.f32 0.0, %v2497
        %v2499 = vpop.f32.mrb[0].mxu0
        %2500 = vmatprep.mubr.f32.mxu0 0.0
        %2501 = vmatmul.mubr.f32.gmra.mrb[0].mxu0 %v2411
        %v2502 = vpop.f32.mrb[0].mxu0
        %v2503 = vadd.f32 0.0, %v2502
        %v2504 = vpop.f32.mrb[0].mxu0
        %2505 = vmatprep.mubr.f32.mxu0 0.0
        %2506 = vmatmul.mubr.f32.gmra.mrb[0].mxu0 %v2414
        %v2507 = vpop.f32.mrb[0].mxu0
        %v2508 = vadd.f32 0.0, %v2507
        %v2509 = vpop.f32.mrb[0].mxu0
        %2510 = vmatprep.mubr.f32.mxu0 0.0
        %2511 = vmatmul.mubr.f32.gmra.mrb[0].mxu0 %v2417
        %v2512 = vpop.f32.mrb[0].mxu0
        %v2513 = vadd.f32 0.0, %v2512
        %v2514 = vpop.f32.mrb[0].mxu0
        %2515 = vmatprep.mubr.f32.mxu0 0.0
        %2516 = vmatmul.mubr.f32.gmra.mrb[0].mxu0 %v2420
        %v2517 = vpop.f32.mrb[0].mxu0
        %v2518 = vadd.f32 0.0, %v2517
        %v2519 = vpop.f32.mrb[0].mxu0
        %2520 = vmatprep.mubr.f32.mxu0 0.0
        %2521 = vmatmul.mubr.f32.gmra.mrb[0].mxu0 %v2423
        %v2522 = vpop.f32.mrb[0].mxu0
        %v2523 = vadd.f32 0.0, %v2522
        %v2524 = vpop.f32.mrb[0].mxu0
        %2525 = vmatprep.mubr.f32.mxu0 0.0
        %2526 = vmatmul.mubr.f32.gmra.mrb[0].mxu0 %v2426
        %v2527 = vpop.f32.mrb[0].mxu0
        %v2528 = vadd.f32 0.0, %v2527
        %v2529 = vpop.f32.mrb[0].mxu0
        %2530 = vmatprep.mubr.f32.mxu0 0.0
        %2531 = vmatmul.mubr.f32.gmra.mrb[0].mxu0 %v2429
        %v2532 = vpop.f32.mrb[0].mxu0
        %v2533 = vadd.f32 0.0, %v2532
        %v2534 = vpop.f32.mrb[0].mxu0
        %2535 = vdwg.mxu0
        %v2536 = vsel %vm362, %v2374, 0.0
        %v2537 = vrot.slane %v2536, 4
        %v2538 = vadd.f32 %v2536, %v2537
        %v2539 = vrot.slane %v2538, 2
        %v2540 = vadd.f32 %v2538, %v2539
        %v2541 = vrot.slane %v2540, 1
        %v2542 = vadd.f32 %v2540, %v2541
        %v2544 = vsel %vm362, %v2374, 0
        %v2547 = vsel %vm362, %v1572, 0
        %v2550 = vsel %vm362, %v1573, 0
        %v2553 = vsel %vm362, %v1574, 0
        %v2556 = vsel %vm362, %v1575, 0
        %v2559 = vsel %vm362, %v1576, 0
        %v2562 = vsel %vm362, %v1577, 0
        %v2565 = vsel %vm362, %v1578, 0
        %v2568 = vsel %vm362, %v1579, 0
        %2570 = vmatprep.subr.mxu0 0.0
        %2571 = vmatpush1.xpose.msra.mxu0 %v2547
        %2572 = vmatprep.subr.mxu0 0.0
        %2573 = vmatpush1.xpose.msra.mxu0 %v2550
        %2574 = vmatprep.subr.mxu0 0.0
        %2575 = vmatpush1.xpose.msra.mxu0 %v2553
        %2576 = vmatprep.subr.mxu0 0.0
        %2577 = vmatpush1.xpose.msra.mxu0 %v2556
        %2578 = vmatprep.subr.mxu0 0.0
        %2579 = vmatpush1.xpose.msra.mxu0 %v2559
        %2580 = vmatprep.subr.mxu0 0.0
        %2581 = vmatpush1.xpose.msra.mxu0 %v2562
        %2582 = vmatprep.subr.mxu0 0.0
        %2583 = vmatpush1.xpose.msra.mxu0 %v2565
        %2584 = vmatprep.subr.mxu0 0.0
        %2585 = vmatpush1.xpose.msra.mxu0 %v2568
        %2586 = vmatprep.subr.mxu0 0.0
        %2587 = vmatpush1.xpose.msra.mxu0 0.0
        %2588 = vmatprep.subr.mxu0 0.0
        %2589 = vmatpush1.xpose.msra.mxu0 0.0
        %2590 = vmatprep.subr.mxu0 0.0
        %2591 = vmatpush1.xpose.msra.mxu0 0.0
        %2592 = vmatprep.subr.mxu0 0.0
        %2593 = vmatpush1.xpose.msra.mxu0 0.0
        %2594 = vmatprep.subr.mxu0 0.0
        %2595 = vmatpush1.xpose.msra.mxu0 0.0
        %2596 = vmatprep.subr.mxu0 0.0
        %2597 = vmatpush1.xpose.msra.mxu0 0.0
        %2598 = vmatprep.subr.mxu0 0.0
        %2599 = vmatpush1.xpose.msra.mxu0 0.0
        %2600 = vmatprep.subr.mxu0 0.0
        %2601 = vmatpush1.xpose.msra.mxu0 0.0
        %2602 = vmatprep.subr.mxu0 0.0
        %2603 = vmatpush1.xpose.msra.mxu0 0.0
        %2604 = vmatprep.subr.mxu0 0.0
        %2605 = vmatpush1.xpose.msra.mxu0 0.0
        %2606 = vmatprep.subr.mxu0 0.0
        %2607 = vmatpush1.xpose.msra.mxu0 0.0
        %2608 = vmatprep.subr.mxu0 0.0
        %2609 = vmatpush1.xpose.msra.mxu0 0.0
        %2610 = vmatprep.subr.mxu0 0.0
        %2611 = vmatpush1.xpose.msra.mxu0 0.0
        %2612 = vmatprep.subr.mxu0 0.0
        %2613 = vmatpush1.xpose.msra.mxu0 0.0
        %2614 = vmatprep.subr.mxu0 0.0
        %2615 = vmatpush1.xpose.msra.mxu0 0.0
        %2616 = vmatprep.subr.mxu0 0.0
        %2617 = vmatpush1.xpose.msra.mxu0 0.0
        %2618 = vmatprep.subr.mxu0 0.0
        %2619 = vmatpush1.xpose.msra.mxu0 0.0
        %2620 = vmatprep.subr.mxu0 0.0
        %2621 = vmatpush1.xpose.msra.mxu0 0.0
        %2622 = vmatprep.subr.mxu0 0.0
        %2623 = vmatpush1.xpose.msra.mxu0 0.0
        %2624 = vmatprep.subr.mxu0 0.0
        %2625 = vmatpush1.xpose.msra.mxu0 0.0
        %2626 = vmatprep.subr.mxu0 0.0
        %2627 = vmatpush1.xpose.msra.mxu0 0.0
        %2628 = vmatprep.subr.mxu0 0.0
        %2629 = vmatpush1.xpose.msra.mxu0 0.0
        %2630 = vmatprep.subr.mxu0 0.0
        %2631 = vmatpush1.xpose.msra.mxu0 0.0
        %2632 = vmatprep.subr.mxu0 0.0
        %2633 = vmatpush1.xpose.msra.mxu0 0.0
        %2634 = vmatprep.mubr.f32.mxu0 0.0
        %2635 = vmatmul.mubr.f32.gmra.mrb[0].mxu0 %v2544
        %v2636 = vpop.f32.mrb[0].mxu0
        %v2637 = vadd.f32 0.0, %v2636
        %v2638 = vpop.f32.mrb[0].mxu0
        %2639 = vdwg.mxu0
        %vm2640 = vcmp.gt.f32.partialorder %v2249, 0.0
        %v2641 = vsel %vm2640, %v2637, 0.0
        %2642 = vmatprep.subr.mxu0 0.0
        %2643 = vmatpush1.msra.mxu0 %v2641
        %2644 = vmatprep.subr.mxu0 0.0
        %2645 = vmatpush1.msra.mxu0 0.0
        %2646 = vmatprep.subr.mxu0 0.0
        %2647 = vmatpush1.msra.mxu0 0.0
        %2648 = vmatprep.subr.mxu0 0.0
        %2649 = vmatpush1.msra.mxu0 0.0
        %2650 = vmatprep.subr.mxu0 0.0
        %2651 = vmatpush1.msra.mxu0 0.0
        %2652 = vmatprep.subr.mxu0 0.0
        %2653 = vmatpush1.msra.mxu0 0.0
        %2654 = vmatprep.subr.mxu0 0.0
        %2655 = vmatpush1.msra.mxu0 0.0
        %2656 = vmatprep.subr.mxu0 0.0
        %2657 = vmatpush1.msra.mxu0 0.0
        %2658 = vmatprep.subr.mxu0 0.0
        %2659 = vmatpush1.msra.mxu0 0.0
        %2660 = vmatprep.subr.mxu0 0.0
        %2661 = vmatpush1.msra.mxu0 0.0
        %2662 = vmatprep.subr.mxu0 0.0
        %2663 = vmatpush1.msra.mxu0 0.0
        %2664 = vmatprep.subr.mxu0 0.0
        %2665 = vmatpush1.msra.mxu0 0.0
        %2666 = vmatprep.subr.mxu0 0.0
        %2667 = vmatpush1.msra.mxu0 0.0
        %2668 = vmatprep.subr.mxu0 0.0
        %2669 = vmatpush1.msra.mxu0 0.0
        %2670 = vmatprep.subr.mxu0 0.0
        %2671 = vmatpush1.msra.mxu0 0.0
        %2672 = vmatprep.subr.mxu0 0.0
        %2673 = vmatpush1.msra.mxu0 0.0
        %2674 = vmatprep.subr.mxu0 0.0
        %2675 = vmatpush1.msra.mxu0 0.0
        %2676 = vmatprep.subr.mxu0 0.0
        %2677 = vmatpush1.msra.mxu0 0.0
        %2678 = vmatprep.subr.mxu0 0.0
        %2679 = vmatpush1.msra.mxu0 0.0
        %2680 = vmatprep.subr.mxu0 0.0
        %2681 = vmatpush1.msra.mxu0 0.0
        %2682 = vmatprep.subr.mxu0 0.0
        %2683 = vmatpush1.msra.mxu0 0.0
        %2684 = vmatprep.subr.mxu0 0.0
        %2685 = vmatpush1.msra.mxu0 0.0
        %2686 = vmatprep.subr.mxu0 0.0
        %2687 = vmatpush1.msra.mxu0 0.0
        %2688 = vmatprep.subr.mxu0 0.0
        %2689 = vmatpush1.msra.mxu0 0.0
        %2690 = vmatprep.subr.mxu0 0.0
        %2691 = vmatpush1.msra.mxu0 0.0
        %2692 = vmatprep.subr.mxu0 0.0
        %2693 = vmatpush1.msra.mxu0 0.0
        %2694 = vmatprep.subr.mxu0 0.0
        %2695 = vmatpush1.msra.mxu0 0.0
        %2696 = vmatprep.subr.mxu0 0.0
        %2697 = vmatpush1.msra.mxu0 0.0
        %2698 = vmatprep.subr.mxu0 0.0
        %2699 = vmatpush1.msra.mxu0 0.0
        %2700 = vmatprep.subr.mxu0 0.0
        %2701 = vmatpush1.msra.mxu0 0.0
        %2702 = vmatprep.subr.mxu0 0.0
        %2703 = vmatpush1.msra.mxu0 0.0
        %2704 = vmatprep.subr.mxu0 0.0
        %2705 = vmatpush1.msra.mxu0 0.0
        %2706 = vmatprep.mubr.f32.mxu0 0.0
        %2707 = vmatmul.mubr.f32.gmra.mrb[0].mxu0 %v1451
        %v2708 = vpop.f32.mrb[0].mxu0
        %v2709 = vadd.f32 0.0, %v2708
        %v2710 = vpop.f32.mrb[0].mxu0
        %2711 = vmatprep.mubr.f32.mxu0 0.0
        %2712 = vmatmul.mubr.f32.gmra.mrb[0].mxu0 %v1454
        %v2713 = vpop.f32.mrb[0].mxu0
        %v2714 = vadd.f32 0.0, %v2713
        %v2715 = vpop.f32.mrb[0].mxu0
        %2716 = vmatprep.mubr.f32.mxu0 0.0
        %2717 = vmatmul.mubr.f32.gmra.mrb[0].mxu0 %v1457
        %v2718 = vpop.f32.mrb[0].mxu0
        %v2719 = vadd.f32 0.0, %v2718
        %v2720 = vpop.f32.mrb[0].mxu0
        %2721 = vmatprep.mubr.f32.mxu0 0.0
        %2722 = vmatmul.mubr.f32.gmra.mrb[0].mxu0 %v1460
        %v2723 = vpop.f32.mrb[0].mxu0
        %v2724 = vadd.f32 0.0, %v2723
        %v2725 = vpop.f32.mrb[0].mxu0
        %2726 = vdwg.mxu0
        %v2727 = vsel %vm443, %v2641, 0.0
        %v2728 = vrot.slane %v2727, 4
        %v2729 = vadd.f32 %v2727, %v2728
        %v2730 = vrot.slane %v2729, 2
        %v2731 = vadd.f32 %v2729, %v2730
        %v2732 = vrot.slane %v2731, 1
        %v2733 = vadd.f32 %v2731, %v2732
        %v2734 = vmul.f32 %v2709, 0.01
        %v2735 = vmul.f32 %v2714, 0.01
        %v2736 = vmul.f32 %v2719, 0.01
        %v2737 = vmul.f32 %v2724, 0.01
        %v2738 = vsub.f32 %v1558, %v2734
        %v2739 = vsub.f32 %v1559, %v2735
        %v2740 = vsub.f32 %v1560, %v2736
        %v2741 = vsub.f32 %v1561, %v2737
        %v2742 = vmul.f32 %v2733, 0.01
        %v2743 = vsub.f32 %v1563, %v2742
        %v2744 = vmul.f32 %v2498, 0.01
        %v2745 = vmul.f32 %v2503, 0.01
        %v2746 = vmul.f32 %v2508, 0.01
        %v2747 = vmul.f32 %v2513, 0.01
        %v2748 = vmul.f32 %v2518, 0.01
        %v2749 = vmul.f32 %v2523, 0.01
        %v2750 = vmul.f32 %v2528, 0.01
        %v2751 = vmul.f32 %v2533, 0.01
        %v2752 = vsub.f32 %v1572, %v2744
        %v2753 = vsub.f32 %v1573, %v2745
        %v2754 = vsub.f32 %v1574, %v2746
        %v2755 = vsub.f32 %v1575, %v2747
        %v2756 = vsub.f32 %v1576, %v2748
        %v2757 = vsub.f32 %v1577, %v2749
        %v2758 = vsub.f32 %v1578, %v2750
        %v2759 = vsub.f32 %v1579, %v2751
        %v2760 = vmul.f32 %v2542, 0.01
        %v2761 = vsub.f32 %v1581, %v2760
        %v2762 = vmul.f32 %v2364, 0.01
        %v2763 = vsub.f32 %v1583, %v2762
        %v2764 = vmul.f32 %v2371, 0.01
        %v2765 = vsub.f32 %v1585, %v2764
        %v2767 = vlaneseq
        %v2768 = vshrl.u32 %v2767, 7
        %v2769 = vsub.s32 0, %v2768
        %v2770 = vrot.slane %v2153, %v2769
        %2772 = vmatprep.subr.mxu0 0.0
        %2773 = vmatpush1.msra.mxu0 %v2148
        %2774 = vmatprep.subr.mxu0 0.0
        %2775 = vmatpush1.msra.mxu0 %v2149
        %2776 = vmatprep.subr.mxu0 0.0
        %2777 = vmatpush1.msra.mxu0 %v2150
        %2778 = vmatprep.subr.mxu0 0.0
        %2779 = vmatpush1.msra.mxu0 %v2151
        %2780 = vmatprep.subr.mxu0 0.0
        %2781 = vmatpush1.msra.mxu0 0.0
        %2782 = vmatprep.subr.mxu0 0.0
        %2783 = vmatpush1.msra.mxu0 0.0
        %2784 = vmatprep.subr.mxu0 0.0
        %2785 = vmatpush1.msra.mxu0 0.0
        %2786 = vmatprep.subr.mxu0 0.0
        %2787 = vmatpush1.msra.mxu0 0.0
        %2788 = vmatprep.subr.mxu0 0.0
        %2789 = vmatpush1.msra.mxu0 0.0
        %2790 = vmatprep.subr.mxu0 0.0
        %2791 = vmatpush1.msra.mxu0 0.0
        %2792 = vmatprep.subr.mxu0 0.0
        %2793 = vmatpush1.msra.mxu0 0.0
        %2794 = vmatprep.subr.mxu0 0.0
        %2795 = vmatpush1.msra.mxu0 0.0
        %2796 = vmatprep.subr.mxu0 0.0
        %2797 = vmatpush1.msra.mxu0 0.0
        %2798 = vmatprep.subr.mxu0 0.0
        %2799 = vmatpush1.msra.mxu0 0.0
        %2800 = vmatprep.subr.mxu0 0.0
        %2801 = vmatpush1.msra.mxu0 0.0
        %2802 = vmatprep.subr.mxu0 0.0
        %2803 = vmatpush1.msra.mxu0 0.0
        %2804 = vmatprep.subr.mxu0 0.0
        %2805 = vmatpush1.msra.mxu0 0.0
        %2806 = vmatprep.subr.mxu0 0.0
        %2807 = vmatpush1.msra.mxu0 0.0
        %2808 = vmatprep.subr.mxu0 0.0
        %2809 = vmatpush1.msra.mxu0 0.0
        %2810 = vmatprep.subr.mxu0 0.0
        %2811 = vmatpush1.msra.mxu0 0.0
        %2812 = vmatprep.subr.mxu0 0.0
        %2813 = vmatpush1.msra.mxu0 0.0
        %2814 = vmatprep.subr.mxu0 0.0
        %2815 = vmatpush1.msra.mxu0 0.0
        %2816 = vmatprep.subr.mxu0 0.0
        %2817 = vmatpush1.msra.mxu0 0.0
        %2818 = vmatprep.subr.mxu0 0.0
        %2819 = vmatpush1.msra.mxu0 0.0
        %2820 = vmatprep.subr.mxu0 0.0
        %2821 = vmatpush1.msra.mxu0 0.0
        %2822 = vmatprep.subr.mxu0 0.0
        %2823 = vmatpush1.msra.mxu0 0.0
        %2824 = vmatprep.subr.mxu0 0.0
        %2825 = vmatpush1.msra.mxu0 0.0
        %2826 = vmatprep.subr.mxu0 0.0
        %2827 = vmatpush1.msra.mxu0 0.0
        %2828 = vmatprep.subr.mxu0 0.0
        %2829 = vmatpush1.msra.mxu0 0.0
        %2830 = vmatprep.subr.mxu0 0.0
        %2831 = vmatpush1.msra.mxu0 0.0
        %2832 = vmatprep.subr.mxu0 0.0
        %2833 = vmatpush1.msra.mxu0 0.0
        %2834 = vmatprep.subr.mxu0 0.0
        %2835 = vmatpush1.msra.mxu0 0.0
        %2836 = vmatprep.mubr.f32.mxu0 0.0
        %2837 = vmatmul.mubr.f32.gmra.mrb[0].mxu0 %v364
        %v2838 = vpop.f32.mrb[0].mxu0
        %v2839 = vadd.f32 %v2770, %v2838
        %v2840 = vpop.f32.mrb[0].mxu0
        %2841 = vdwg.mxu0
        %v2842 = vmax.f32 %v2839, 0.0
        %v2844 = vlaneseq
        %v2845 = vshrl.u32 %v2844, 7
        %v2846 = vsub.s32 0, %v2845
        %v2847 = vrot.slane %v2171, %v2846
        %v2850 = vsel %vm443, %v2842, 0
        %2852 = vmatprep.subr.mxu0 0.0
        %2853 = vmatpush1.msra.mxu0 %v2162
        %2854 = vmatprep.subr.mxu0 0.0
        %2855 = vmatpush1.msra.mxu0 %v2163
        %2856 = vmatprep.subr.mxu0 0.0
        %2857 = vmatpush1.msra.mxu0 %v2164
        %2858 = vmatprep.subr.mxu0 0.0
        %2859 = vmatpush1.msra.mxu0 %v2165
        %2860 = vmatprep.subr.mxu0 0.0
        %2861 = vmatpush1.msra.mxu0 %v2166
        %2862 = vmatprep.subr.mxu0 0.0
        %2863 = vmatpush1.msra.mxu0 %v2167
        %2864 = vmatprep.subr.mxu0 0.0
        %2865 = vmatpush1.msra.mxu0 %v2168
        %2866 = vmatprep.subr.mxu0 0.0
        %2867 = vmatpush1.msra.mxu0 %v2169
        %2868 = vmatprep.subr.mxu0 0.0
        %2869 = vmatpush1.msra.mxu0 0.0
        %2870 = vmatprep.subr.mxu0 0.0
        %2871 = vmatpush1.msra.mxu0 0.0
        %2872 = vmatprep.subr.mxu0 0.0
        %2873 = vmatpush1.msra.mxu0 0.0
        %2874 = vmatprep.subr.mxu0 0.0
        %2875 = vmatpush1.msra.mxu0 0.0
        %2876 = vmatprep.subr.mxu0 0.0
        %2877 = vmatpush1.msra.mxu0 0.0
        %2878 = vmatprep.subr.mxu0 0.0
        %2879 = vmatpush1.msra.mxu0 0.0
        %2880 = vmatprep.subr.mxu0 0.0
        %2881 = vmatpush1.msra.mxu0 0.0
        %2882 = vmatprep.subr.mxu0 0.0
        %2883 = vmatpush1.msra.mxu0 0.0
        %2884 = vmatprep.subr.mxu0 0.0
        %2885 = vmatpush1.msra.mxu0 0.0
        %2886 = vmatprep.subr.mxu0 0.0
        %2887 = vmatpush1.msra.mxu0 0.0
        %2888 = vmatprep.subr.mxu0 0.0
        %2889 = vmatpush1.msra.mxu0 0.0
        %2890 = vmatprep.subr.mxu0 0.0
        %2891 = vmatpush1.msra.mxu0 0.0
        %2892 = vmatprep.subr.mxu0 0.0
        %2893 = vmatpush1.msra.mxu0 0.0
        %2894 = vmatprep.subr.mxu0 0.0
        %2895 = vmatpush1.msra.mxu0 0.0
        %2896 = vmatprep.subr.mxu0 0.0
        %2897 = vmatpush1.msra.mxu0 0.0
        %2898 = vmatprep.subr.mxu0 0.0
        %2899 = vmatpush1.msra.mxu0 0.0
        %2900 = vmatprep.subr.mxu0 0.0
        %2901 = vmatpush1.msra.mxu0 0.0
        %2902 = vmatprep.subr.mxu0 0.0
        %2903 = vmatpush1.msra.mxu0 0.0
        %2904 = vmatprep.subr.mxu0 0.0
        %2905 = vmatpush1.msra.mxu0 0.0
        %2906 = vmatprep.subr.mxu0 0.0
        %2907 = vmatpush1.msra.mxu0 0.0
        %2908 = vmatprep.subr.mxu0 0.0
        %2909 = vmatpush1.msra.mxu0 0.0
        %2910 = vmatprep.subr.mxu0 0.0
        %2911 = vmatpush1.msra.mxu0 0.0
        %2912 = vmatprep.subr.mxu0 0.0
        %2913 = vmatpush1.msra.mxu0 0.0
        %2914 = vmatprep.subr.mxu0 0.0
        %2915 = vmatpush1.msra.mxu0 0.0
        %2916 = vmatprep.mubr.f32.mxu0 0.0
        %2917 = vmatmul.mubr.f32.gmra.mrb[0].mxu0 %v2850
        %v2918 = vpop.f32.mrb[0].mxu0
        %v2919 = vadd.f32 %v2847, %v2918
        %v2920 = vpop.f32.mrb[0].mxu0
        %2921 = vdwg.mxu0
        %v2922 = vmax.f32 %v2919, 0.0
        %v2924 = vlaneseq
        %v2925 = vshrl.u32 %v2924, 7
        %v2926 = vsub.s32 0, %v2925
        %v2927 = vrot.slane %v2173, %v2926
        %v2929 = vmul.f32 %v2922, %v2927
        %v2930 = vsel %vm362, %v2929, 0.0
        %2931 = vadd.xlane.f32.xlu0 %v2930
        %v2932 = vpop.xlane.xlu0 %2931
        %v2934 = vlaneseq
        %v2935 = vshrl.u32 %v2934, 7
        %v2936 = vsub.s32 0, %v2935
        %v2937 = vrot.slane %v2175, %v2936
        %v2939 = vadd.f32 %v2932, %v2937
        %v2940 = vsub.f32 %v2939, %v350
        %v2941 = vmul.f32 %v2940, 0.25
        %2943 = vset.pattern.permute.xlu0 0
        %2944 = vperm.xlu0 %2943, %v2941
        %v2945 = vpop.permute.xlu0 %2944
        %v2947 = vmul.f32 %v2945, %v2922
        %v2948 = vsel %vm362, %v2947, 0.0
        %v2949 = vrot.slane %v2948, 4
        %v2950 = vadd.f32 %v2948, %v2949
        %v2951 = vrot.slane %v2950, 2
        %v2952 = vadd.f32 %v2950, %v2951
        %v2953 = vrot.slane %v2952, 1
        %v2954 = vadd.f32 %v2952, %v2953
        %v2955 = vsel %vm550, %v2941, 0.0
        %v2956 = vrot.slane %v2955, 4
        %v2957 = vadd.f32 %v2955, %v2956
        %v2958 = vrot.slane %v2957, 2
        %v2959 = vadd.f32 %v2957, %v2958
        %v2960 = vrot.slane %v2959, 1
        %v2961 = vadd.f32 %v2959, %v2960
        %v2962 = vmul.f32 %v2945, %v2927
        %vm2963 = vcmp.gt.f32.partialorder %v2919, 0.0
        %v2964 = vsel %vm2963, %v2962, 0.0
        %2965 = vxpose.xlu0.b32.start [1/16] %v2842, 128
        %2966 = vxpose.xlu0.b32.cont [2/16] 0.0, 128
        %2967 = vxpose.xlu0.b32.cont [3/16] 0.0, 128
        %2968 = vxpose.xlu0.b32.cont [4/16] 0.0, 128
        %2969 = vxpose.xlu0.b32.cont [5/16] 0.0, 128
        %2970 = vxpose.xlu0.b32.cont [6/16] 0.0, 128
        %2971 = vxpose.xlu0.b32.cont [7/16] 0.0, 128
        %2972 = vxpose.xlu0.b32.cont [8/16] 0.0, 128
        %2973 = vxpose.xlu0.b32.cont [9/16] 0.0, 128
        %2974 = vxpose.xlu0.b32.cont [10/16] 0.0, 128
        %2975 = vxpose.xlu0.b32.cont [11/16] 0.0, 128
        %2976 = vxpose.xlu0.b32.cont [12/16] 0.0, 128
        %2977 = vxpose.xlu0.b32.cont [13/16] 0.0, 128
        %2978 = vxpose.xlu0.b32.cont [14/16] 0.0, 128
        %2979 = vxpose.xlu0.b32.cont [15/16] 0.0, 128
        %2980 = vxpose.xlu0.b32.end [16/16] 0.0, 128
        %v2981 = vpop.trf.xlu0
        %v2982 = vpop.trf.xlu0
        %v2983 = vpop.trf.xlu0
        %v2984 = vpop.trf.xlu0
        %v2985 = vpop.trf.xlu0
        %v2986 = vpop.trf.xlu0
        %v2987 = vpop.trf.xlu0
        %v2988 = vpop.trf.xlu0
        %v2989 = vpop.trf.xlu0
        %v2990 = vpop.trf.xlu0
        %v2991 = vpop.trf.xlu0
        %v2992 = vpop.trf.xlu0
        %v2993 = vpop.trf.xlu0
        %v2994 = vpop.trf.xlu0
        %v2995 = vpop.trf.xlu0
        %v2996 = vpop.trf.xlu0
        %v2998 = vsel %vm593, %v2981, 0
        %v3001 = vsel %vm593, %v2982, 0
        %v3004 = vsel %vm593, %v2983, 0
        %v3007 = vsel %vm593, %v2984, 0
        %v3010 = vsel %vm593, %v2985, 0
        %v3013 = vsel %vm593, %v2986, 0
        %v3016 = vsel %vm593, %v2987, 0
        %v3019 = vsel %vm593, %v2988, 0
        %3021 = vmatprep.subr.mxu0 0.0
        %3022 = vmatpush1.msra.mxu0 %v2964
        %3023 = vmatprep.subr.mxu0 0.0
        %3024 = vmatpush1.msra.mxu0 0.0
        %3025 = vmatprep.subr.mxu0 0.0
        %3026 = vmatpush1.msra.mxu0 0.0
        %3027 = vmatprep.subr.mxu0 0.0
        %3028 = vmatpush1.msra.mxu0 0.0
        %3029 = vmatprep.subr.mxu0 0.0
        %3030 = vmatpush1.msra.mxu0 0.0
        %3031 = vmatprep.subr.mxu0 0.0
        %3032 = vmatpush1.msra.mxu0 0.0
        %3033 = vmatprep.subr.mxu0 0.0
        %3034 = vmatpush1.msra.mxu0 0.0
        %3035 = vmatprep.subr.mxu0 0.0
        %3036 = vmatpush1.msra.mxu0 0.0
        %3037 = vmatprep.subr.mxu0 0.0
        %3038 = vmatpush1.msra.mxu0 0.0
        %3039 = vmatprep.subr.mxu0 0.0
        %3040 = vmatpush1.msra.mxu0 0.0
        %3041 = vmatprep.subr.mxu0 0.0
        %3042 = vmatpush1.msra.mxu0 0.0
        %3043 = vmatprep.subr.mxu0 0.0
        %3044 = vmatpush1.msra.mxu0 0.0
        %3045 = vmatprep.subr.mxu0 0.0
        %3046 = vmatpush1.msra.mxu0 0.0
        %3047 = vmatprep.subr.mxu0 0.0
        %3048 = vmatpush1.msra.mxu0 0.0
        %3049 = vmatprep.subr.mxu0 0.0
        %3050 = vmatpush1.msra.mxu0 0.0
        %3051 = vmatprep.subr.mxu0 0.0
        %3052 = vmatpush1.msra.mxu0 0.0
        %3053 = vmatprep.subr.mxu0 0.0
        %3054 = vmatpush1.msra.mxu0 0.0
        %3055 = vmatprep.subr.mxu0 0.0
        %3056 = vmatpush1.msra.mxu0 0.0
        %3057 = vmatprep.subr.mxu0 0.0
        %3058 = vmatpush1.msra.mxu0 0.0
        %3059 = vmatprep.subr.mxu0 0.0
        %3060 = vmatpush1.msra.mxu0 0.0
        %3061 = vmatprep.subr.mxu0 0.0
        %3062 = vmatpush1.msra.mxu0 0.0
        %3063 = vmatprep.subr.mxu0 0.0
        %3064 = vmatpush1.msra.mxu0 0.0
        %3065 = vmatprep.subr.mxu0 0.0
        %3066 = vmatpush1.msra.mxu0 0.0
        %3067 = vmatprep.subr.mxu0 0.0
        %3068 = vmatpush1.msra.mxu0 0.0
        %3069 = vmatprep.subr.mxu0 0.0
        %3070 = vmatpush1.msra.mxu0 0.0
        %3071 = vmatprep.subr.mxu0 0.0
        %3072 = vmatpush1.msra.mxu0 0.0
        %3073 = vmatprep.subr.mxu0 0.0
        %3074 = vmatpush1.msra.mxu0 0.0
        %3075 = vmatprep.subr.mxu0 0.0
        %3076 = vmatpush1.msra.mxu0 0.0
        %3077 = vmatprep.subr.mxu0 0.0
        %3078 = vmatpush1.msra.mxu0 0.0
        %3079 = vmatprep.subr.mxu0 0.0
        %3080 = vmatpush1.msra.mxu0 0.0
        %3081 = vmatprep.subr.mxu0 0.0
        %3082 = vmatpush1.msra.mxu0 0.0
        %3083 = vmatprep.subr.mxu0 0.0
        %3084 = vmatpush1.msra.mxu0 0.0
        %3085 = vmatprep.mubr.f32.mxu0 0.0
        %3086 = vmatmul.mubr.f32.gmra.mrb[0].mxu0 %v2998
        %v3087 = vpop.f32.mrb[0].mxu0
        %v3088 = vadd.f32 0.0, %v3087
        %v3089 = vpop.f32.mrb[0].mxu0
        %3090 = vmatprep.mubr.f32.mxu0 0.0
        %3091 = vmatmul.mubr.f32.gmra.mrb[0].mxu0 %v3001
        %v3092 = vpop.f32.mrb[0].mxu0
        %v3093 = vadd.f32 0.0, %v3092
        %v3094 = vpop.f32.mrb[0].mxu0
        %3095 = vmatprep.mubr.f32.mxu0 0.0
        %3096 = vmatmul.mubr.f32.gmra.mrb[0].mxu0 %v3004
        %v3097 = vpop.f32.mrb[0].mxu0
        %v3098 = vadd.f32 0.0, %v3097
        %v3099 = vpop.f32.mrb[0].mxu0
        %3100 = vmatprep.mubr.f32.mxu0 0.0
        %3101 = vmatmul.mubr.f32.gmra.mrb[0].mxu0 %v3007
        %v3102 = vpop.f32.mrb[0].mxu0
        %v3103 = vadd.f32 0.0, %v3102
        %v3104 = vpop.f32.mrb[0].mxu0
        %3105 = vmatprep.mubr.f32.mxu0 0.0
        %3106 = vmatmul.mubr.f32.gmra.mrb[0].mxu0 %v3010
        %v3107 = vpop.f32.mrb[0].mxu0
        %v3108 = vadd.f32 0.0, %v3107
        %v3109 = vpop.f32.mrb[0].mxu0
        %3110 = vmatprep.mubr.f32.mxu0 0.0
        %3111 = vmatmul.mubr.f32.gmra.mrb[0].mxu0 %v3013
        %v3112 = vpop.f32.mrb[0].mxu0
        %v3113 = vadd.f32 0.0, %v3112
        %v3114 = vpop.f32.mrb[0].mxu0
        %3115 = vmatprep.mubr.f32.mxu0 0.0
        %3116 = vmatmul.mubr.f32.gmra.mrb[0].mxu0 %v3016
        %v3117 = vpop.f32.mrb[0].mxu0
        %v3118 = vadd.f32 0.0, %v3117
        %v3119 = vpop.f32.mrb[0].mxu0
        %3120 = vmatprep.mubr.f32.mxu0 0.0
        %3121 = vmatmul.mubr.f32.gmra.mrb[0].mxu0 %v3019
        %v3122 = vpop.f32.mrb[0].mxu0
        %v3123 = vadd.f32 0.0, %v3122
        %v3124 = vpop.f32.mrb[0].mxu0
        %3125 = vdwg.mxu0
        %v3126 = vsel %vm362, %v2964, 0.0
        %v3127 = vrot.slane %v3126, 4
        %v3128 = vadd.f32 %v3126, %v3127
        %v3129 = vrot.slane %v3128, 2
        %v3130 = vadd.f32 %v3128, %v3129
        %v3131 = vrot.slane %v3130, 1
        %v3132 = vadd.f32 %v3130, %v3131
        %v3134 = vsel %vm362, %v2964, 0
        %v3137 = vsel %vm362, %v2162, 0
        %v3140 = vsel %vm362, %v2163, 0
        %v3143 = vsel %vm362, %v2164, 0
        %v3146 = vsel %vm362, %v2165, 0
        %v3149 = vsel %vm362, %v2166, 0
        %v3152 = vsel %vm362, %v2167, 0
        %v3155 = vsel %vm362, %v2168, 0
        %v3158 = vsel %vm362, %v2169, 0
        %3160 = vmatprep.subr.mxu0 0.0
        %3161 = vmatpush1.xpose.msra.mxu0 %v3137
        %3162 = vmatprep.subr.mxu0 0.0
        %3163 = vmatpush1.xpose.msra.mxu0 %v3140
        %3164 = vmatprep.subr.mxu0 0.0
        %3165 = vmatpush1.xpose.msra.mxu0 %v3143
        %3166 = vmatprep.subr.mxu0 0.0
        %3167 = vmatpush1.xpose.msra.mxu0 %v3146
        %3168 = vmatprep.subr.mxu0 0.0
        %3169 = vmatpush1.xpose.msra.mxu0 %v3149
        %3170 = vmatprep.subr.mxu0 0.0
        %3171 = vmatpush1.xpose.msra.mxu0 %v3152
        %3172 = vmatprep.subr.mxu0 0.0
        %3173 = vmatpush1.xpose.msra.mxu0 %v3155
        %3174 = vmatprep.subr.mxu0 0.0
        %3175 = vmatpush1.xpose.msra.mxu0 %v3158
        %3176 = vmatprep.subr.mxu0 0.0
        %3177 = vmatpush1.xpose.msra.mxu0 0.0
        %3178 = vmatprep.subr.mxu0 0.0
        %3179 = vmatpush1.xpose.msra.mxu0 0.0
        %3180 = vmatprep.subr.mxu0 0.0
        %3181 = vmatpush1.xpose.msra.mxu0 0.0
        %3182 = vmatprep.subr.mxu0 0.0
        %3183 = vmatpush1.xpose.msra.mxu0 0.0
        %3184 = vmatprep.subr.mxu0 0.0
        %3185 = vmatpush1.xpose.msra.mxu0 0.0
        %3186 = vmatprep.subr.mxu0 0.0
        %3187 = vmatpush1.xpose.msra.mxu0 0.0
        %3188 = vmatprep.subr.mxu0 0.0
        %3189 = vmatpush1.xpose.msra.mxu0 0.0
        %3190 = vmatprep.subr.mxu0 0.0
        %3191 = vmatpush1.xpose.msra.mxu0 0.0
        %3192 = vmatprep.subr.mxu0 0.0
        %3193 = vmatpush1.xpose.msra.mxu0 0.0
        %3194 = vmatprep.subr.mxu0 0.0
        %3195 = vmatpush1.xpose.msra.mxu0 0.0
        %3196 = vmatprep.subr.mxu0 0.0
        %3197 = vmatpush1.xpose.msra.mxu0 0.0
        %3198 = vmatprep.subr.mxu0 0.0
        %3199 = vmatpush1.xpose.msra.mxu0 0.0
        %3200 = vmatprep.subr.mxu0 0.0
        %3201 = vmatpush1.xpose.msra.mxu0 0.0
        %3202 = vmatprep.subr.mxu0 0.0
        %3203 = vmatpush1.xpose.msra.mxu0 0.0
        %3204 = vmatprep.subr.mxu0 0.0
        %3205 = vmatpush1.xpose.msra.mxu0 0.0
        %3206 = vmatprep.subr.mxu0 0.0
        %3207 = vmatpush1.xpose.msra.mxu0 0.0
        %3208 = vmatprep.subr.mxu0 0.0
        %3209 = vmatpush1.xpose.msra.mxu0 0.0
        %3210 = vmatprep.subr.mxu0 0.0
        %3211 = vmatpush1.xpose.msra.mxu0 0.0
        %3212 = vmatprep.subr.mxu0 0.0
        %3213 = vmatpush1.xpose.msra.mxu0 0.0
        %3214 = vmatprep.subr.mxu0 0.0
        %3215 = vmatpush1.xpose.msra.mxu0 0.0
        %3216 = vmatprep.subr.mxu0 0.0
        %3217 = vmatpush1.xpose.msra.mxu0 0.0
        %3218 = vmatprep.subr.mxu0 0.0
        %3219 = vmatpush1.xpose.msra.mxu0 0.0
        %3220 = vmatprep.subr.mxu0 0.0
        %3221 = vmatpush1.xpose.msra.mxu0 0.0
        %3222 = vmatprep.subr.mxu0 0.0
        %3223 = vmatpush1.xpose.msra.mxu0 0.0
        %3224 = vmatprep.mubr.f32.mxu0 0.0
        %3225 = vmatmul.mubr.f32.gmra.mrb[0].mxu0 %v3134
        %v3226 = vpop.f32.mrb[0].mxu0
        %v3227 = vadd.f32 0.0, %v3226
        %v3228 = vpop.f32.mrb[0].mxu0
        %3229 = vdwg.mxu0
        %vm3230 = vcmp.gt.f32.partialorder %v2839, 0.0
        %v3231 = vsel %vm3230, %v3227, 0.0
        %3232 = vmatprep.subr.mxu0 0.0
        %3233 = vmatpush1.msra.mxu0 %v3231
        %3234 = vmatprep.subr.mxu0 0.0
        %3235 = vmatpush1.msra.mxu0 0.0
        %3236 = vmatprep.subr.mxu0 0.0
        %3237 = vmatpush1.msra.mxu0 0.0
        %3238 = vmatprep.subr.mxu0 0.0
        %3239 = vmatpush1.msra.mxu0 0.0
        %3240 = vmatprep.subr.mxu0 0.0
        %3241 = vmatpush1.msra.mxu0 0.0
        %3242 = vmatprep.subr.mxu0 0.0
        %3243 = vmatpush1.msra.mxu0 0.0
        %3244 = vmatprep.subr.mxu0 0.0
        %3245 = vmatpush1.msra.mxu0 0.0
        %3246 = vmatprep.subr.mxu0 0.0
        %3247 = vmatpush1.msra.mxu0 0.0
        %3248 = vmatprep.subr.mxu0 0.0
        %3249 = vmatpush1.msra.mxu0 0.0
        %3250 = vmatprep.subr.mxu0 0.0
        %3251 = vmatpush1.msra.mxu0 0.0
        %3252 = vmatprep.subr.mxu0 0.0
        %3253 = vmatpush1.msra.mxu0 0.0
        %3254 = vmatprep.subr.mxu0 0.0
        %3255 = vmatpush1.msra.mxu0 0.0
        %3256 = vmatprep.subr.mxu0 0.0
        %3257 = vmatpush1.msra.mxu0 0.0
        %3258 = vmatprep.subr.mxu0 0.0
        %3259 = vmatpush1.msra.mxu0 0.0
        %3260 = vmatprep.subr.mxu0 0.0
        %3261 = vmatpush1.msra.mxu0 0.0
        %3262 = vmatprep.subr.mxu0 0.0
        %3263 = vmatpush1.msra.mxu0 0.0
        %3264 = vmatprep.subr.mxu0 0.0
        %3265 = vmatpush1.msra.mxu0 0.0
        %3266 = vmatprep.subr.mxu0 0.0
        %3267 = vmatpush1.msra.mxu0 0.0
        %3268 = vmatprep.subr.mxu0 0.0
        %3269 = vmatpush1.msra.mxu0 0.0
        %3270 = vmatprep.subr.mxu0 0.0
        %3271 = vmatpush1.msra.mxu0 0.0
        %3272 = vmatprep.subr.mxu0 0.0
        %3273 = vmatpush1.msra.mxu0 0.0
        %3274 = vmatprep.subr.mxu0 0.0
        %3275 = vmatpush1.msra.mxu0 0.0
        %3276 = vmatprep.subr.mxu0 0.0
        %3277 = vmatpush1.msra.mxu0 0.0
        %3278 = vmatprep.subr.mxu0 0.0
        %3279 = vmatpush1.msra.mxu0 0.0
        %3280 = vmatprep.subr.mxu0 0.0
        %3281 = vmatpush1.msra.mxu0 0.0
        %3282 = vmatprep.subr.mxu0 0.0
        %3283 = vmatpush1.msra.mxu0 0.0
        %3284 = vmatprep.subr.mxu0 0.0
        %3285 = vmatpush1.msra.mxu0 0.0
        %3286 = vmatprep.subr.mxu0 0.0
        %3287 = vmatpush1.msra.mxu0 0.0
        %3288 = vmatprep.subr.mxu0 0.0
        %3289 = vmatpush1.msra.mxu0 0.0
        %3290 = vmatprep.subr.mxu0 0.0
        %3291 = vmatpush1.msra.mxu0 0.0
        %3292 = vmatprep.subr.mxu0 0.0
        %3293 = vmatpush1.msra.mxu0 0.0
        %3294 = vmatprep.subr.mxu0 0.0
        %3295 = vmatpush1.msra.mxu0 0.0
        %3296 = vmatprep.mubr.f32.mxu0 0.0
        %3297 = vmatmul.mubr.f32.gmra.mrb[0].mxu0 %v862
        %v3298 = vpop.f32.mrb[0].mxu0
        %v3299 = vadd.f32 0.0, %v3298
        %v3300 = vpop.f32.mrb[0].mxu0
        %3301 = vmatprep.mubr.f32.mxu0 0.0
        %3302 = vmatmul.mubr.f32.gmra.mrb[0].mxu0 %v865
        %v3303 = vpop.f32.mrb[0].mxu0
        %v3304 = vadd.f32 0.0, %v3303
        %v3305 = vpop.f32.mrb[0].mxu0
        %3306 = vmatprep.mubr.f32.mxu0 0.0
        %3307 = vmatmul.mubr.f32.gmra.mrb[0].mxu0 %v868
        %v3308 = vpop.f32.mrb[0].mxu0
        %v3309 = vadd.f32 0.0, %v3308
        %v3310 = vpop.f32.mrb[0].mxu0
        %3311 = vmatprep.mubr.f32.mxu0 0.0
        %3312 = vmatmul.mubr.f32.gmra.mrb[0].mxu0 %v871
        %v3313 = vpop.f32.mrb[0].mxu0
        %v3314 = vadd.f32 0.0, %v3313
        %v3315 = vpop.f32.mrb[0].mxu0
        %3316 = vdwg.mxu0
        %v3317 = vsel %vm443, %v3231, 0.0
        %v3318 = vrot.slane %v3317, 4
        %v3319 = vadd.f32 %v3317, %v3318
        %v3320 = vrot.slane %v3319, 2
        %v3321 = vadd.f32 %v3319, %v3320
        %v3322 = vrot.slane %v3321, 1
        %v3323 = vadd.f32 %v3321, %v3322
        %v3324 = vmul.f32 %v3299, 0.01
        %v3325 = vmul.f32 %v3304, 0.01
        %v3326 = vmul.f32 %v3309, 0.01
        %v3327 = vmul.f32 %v3314, 0.01
        %v3328 = vsub.f32 %v2148, %v3324
        %v3329 = vsub.f32 %v2149, %v3325
        %v3330 = vsub.f32 %v2150, %v3326
        %v3331 = vsub.f32 %v2151, %v3327
        %v3332 = vmul.f32 %v3323, 0.01
        %v3333 = vsub.f32 %v2153, %v3332
        %v3334 = vmul.f32 %v3088, 0.01
        %v3335 = vmul.f32 %v3093, 0.01
        %v3336 = vmul.f32 %v3098, 0.01
        %v3337 = vmul.f32 %v3103, 0.01
        %v3338 = vmul.f32 %v3108, 0.01
        %v3339 = vmul.f32 %v3113, 0.01
        %v3340 = vmul.f32 %v3118, 0.01
        %v3341 = vmul.f32 %v3123, 0.01
        %v3342 = vsub.f32 %v2162, %v3334
        %v3343 = vsub.f32 %v2163, %v3335
        %v3344 = vsub.f32 %v2164, %v3336
        %v3345 = vsub.f32 %v2165, %v3337
        %v3346 = vsub.f32 %v2166, %v3338
        %v3347 = vsub.f32 %v2167, %v3339
        %v3348 = vsub.f32 %v2168, %v3340
        %v3349 = vsub.f32 %v2169, %v3341
        %v3350 = vmul.f32 %v3132, 0.01
        %v3351 = vsub.f32 %v2171, %v3350
        %v3352 = vmul.f32 %v2954, 0.01
        %v3353 = vsub.f32 %v2173, %v3352
        %v3354 = vmul.f32 %v2961, 0.01
        %v3355 = vsub.f32 %v2175, %v3354
        %v3357 = vlaneseq
        %v3358 = vshrl.u32 %v3357, 7
        %v3359 = vsub.s32 0, %v3358
        %v3360 = vrot.slane %v2743, %v3359
        %3362 = vmatprep.subr.mxu0 0.0
        %3363 = vmatpush1.msra.mxu0 %v2738
        %3364 = vmatprep.subr.mxu0 0.0
        %3365 = vmatpush1.msra.mxu0 %v2739
        %3366 = vmatprep.subr.mxu0 0.0
        %3367 = vmatpush1.msra.mxu0 %v2740
        %3368 = vmatprep.subr.mxu0 0.0
        %3369 = vmatpush1.msra.mxu0 %v2741
        %3370 = vmatprep.subr.mxu0 0.0
        %3371 = vmatpush1.msra.mxu0 0.0
        %3372 = vmatprep.subr.mxu0 0.0
        %3373 = vmatpush1.msra.mxu0 0.0
        %3374 = vmatprep.subr.mxu0 0.0
        %3375 = vmatpush1.msra.mxu0 0.0
        %3376 = vmatprep.subr.mxu0 0.0
        %3377 = vmatpush1.msra.mxu0 0.0
        %3378 = vmatprep.subr.mxu0 0.0
        %3379 = vmatpush1.msra.mxu0 0.0
        %3380 = vmatprep.subr.mxu0 0.0
        %3381 = vmatpush1.msra.mxu0 0.0
        %3382 = vmatprep.subr.mxu0 0.0
        %3383 = vmatpush1.msra.mxu0 0.0
        %3384 = vmatprep.subr.mxu0 0.0
        %3385 = vmatpush1.msra.mxu0 0.0
        %3386 = vmatprep.subr.mxu0 0.0
        %3387 = vmatpush1.msra.mxu0 0.0
        %3388 = vmatprep.subr.mxu0 0.0
        %3389 = vmatpush1.msra.mxu0 0.0
        %3390 = vmatprep.subr.mxu0 0.0
        %3391 = vmatpush1.msra.mxu0 0.0
        %3392 = vmatprep.subr.mxu0 0.0
        %3393 = vmatpush1.msra.mxu0 0.0
        %3394 = vmatprep.subr.mxu0 0.0
        %3395 = vmatpush1.msra.mxu0 0.0
        %3396 = vmatprep.subr.mxu0 0.0
        %3397 = vmatpush1.msra.mxu0 0.0
        %3398 = vmatprep.subr.mxu0 0.0
        %3399 = vmatpush1.msra.mxu0 0.0
        %3400 = vmatprep.subr.mxu0 0.0
        %3401 = vmatpush1.msra.mxu0 0.0
        %3402 = vmatprep.subr.mxu0 0.0
        %3403 = vmatpush1.msra.mxu0 0.0
        %3404 = vmatprep.subr.mxu0 0.0
        %3405 = vmatpush1.msra.mxu0 0.0
        %3406 = vmatprep.subr.mxu0 0.0
        %3407 = vmatpush1.msra.mxu0 0.0
        %3408 = vmatprep.subr.mxu0 0.0
        %3409 = vmatpush1.msra.mxu0 0.0
        %3410 = vmatprep.subr.mxu0 0.0
        %3411 = vmatpush1.msra.mxu0 0.0
        %3412 = vmatprep.subr.mxu0 0.0
        %3413 = vmatpush1.msra.mxu0 0.0
        %3414 = vmatprep.subr.mxu0 0.0
        %3415 = vmatpush1.msra.mxu0 0.0
        %3416 = vmatprep.subr.mxu0 0.0
        %3417 = vmatpush1.msra.mxu0 0.0
        %3418 = vmatprep.subr.mxu0 0.0
        %3419 = vmatpush1.msra.mxu0 0.0
        %3420 = vmatprep.subr.mxu0 0.0
        %3421 = vmatpush1.msra.mxu0 0.0
        %3422 = vmatprep.subr.mxu0 0.0
        %3423 = vmatpush1.msra.mxu0 0.0
        %3424 = vmatprep.subr.mxu0 0.0
        %3425 = vmatpush1.msra.mxu0 0.0
        %3426 = vmatprep.mubr.f32.mxu0 0.0
        %3427 = vmatmul.mubr.f32.gmra.mrb[0].mxu0 %v998
        %v3428 = vpop.f32.mrb[0].mxu0
        %v3429 = vadd.f32 %v3360, %v3428
        %v3430 = vpop.f32.mrb[0].mxu0
        %3431 = vdwg.mxu0
        %v3432 = vmax.f32 %v3429, 0.0
        %v3434 = vlaneseq
        %v3435 = vshrl.u32 %v3434, 7
        %v3436 = vsub.s32 0, %v3435
        %v3437 = vrot.slane %v2761, %v3436
        %v3440 = vsel %vm443, %v3432, 0
        %3442 = vmatprep.subr.mxu0 0.0
        %3443 = vmatpush1.msra.mxu0 %v2752
        %3444 = vmatprep.subr.mxu0 0.0
        %3445 = vmatpush1.msra.mxu0 %v2753
        %3446 = vmatprep.subr.mxu0 0.0
        %3447 = vmatpush1.msra.mxu0 %v2754
        %3448 = vmatprep.subr.mxu0 0.0
        %3449 = vmatpush1.msra.mxu0 %v2755
        %3450 = vmatprep.subr.mxu0 0.0
        %3451 = vmatpush1.msra.mxu0 %v2756
        %3452 = vmatprep.subr.mxu0 0.0
        %3453 = vmatpush1.msra.mxu0 %v2757
        %3454 = vmatprep.subr.mxu0 0.0
        %3455 = vmatpush1.msra.mxu0 %v2758
        %3456 = vmatprep.subr.mxu0 0.0
        %3457 = vmatpush1.msra.mxu0 %v2759
        %3458 = vmatprep.subr.mxu0 0.0
        %3459 = vmatpush1.msra.mxu0 0.0
        %3460 = vmatprep.subr.mxu0 0.0
        %3461 = vmatpush1.msra.mxu0 0.0
        %3462 = vmatprep.subr.mxu0 0.0
        %3463 = vmatpush1.msra.mxu0 0.0
        %3464 = vmatprep.subr.mxu0 0.0
        %3465 = vmatpush1.msra.mxu0 0.0
        %3466 = vmatprep.subr.mxu0 0.0
        %3467 = vmatpush1.msra.mxu0 0.0
        %3468 = vmatprep.subr.mxu0 0.0
        %3469 = vmatpush1.msra.mxu0 0.0
        %3470 = vmatprep.subr.mxu0 0.0
        %3471 = vmatpush1.msra.mxu0 0.0
        %3472 = vmatprep.subr.mxu0 0.0
        %3473 = vmatpush1.msra.mxu0 0.0
        %3474 = vmatprep.subr.mxu0 0.0
        %3475 = vmatpush1.msra.mxu0 0.0
        %3476 = vmatprep.subr.mxu0 0.0
        %3477 = vmatpush1.msra.mxu0 0.0
        %3478 = vmatprep.subr.mxu0 0.0
        %3479 = vmatpush1.msra.mxu0 0.0
        %3480 = vmatprep.subr.mxu0 0.0
        %3481 = vmatpush1.msra.mxu0 0.0
        %3482 = vmatprep.subr.mxu0 0.0
        %3483 = vmatpush1.msra.mxu0 0.0
        %3484 = vmatprep.subr.mxu0 0.0
        %3485 = vmatpush1.msra.mxu0 0.0
        %3486 = vmatprep.subr.mxu0 0.0
        %3487 = vmatpush1.msra.mxu0 0.0
        %3488 = vmatprep.subr.mxu0 0.0
        %3489 = vmatpush1.msra.mxu0 0.0
        %3490 = vmatprep.subr.mxu0 0.0
        %3491 = vmatpush1.msra.mxu0 0.0
        %3492 = vmatprep.subr.mxu0 0.0
        %3493 = vmatpush1.msra.mxu0 0.0
        %3494 = vmatprep.subr.mxu0 0.0
        %3495 = vmatpush1.msra.mxu0 0.0
        %3496 = vmatprep.subr.mxu0 0.0
        %3497 = vmatpush1.msra.mxu0 0.0
        %3498 = vmatprep.subr.mxu0 0.0
        %3499 = vmatpush1.msra.mxu0 0.0
        %3500 = vmatprep.subr.mxu0 0.0
        %3501 = vmatpush1.msra.mxu0 0.0
        %3502 = vmatprep.subr.mxu0 0.0
        %3503 = vmatpush1.msra.mxu0 0.0
        %3504 = vmatprep.subr.mxu0 0.0
        %3505 = vmatpush1.msra.mxu0 0.0
        %3506 = vmatprep.mubr.f32.mxu0 0.0
        %3507 = vmatmul.mubr.f32.gmra.mrb[0].mxu0 %v3440
        %v3508 = vpop.f32.mrb[0].mxu0
        %v3509 = vadd.f32 %v3437, %v3508
        %v3510 = vpop.f32.mrb[0].mxu0
        %3511 = vdwg.mxu0
        %v3512 = vmax.f32 %v3509, 0.0
        %v3514 = vlaneseq
        %v3515 = vshrl.u32 %v3514, 7
        %v3516 = vsub.s32 0, %v3515
        %v3517 = vrot.slane %v2763, %v3516
        %v3519 = vmul.f32 %v3512, %v3517
        %v3520 = vsel %vm362, %v3519, 0.0
        %3521 = vadd.xlane.f32.xlu0 %v3520
        %v3522 = vpop.xlane.xlu0 %3521
        %v3524 = vlaneseq
        %v3525 = vshrl.u32 %v3524, 7
        %v3526 = vsub.s32 0, %v3525
        %v3527 = vrot.slane %v2765, %v3526
        %v3529 = vadd.f32 %v3522, %v3527
        %v3530 = vsub.f32 %v3529, %v355
        %v3531 = vmul.f32 %v3530, 0.25
        %3533 = vset.pattern.permute.xlu0 0
        %3534 = vperm.xlu0 %3533, %v3531
        %v3535 = vpop.permute.xlu0 %3534
        %v3537 = vmul.f32 %v3535, %v3512
        %v3538 = vsel %vm362, %v3537, 0.0
        %v3539 = vrot.slane %v3538, 4
        %v3540 = vadd.f32 %v3538, %v3539
        %v3541 = vrot.slane %v3540, 2
        %v3542 = vadd.f32 %v3540, %v3541
        %v3543 = vrot.slane %v3542, 1
        %v3544 = vadd.f32 %v3542, %v3543
        %v3545 = vsel %vm550, %v3531, 0.0
        %v3546 = vrot.slane %v3545, 4
        %v3547 = vadd.f32 %v3545, %v3546
        %v3548 = vrot.slane %v3547, 2
        %v3549 = vadd.f32 %v3547, %v3548
        %v3550 = vrot.slane %v3549, 1
        %v3551 = vadd.f32 %v3549, %v3550
        %v3552 = vmul.f32 %v3535, %v3517
        %vm3553 = vcmp.gt.f32.partialorder %v3509, 0.0
        %v3554 = vsel %vm3553, %v3552, 0.0
        %3555 = vxpose.xlu0.b32.start [1/16] %v3432, 128
        %3556 = vxpose.xlu0.b32.cont [2/16] 0.0, 128
        %3557 = vxpose.xlu0.b32.cont [3/16] 0.0, 128
        %3558 = vxpose.xlu0.b32.cont [4/16] 0.0, 128
        %3559 = vxpose.xlu0.b32.cont [5/16] 0.0, 128
        %3560 = vxpose.xlu0.b32.cont [6/16] 0.0, 128
        %3561 = vxpose.xlu0.b32.cont [7/16] 0.0, 128
        %3562 = vxpose.xlu0.b32.cont [8/16] 0.0, 128
        %3563 = vxpose.xlu0.b32.cont [9/16] 0.0, 128
        %3564 = vxpose.xlu0.b32.cont [10/16] 0.0, 128
        %3565 = vxpose.xlu0.b32.cont [11/16] 0.0, 128
        %3566 = vxpose.xlu0.b32.cont [12/16] 0.0, 128
        %3567 = vxpose.xlu0.b32.cont [13/16] 0.0, 128
        %3568 = vxpose.xlu0.b32.cont [14/16] 0.0, 128
        %3569 = vxpose.xlu0.b32.cont [15/16] 0.0, 128
        %3570 = vxpose.xlu0.b32.end [16/16] 0.0, 128
        %v3571 = vpop.trf.xlu0
        %v3572 = vpop.trf.xlu0
        %v3573 = vpop.trf.xlu0
        %v3574 = vpop.trf.xlu0
        %v3575 = vpop.trf.xlu0
        %v3576 = vpop.trf.xlu0
        %v3577 = vpop.trf.xlu0
        %v3578 = vpop.trf.xlu0
        %v3579 = vpop.trf.xlu0
        %v3580 = vpop.trf.xlu0
        %v3581 = vpop.trf.xlu0
        %v3582 = vpop.trf.xlu0
        %v3583 = vpop.trf.xlu0
        %v3584 = vpop.trf.xlu0
        %v3585 = vpop.trf.xlu0
        %v3586 = vpop.trf.xlu0
        %v3588 = vsel %vm593, %v3571, 0
        %v3591 = vsel %vm593, %v3572, 0
        %v3594 = vsel %vm593, %v3573, 0
        %v3597 = vsel %vm593, %v3574, 0
        %v3600 = vsel %vm593, %v3575, 0
        %v3603 = vsel %vm593, %v3576, 0
        %v3606 = vsel %vm593, %v3577, 0
        %v3609 = vsel %vm593, %v3578, 0
        %3611 = vmatprep.subr.mxu0 0.0
        %3612 = vmatpush1.msra.mxu0 %v3554
        %3613 = vmatprep.subr.mxu0 0.0
        %3614 = vmatpush1.msra.mxu0 0.0
        %3615 = vmatprep.subr.mxu0 0.0
        %3616 = vmatpush1.msra.mxu0 0.0
        %3617 = vmatprep.subr.mxu0 0.0
        %3618 = vmatpush1.msra.mxu0 0.0
        %3619 = vmatprep.subr.mxu0 0.0
        %3620 = vmatpush1.msra.mxu0 0.0
        %3621 = vmatprep.subr.mxu0 0.0
        %3622 = vmatpush1.msra.mxu0 0.0
        %3623 = vmatprep.subr.mxu0 0.0
        %3624 = vmatpush1.msra.mxu0 0.0
        %3625 = vmatprep.subr.mxu0 0.0
        %3626 = vmatpush1.msra.mxu0 0.0
        %3627 = vmatprep.subr.mxu0 0.0
        %3628 = vmatpush1.msra.mxu0 0.0
        %3629 = vmatprep.subr.mxu0 0.0
        %3630 = vmatpush1.msra.mxu0 0.0
        %3631 = vmatprep.subr.mxu0 0.0
        %3632 = vmatpush1.msra.mxu0 0.0
        %3633 = vmatprep.subr.mxu0 0.0
        %3634 = vmatpush1.msra.mxu0 0.0
        %3635 = vmatprep.subr.mxu0 0.0
        %3636 = vmatpush1.msra.mxu0 0.0
        %3637 = vmatprep.subr.mxu0 0.0
        %3638 = vmatpush1.msra.mxu0 0.0
        %3639 = vmatprep.subr.mxu0 0.0
        %3640 = vmatpush1.msra.mxu0 0.0
        %3641 = vmatprep.subr.mxu0 0.0
        %3642 = vmatpush1.msra.mxu0 0.0
        %3643 = vmatprep.subr.mxu0 0.0
        %3644 = vmatpush1.msra.mxu0 0.0
        %3645 = vmatprep.subr.mxu0 0.0
        %3646 = vmatpush1.msra.mxu0 0.0
        %3647 = vmatprep.subr.mxu0 0.0
        %3648 = vmatpush1.msra.mxu0 0.0
        %3649 = vmatprep.subr.mxu0 0.0
        %3650 = vmatpush1.msra.mxu0 0.0
        %3651 = vmatprep.subr.mxu0 0.0
        %3652 = vmatpush1.msra.mxu0 0.0
        %3653 = vmatprep.subr.mxu0 0.0
        %3654 = vmatpush1.msra.mxu0 0.0
        %3655 = vmatprep.subr.mxu0 0.0
        %3656 = vmatpush1.msra.mxu0 0.0
        %3657 = vmatprep.subr.mxu0 0.0
        %3658 = vmatpush1.msra.mxu0 0.0
        %3659 = vmatprep.subr.mxu0 0.0
        %3660 = vmatpush1.msra.mxu0 0.0
        %3661 = vmatprep.subr.mxu0 0.0
        %3662 = vmatpush1.msra.mxu0 0.0
        %3663 = vmatprep.subr.mxu0 0.0
        %3664 = vmatpush1.msra.mxu0 0.0
        %3665 = vmatprep.subr.mxu0 0.0
        %3666 = vmatpush1.msra.mxu0 0.0
        %3667 = vmatprep.subr.mxu0 0.0
        %3668 = vmatpush1.msra.mxu0 0.0
        %3669 = vmatprep.subr.mxu0 0.0
        %3670 = vmatpush1.msra.mxu0 0.0
        %3671 = vmatprep.subr.mxu0 0.0
        %3672 = vmatpush1.msra.mxu0 0.0
        %3673 = vmatprep.subr.mxu0 0.0
        %3674 = vmatpush1.msra.mxu0 0.0
        %3675 = vmatprep.mubr.f32.mxu0 0.0
        %3676 = vmatmul.mubr.f32.gmra.mrb[0].mxu0 %v3588
        %v3677 = vpop.f32.mrb[0].mxu0
        %v3678 = vadd.f32 0.0, %v3677
        %v3679 = vpop.f32.mrb[0].mxu0
        %3680 = vmatprep.mubr.f32.mxu0 0.0
        %3681 = vmatmul.mubr.f32.gmra.mrb[0].mxu0 %v3591
        %v3682 = vpop.f32.mrb[0].mxu0
        %v3683 = vadd.f32 0.0, %v3682
        %v3684 = vpop.f32.mrb[0].mxu0
        %3685 = vmatprep.mubr.f32.mxu0 0.0
        %3686 = vmatmul.mubr.f32.gmra.mrb[0].mxu0 %v3594
        %v3687 = vpop.f32.mrb[0].mxu0
        %v3688 = vadd.f32 0.0, %v3687
        %v3689 = vpop.f32.mrb[0].mxu0
        %3690 = vmatprep.mubr.f32.mxu0 0.0
        %3691 = vmatmul.mubr.f32.gmra.mrb[0].mxu0 %v3597
        %v3692 = vpop.f32.mrb[0].mxu0
        %v3693 = vadd.f32 0.0, %v3692
        %v3694 = vpop.f32.mrb[0].mxu0
        %3695 = vmatprep.mubr.f32.mxu0 0.0
        %3696 = vmatmul.mubr.f32.gmra.mrb[0].mxu0 %v3600
        %v3697 = vpop.f32.mrb[0].mxu0
        %v3698 = vadd.f32 0.0, %v3697
        %v3699 = vpop.f32.mrb[0].mxu0
        %3700 = vmatprep.mubr.f32.mxu0 0.0
        %3701 = vmatmul.mubr.f32.gmra.mrb[0].mxu0 %v3603
        %v3702 = vpop.f32.mrb[0].mxu0
        %v3703 = vadd.f32 0.0, %v3702
        %v3704 = vpop.f32.mrb[0].mxu0
        %3705 = vmatprep.mubr.f32.mxu0 0.0
        %3706 = vmatmul.mubr.f32.gmra.mrb[0].mxu0 %v3606
        %v3707 = vpop.f32.mrb[0].mxu0
        %v3708 = vadd.f32 0.0, %v3707
        %v3709 = vpop.f32.mrb[0].mxu0
        %3710 = vmatprep.mubr.f32.mxu0 0.0
        %3711 = vmatmul.mubr.f32.gmra.mrb[0].mxu0 %v3609
        %v3712 = vpop.f32.mrb[0].mxu0
        %v3713 = vadd.f32 0.0, %v3712
        %v3714 = vpop.f32.mrb[0].mxu0
        %3715 = vdwg.mxu0
        %v3716 = vsel %vm362, %v3554, 0.0
        %v3717 = vrot.slane %v3716, 4
        %v3718 = vadd.f32 %v3716, %v3717
        %v3719 = vrot.slane %v3718, 2
        %v3720 = vadd.f32 %v3718, %v3719
        %v3721 = vrot.slane %v3720, 1
        %v3722 = vadd.f32 %v3720, %v3721
        %v3724 = vsel %vm362, %v3554, 0
        %v3727 = vsel %vm362, %v2752, 0
        %v3730 = vsel %vm362, %v2753, 0
        %v3733 = vsel %vm362, %v2754, 0
        %v3736 = vsel %vm362, %v2755, 0
        %v3739 = vsel %vm362, %v2756, 0
        %v3742 = vsel %vm362, %v2757, 0
        %v3745 = vsel %vm362, %v2758, 0
        %v3748 = vsel %vm362, %v2759, 0
        %3750 = vmatprep.subr.mxu0 0.0
        %3751 = vmatpush1.xpose.msra.mxu0 %v3727
        %3752 = vmatprep.subr.mxu0 0.0
        %3753 = vmatpush1.xpose.msra.mxu0 %v3730
        %3754 = vmatprep.subr.mxu0 0.0
        %3755 = vmatpush1.xpose.msra.mxu0 %v3733
        %3756 = vmatprep.subr.mxu0 0.0
        %3757 = vmatpush1.xpose.msra.mxu0 %v3736
        %3758 = vmatprep.subr.mxu0 0.0
        %3759 = vmatpush1.xpose.msra.mxu0 %v3739
        %3760 = vmatprep.subr.mxu0 0.0
        %3761 = vmatpush1.xpose.msra.mxu0 %v3742
        %3762 = vmatprep.subr.mxu0 0.0
        %3763 = vmatpush1.xpose.msra.mxu0 %v3745
        %3764 = vmatprep.subr.mxu0 0.0
        %3765 = vmatpush1.xpose.msra.mxu0 %v3748
        %3766 = vmatprep.subr.mxu0 0.0
        %3767 = vmatpush1.xpose.msra.mxu0 0.0
        %3768 = vmatprep.subr.mxu0 0.0
        %3769 = vmatpush1.xpose.msra.mxu0 0.0
        %3770 = vmatprep.subr.mxu0 0.0
        %3771 = vmatpush1.xpose.msra.mxu0 0.0
        %3772 = vmatprep.subr.mxu0 0.0
        %3773 = vmatpush1.xpose.msra.mxu0 0.0
        %3774 = vmatprep.subr.mxu0 0.0
        %3775 = vmatpush1.xpose.msra.mxu0 0.0
        %3776 = vmatprep.subr.mxu0 0.0
        %3777 = vmatpush1.xpose.msra.mxu0 0.0
        %3778 = vmatprep.subr.mxu0 0.0
        %3779 = vmatpush1.xpose.msra.mxu0 0.0
        %3780 = vmatprep.subr.mxu0 0.0
        %3781 = vmatpush1.xpose.msra.mxu0 0.0
        %3782 = vmatprep.subr.mxu0 0.0
        %3783 = vmatpush1.xpose.msra.mxu0 0.0
        %3784 = vmatprep.subr.mxu0 0.0
        %3785 = vmatpush1.xpose.msra.mxu0 0.0
        %3786 = vmatprep.subr.mxu0 0.0
        %3787 = vmatpush1.xpose.msra.mxu0 0.0
        %3788 = vmatprep.subr.mxu0 0.0
        %3789 = vmatpush1.xpose.msra.mxu0 0.0
        %3790 = vmatprep.subr.mxu0 0.0
        %3791 = vmatpush1.xpose.msra.mxu0 0.0
        %3792 = vmatprep.subr.mxu0 0.0
        %3793 = vmatpush1.xpose.msra.mxu0 0.0
        %3794 = vmatprep.subr.mxu0 0.0
        %3795 = vmatpush1.xpose.msra.mxu0 0.0
        %3796 = vmatprep.subr.mxu0 0.0
        %3797 = vmatpush1.xpose.msra.mxu0 0.0
        %3798 = vmatprep.subr.mxu0 0.0
        %3799 = vmatpush1.xpose.msra.mxu0 0.0
        %3800 = vmatprep.subr.mxu0 0.0
        %3801 = vmatpush1.xpose.msra.mxu0 0.0
        %3802 = vmatprep.subr.mxu0 0.0
        %3803 = vmatpush1.xpose.msra.mxu0 0.0
        %3804 = vmatprep.subr.mxu0 0.0
        %3805 = vmatpush1.xpose.msra.mxu0 0.0
        %3806 = vmatprep.subr.mxu0 0.0
        %3807 = vmatpush1.xpose.msra.mxu0 0.0
        %3808 = vmatprep.subr.mxu0 0.0
        %3809 = vmatpush1.xpose.msra.mxu0 0.0
        %3810 = vmatprep.subr.mxu0 0.0
        %3811 = vmatpush1.xpose.msra.mxu0 0.0
        %3812 = vmatprep.subr.mxu0 0.0
        %3813 = vmatpush1.xpose.msra.mxu0 0.0
        %3814 = vmatprep.mubr.f32.mxu0 0.0
        %3815 = vmatmul.mubr.f32.gmra.mrb[0].mxu0 %v3724
        %v3816 = vpop.f32.mrb[0].mxu0
        %v3817 = vadd.f32 0.0, %v3816
        %v3818 = vpop.f32.mrb[0].mxu0
        %3819 = vdwg.mxu0
        %vm3820 = vcmp.gt.f32.partialorder %v3429, 0.0
        %v3821 = vsel %vm3820, %v3817, 0.0
        %3822 = vmatprep.subr.mxu0 0.0
        %3823 = vmatpush1.msra.mxu0 %v3821
        %3824 = vmatprep.subr.mxu0 0.0
        %3825 = vmatpush1.msra.mxu0 0.0
        %3826 = vmatprep.subr.mxu0 0.0
        %3827 = vmatpush1.msra.mxu0 0.0
        %3828 = vmatprep.subr.mxu0 0.0
        %3829 = vmatpush1.msra.mxu0 0.0
        %3830 = vmatprep.subr.mxu0 0.0
        %3831 = vmatpush1.msra.mxu0 0.0
        %3832 = vmatprep.subr.mxu0 0.0
        %3833 = vmatpush1.msra.mxu0 0.0
        %3834 = vmatprep.subr.mxu0 0.0
        %3835 = vmatpush1.msra.mxu0 0.0
        %3836 = vmatprep.subr.mxu0 0.0
        %3837 = vmatpush1.msra.mxu0 0.0
        %3838 = vmatprep.subr.mxu0 0.0
        %3839 = vmatpush1.msra.mxu0 0.0
        %3840 = vmatprep.subr.mxu0 0.0
        %3841 = vmatpush1.msra.mxu0 0.0
        %3842 = vmatprep.subr.mxu0 0.0
        %3843 = vmatpush1.msra.mxu0 0.0
        %3844 = vmatprep.subr.mxu0 0.0
        %3845 = vmatpush1.msra.mxu0 0.0
        %3846 = vmatprep.subr.mxu0 0.0
        %3847 = vmatpush1.msra.mxu0 0.0
        %3848 = vmatprep.subr.mxu0 0.0
        %3849 = vmatpush1.msra.mxu0 0.0
        %3850 = vmatprep.subr.mxu0 0.0
        %3851 = vmatpush1.msra.mxu0 0.0
        %3852 = vmatprep.subr.mxu0 0.0
        %3853 = vmatpush1.msra.mxu0 0.0
        %3854 = vmatprep.subr.mxu0 0.0
        %3855 = vmatpush1.msra.mxu0 0.0
        %3856 = vmatprep.subr.mxu0 0.0
        %3857 = vmatpush1.msra.mxu0 0.0
        %3858 = vmatprep.subr.mxu0 0.0
        %3859 = vmatpush1.msra.mxu0 0.0
        %3860 = vmatprep.subr.mxu0 0.0
        %3861 = vmatpush1.msra.mxu0 0.0
        %3862 = vmatprep.subr.mxu0 0.0
        %3863 = vmatpush1.msra.mxu0 0.0
        %3864 = vmatprep.subr.mxu0 0.0
        %3865 = vmatpush1.msra.mxu0 0.0
        %3866 = vmatprep.subr.mxu0 0.0
        %3867 = vmatpush1.msra.mxu0 0.0
        %3868 = vmatprep.subr.mxu0 0.0
        %3869 = vmatpush1.msra.mxu0 0.0
        %3870 = vmatprep.subr.mxu0 0.0
        %3871 = vmatpush1.msra.mxu0 0.0
        %3872 = vmatprep.subr.mxu0 0.0
        %3873 = vmatpush1.msra.mxu0 0.0
        %3874 = vmatprep.subr.mxu0 0.0
        %3875 = vmatpush1.msra.mxu0 0.0
        %3876 = vmatprep.subr.mxu0 0.0
        %3877 = vmatpush1.msra.mxu0 0.0
        %3878 = vmatprep.subr.mxu0 0.0
        %3879 = vmatpush1.msra.mxu0 0.0
        %3880 = vmatprep.subr.mxu0 0.0
        %3881 = vmatpush1.msra.mxu0 0.0
        %3882 = vmatprep.subr.mxu0 0.0
        %3883 = vmatpush1.msra.mxu0 0.0
        %3884 = vmatprep.subr.mxu0 0.0
        %3885 = vmatpush1.msra.mxu0 0.0
        %3886 = vmatprep.mubr.f32.mxu0 0.0
        %3887 = vmatmul.mubr.f32.gmra.mrb[0].mxu0 %v1451
        %v3888 = vpop.f32.mrb[0].mxu0
        %v3889 = vadd.f32 0.0, %v3888
        %v3890 = vpop.f32.mrb[0].mxu0
        %3891 = vmatprep.mubr.f32.mxu0 0.0
        %3892 = vmatmul.mubr.f32.gmra.mrb[0].mxu0 %v1454
        %v3893 = vpop.f32.mrb[0].mxu0
        %v3894 = vadd.f32 0.0, %v3893
        %v3895 = vpop.f32.mrb[0].mxu0
        %3896 = vmatprep.mubr.f32.mxu0 0.0
        %3897 = vmatmul.mubr.f32.gmra.mrb[0].mxu0 %v1457
        %v3898 = vpop.f32.mrb[0].mxu0
        %v3899 = vadd.f32 0.0, %v3898
        %v3900 = vpop.f32.mrb[0].mxu0
        %3901 = vmatprep.mubr.f32.mxu0 0.0
        %3902 = vmatmul.mubr.f32.gmra.mrb[0].mxu0 %v1460
        %v3903 = vpop.f32.mrb[0].mxu0
        %v3904 = vadd.f32 0.0, %v3903
        %v3905 = vpop.f32.mrb[0].mxu0
        %3906 = vdwg.mxu0
        %v3907 = vsel %vm443, %v3821, 0.0
        %v3908 = vrot.slane %v3907, 4
        %v3909 = vadd.f32 %v3907, %v3908
        %v3910 = vrot.slane %v3909, 2
        %v3911 = vadd.f32 %v3909, %v3910
        %v3912 = vrot.slane %v3911, 1
        %v3913 = vadd.f32 %v3911, %v3912
        %v3914 = vmul.f32 %v3889, 0.01
        %v3915 = vmul.f32 %v3894, 0.01
        %v3916 = vmul.f32 %v3899, 0.01
        %v3917 = vmul.f32 %v3904, 0.01
        %v3918 = vsub.f32 %v2738, %v3914
        %v3919 = vsub.f32 %v2739, %v3915
        %v3920 = vsub.f32 %v2740, %v3916
        %v3921 = vsub.f32 %v2741, %v3917
        %v3922 = vmul.f32 %v3913, 0.01
        %v3923 = vsub.f32 %v2743, %v3922
        %v3924 = vmul.f32 %v3678, 0.01
        %v3925 = vmul.f32 %v3683, 0.01
        %v3926 = vmul.f32 %v3688, 0.01
        %v3927 = vmul.f32 %v3693, 0.01
        %v3928 = vmul.f32 %v3698, 0.01
        %v3929 = vmul.f32 %v3703, 0.01
        %v3930 = vmul.f32 %v3708, 0.01
        %v3931 = vmul.f32 %v3713, 0.01
        %v3932 = vsub.f32 %v2752, %v3924
        %v3933 = vsub.f32 %v2753, %v3925
        %v3934 = vsub.f32 %v2754, %v3926
        %v3935 = vsub.f32 %v2755, %v3927
        %v3936 = vsub.f32 %v2756, %v3928
        %v3937 = vsub.f32 %v2757, %v3929
        %v3938 = vsub.f32 %v2758, %v3930
        %v3939 = vsub.f32 %v2759, %v3931
        %v3940 = vmul.f32 %v3722, 0.01
        %v3941 = vsub.f32 %v2761, %v3940
        %v3942 = vmul.f32 %v3544, 0.01
        %v3943 = vsub.f32 %v2763, %v3942
        %v3944 = vmul.f32 %v3551, 0.01
        %v3945 = vsub.f32 %v2765, %v3944
        %v3947 = vlaneseq
        %v3948 = vshrl.u32 %v3947, 7
        %v3949 = vsub.s32 0, %v3948
        %v3950 = vrot.slane %v3333, %v3949
        %v3953 = vsel %vm362, %v349, 0
        %3955 = vmatprep.subr.mxu0 0.0
        %3956 = vmatpush1.msra.mxu0 %v3328
        %3957 = vmatprep.subr.mxu0 0.0
        %3958 = vmatpush1.msra.mxu0 %v3329
        %3959 = vmatprep.subr.mxu0 0.0
        %3960 = vmatpush1.msra.mxu0 %v3330
        %3961 = vmatprep.subr.mxu0 0.0
        %3962 = vmatpush1.msra.mxu0 %v3331
        %3963 = vmatprep.subr.mxu0 0.0
        %3964 = vmatpush1.msra.mxu0 0.0
        %3965 = vmatprep.subr.mxu0 0.0
        %3966 = vmatpush1.msra.mxu0 0.0
        %3967 = vmatprep.subr.mxu0 0.0
        %3968 = vmatpush1.msra.mxu0 0.0
        %3969 = vmatprep.subr.mxu0 0.0
        %3970 = vmatpush1.msra.mxu0 0.0
        %3971 = vmatprep.subr.mxu0 0.0
        %3972 = vmatpush1.msra.mxu0 0.0
        %3973 = vmatprep.subr.mxu0 0.0
        %3974 = vmatpush1.msra.mxu0 0.0
        %3975 = vmatprep.subr.mxu0 0.0
        %3976 = vmatpush1.msra.mxu0 0.0
        %3977 = vmatprep.subr.mxu0 0.0
        %3978 = vmatpush1.msra.mxu0 0.0
        %3979 = vmatprep.subr.mxu0 0.0
        %3980 = vmatpush1.msra.mxu0 0.0
        %3981 = vmatprep.subr.mxu0 0.0
        %3982 = vmatpush1.msra.mxu0 0.0
        %3983 = vmatprep.subr.mxu0 0.0
        %3984 = vmatpush1.msra.mxu0 0.0
        %3985 = vmatprep.subr.mxu0 0.0
        %3986 = vmatpush1.msra.mxu0 0.0
        %3987 = vmatprep.subr.mxu0 0.0
        %3988 = vmatpush1.msra.mxu0 0.0
        %3989 = vmatprep.subr.mxu0 0.0
        %3990 = vmatpush1.msra.mxu0 0.0
        %3991 = vmatprep.subr.mxu0 0.0
        %3992 = vmatpush1.msra.mxu0 0.0
        %3993 = vmatprep.subr.mxu0 0.0
        %3994 = vmatpush1.msra.mxu0 0.0
        %3995 = vmatprep.subr.mxu0 0.0
        %3996 = vmatpush1.msra.mxu0 0.0
        %3997 = vmatprep.subr.mxu0 0.0
        %3998 = vmatpush1.msra.mxu0 0.0
        %3999 = vmatprep.subr.mxu0 0.0
        %4000 = vmatpush1.msra.mxu0 0.0
        %4001 = vmatprep.subr.mxu0 0.0
        %4002 = vmatpush1.msra.mxu0 0.0
        %4003 = vmatprep.subr.mxu0 0.0
        %4004 = vmatpush1.msra.mxu0 0.0
        %4005 = vmatprep.subr.mxu0 0.0
        %4006 = vmatpush1.msra.mxu0 0.0
        %4007 = vmatprep.subr.mxu0 0.0
        %4008 = vmatpush1.msra.mxu0 0.0
        %4009 = vmatprep.subr.mxu0 0.0
        %4010 = vmatpush1.msra.mxu0 0.0
        %4011 = vmatprep.subr.mxu0 0.0
        %4012 = vmatpush1.msra.mxu0 0.0
        %4013 = vmatprep.subr.mxu0 0.0
        %4014 = vmatpush1.msra.mxu0 0.0
        %4015 = vmatprep.subr.mxu0 0.0
        %4016 = vmatpush1.msra.mxu0 0.0
        %4017 = vmatprep.subr.mxu0 0.0
        %4018 = vmatpush1.msra.mxu0 0.0
        %4019 = vmatprep.mubr.f32.mxu0 0.0
        %4020 = vmatmul.mubr.f32.gmra.mrb[0].mxu0 %v3953
        %v4021 = vpop.f32.mrb[0].mxu0
        %v4022 = vadd.f32 %v3950, %v4021
        %v4023 = vpop.f32.mrb[0].mxu0
        %4024 = vdwg.mxu0
        %v4025 = vmax.f32 %v4022, 0.0
        %v4027 = vlaneseq
        %v4028 = vshrl.u32 %v4027, 7
        %v4029 = vsub.s32 0, %v4028
        %v4030 = vrot.slane %v3351, %v4029
        %v4033 = vsel %vm443, %v4025, 0
        %4035 = vmatprep.subr.mxu0 0.0
        %4036 = vmatpush1.msra.mxu0 %v3342
        %4037 = vmatprep.subr.mxu0 0.0
        %4038 = vmatpush1.msra.mxu0 %v3343
        %4039 = vmatprep.subr.mxu0 0.0
        %4040 = vmatpush1.msra.mxu0 %v3344
        %4041 = vmatprep.subr.mxu0 0.0
        %4042 = vmatpush1.msra.mxu0 %v3345
        %4043 = vmatprep.subr.mxu0 0.0
        %4044 = vmatpush1.msra.mxu0 %v3346
        %4045 = vmatprep.subr.mxu0 0.0
        %4046 = vmatpush1.msra.mxu0 %v3347
        %4047 = vmatprep.subr.mxu0 0.0
        %4048 = vmatpush1.msra.mxu0 %v3348
        %4049 = vmatprep.subr.mxu0 0.0
        %4050 = vmatpush1.msra.mxu0 %v3349
        %4051 = vmatprep.subr.mxu0 0.0
        %4052 = vmatpush1.msra.mxu0 0.0
        %4053 = vmatprep.subr.mxu0 0.0
        %4054 = vmatpush1.msra.mxu0 0.0
        %4055 = vmatprep.subr.mxu0 0.0
        %4056 = vmatpush1.msra.mxu0 0.0
        %4057 = vmatprep.subr.mxu0 0.0
        %4058 = vmatpush1.msra.mxu0 0.0
        %4059 = vmatprep.subr.mxu0 0.0
        %4060 = vmatpush1.msra.mxu0 0.0
        %4061 = vmatprep.subr.mxu0 0.0
        %4062 = vmatpush1.msra.mxu0 0.0
        %4063 = vmatprep.subr.mxu0 0.0
        %4064 = vmatpush1.msra.mxu0 0.0
        %4065 = vmatprep.subr.mxu0 0.0
        %4066 = vmatpush1.msra.mxu0 0.0
        %4067 = vmatprep.subr.mxu0 0.0
        %4068 = vmatpush1.msra.mxu0 0.0
        %4069 = vmatprep.subr.mxu0 0.0
        %4070 = vmatpush1.msra.mxu0 0.0
        %4071 = vmatprep.subr.mxu0 0.0
        %4072 = vmatpush1.msra.mxu0 0.0
        %4073 = vmatprep.subr.mxu0 0.0
        %4074 = vmatpush1.msra.mxu0 0.0
        %4075 = vmatprep.subr.mxu0 0.0
        %4076 = vmatpush1.msra.mxu0 0.0
        %4077 = vmatprep.subr.mxu0 0.0
        %4078 = vmatpush1.msra.mxu0 0.0
        %4079 = vmatprep.subr.mxu0 0.0
        %4080 = vmatpush1.msra.mxu0 0.0
        %4081 = vmatprep.subr.mxu0 0.0
        %4082 = vmatpush1.msra.mxu0 0.0
        %4083 = vmatprep.subr.mxu0 0.0
        %4084 = vmatpush1.msra.mxu0 0.0
        %4085 = vmatprep.subr.mxu0 0.0
        %4086 = vmatpush1.msra.mxu0 0.0
        %4087 = vmatprep.subr.mxu0 0.0
        %4088 = vmatpush1.msra.mxu0 0.0
        %4089 = vmatprep.subr.mxu0 0.0
        %4090 = vmatpush1.msra.mxu0 0.0
        %4091 = vmatprep.subr.mxu0 0.0
        %4092 = vmatpush1.msra.mxu0 0.0
        %4093 = vmatprep.subr.mxu0 0.0
        %4094 = vmatpush1.msra.mxu0 0.0
        %4095 = vmatprep.subr.mxu0 0.0
        %4096 = vmatpush1.msra.mxu0 0.0
        %4097 = vmatprep.subr.mxu0 0.0
        %4098 = vmatpush1.msra.mxu0 0.0
        %4099 = vmatprep.mubr.f32.mxu0 0.0
        %4100 = vmatmul.mubr.f32.gmra.mrb[0].mxu0 %v4033
        %v4101 = vpop.f32.mrb[0].mxu0
        %v4102 = vadd.f32 %v4030, %v4101
        %v4103 = vpop.f32.mrb[0].mxu0
        %4104 = vdwg.mxu0
        %v4105 = vmax.f32 %v4102, 0.0
        %4107 = vset.pattern.permute.xlu0 0
        %4108 = vperm.xlu0 %4107, %v3355
        %v4109 = vpop.permute.xlu0 %4108
        %v4111 = vlaneseq
        %v4112 = vshrl.u32 %v4111, 7
        %v4113 = vsub.s32 0, %v4112
        %v4114 = vrot.slane %v4109, %v4113
        %v4116 = vsel %vm362, %v3353, 0
        %v4119 = vsel %vm362, %v4105, 0
        %4121 = vmatprep.subr.mxu0 0.0
        %4122 = vmatpush1.xpose.msra.mxu0 %v4119
        %4123 = vmatprep.subr.mxu0 0.0
        %4124 = vmatpush1.xpose.msra.mxu0 0.0
        %4125 = vmatprep.subr.mxu0 0.0
        %4126 = vmatpush1.xpose.msra.mxu0 0.0
        %4127 = vmatprep.subr.mxu0 0.0
        %4128 = vmatpush1.xpose.msra.mxu0 0.0
        %4129 = vmatprep.subr.mxu0 0.0
        %4130 = vmatpush1.xpose.msra.mxu0 0.0
        %4131 = vmatprep.subr.mxu0 0.0
        %4132 = vmatpush1.xpose.msra.mxu0 0.0
        %4133 = vmatprep.subr.mxu0 0.0
        %4134 = vmatpush1.xpose.msra.mxu0 0.0
        %4135 = vmatprep.subr.mxu0 0.0
        %4136 = vmatpush1.xpose.msra.mxu0 0.0
        %4137 = vmatprep.subr.mxu0 0.0
        %4138 = vmatpush1.xpose.msra.mxu0 0.0
        %4139 = vmatprep.subr.mxu0 0.0
        %4140 = vmatpush1.xpose.msra.mxu0 0.0
        %4141 = vmatprep.subr.mxu0 0.0
        %4142 = vmatpush1.xpose.msra.mxu0 0.0
        %4143 = vmatprep.subr.mxu0 0.0
        %4144 = vmatpush1.xpose.msra.mxu0 0.0
        %4145 = vmatprep.subr.mxu0 0.0
        %4146 = vmatpush1.xpose.msra.mxu0 0.0
        %4147 = vmatprep.subr.mxu0 0.0
        %4148 = vmatpush1.xpose.msra.mxu0 0.0
        %4149 = vmatprep.subr.mxu0 0.0
        %4150 = vmatpush1.xpose.msra.mxu0 0.0
        %4151 = vmatprep.subr.mxu0 0.0
        %4152 = vmatpush1.xpose.msra.mxu0 0.0
        %4153 = vmatprep.subr.mxu0 0.0
        %4154 = vmatpush1.xpose.msra.mxu0 0.0
        %4155 = vmatprep.subr.mxu0 0.0
        %4156 = vmatpush1.xpose.msra.mxu0 0.0
        %4157 = vmatprep.subr.mxu0 0.0
        %4158 = vmatpush1.xpose.msra.mxu0 0.0
        %4159 = vmatprep.subr.mxu0 0.0
        %4160 = vmatpush1.xpose.msra.mxu0 0.0
        %4161 = vmatprep.subr.mxu0 0.0
        %4162 = vmatpush1.xpose.msra.mxu0 0.0
        %4163 = vmatprep.subr.mxu0 0.0
        %4164 = vmatpush1.xpose.msra.mxu0 0.0
        %4165 = vmatprep.subr.mxu0 0.0
        %4166 = vmatpush1.xpose.msra.mxu0 0.0
        %4167 = vmatprep.subr.mxu0 0.0
        %4168 = vmatpush1.xpose.msra.mxu0 0.0
        %4169 = vmatprep.subr.mxu0 0.0
        %4170 = vmatpush1.xpose.msra.mxu0 0.0
        %4171 = vmatprep.subr.mxu0 0.0
        %4172 = vmatpush1.xpose.msra.mxu0 0.0
        %4173 = vmatprep.subr.mxu0 0.0
        %4174 = vmatpush1.xpose.msra.mxu0 0.0
        %4175 = vmatprep.subr.mxu0 0.0
        %4176 = vmatpush1.xpose.msra.mxu0 0.0
        %4177 = vmatprep.subr.mxu0 0.0
        %4178 = vmatpush1.xpose.msra.mxu0 0.0
        %4179 = vmatprep.subr.mxu0 0.0
        %4180 = vmatpush1.xpose.msra.mxu0 0.0
        %4181 = vmatprep.subr.mxu0 0.0
        %4182 = vmatpush1.xpose.msra.mxu0 0.0
        %4183 = vmatprep.subr.mxu0 0.0
        %4184 = vmatpush1.xpose.msra.mxu0 0.0
        %4185 = vmatprep.mubr.f32.mxu0 0.0
        %4186 = vmatmul.mubr.f32.gmra.mrb[0].mxu0 %v4116
        %v4187 = vpop.f32.mrb[0].mxu0
        %v4188 = vadd.f32 %v4114, %v4187
        %v4189 = vpop.f32.mrb[0].mxu0
        %4190 = vdwg.mxu0
        %vm4191 = vcmask 57344
        %4192 = vst.msk [vmem:[%s318] sm:$0x1] %vm4191, %v4188
        %v4194 = vlaneseq
        %v4195 = vshrl.u32 %v4194, 7
        %v4196 = vsub.s32 0, %v4195
        %v4197 = vrot.slane %v3923, %v4196
        %v4200 = vsel %vm362, %v353, 0
        %4202 = vmatprep.subr.mxu0 0.0
        %4203 = vmatpush1.msra.mxu0 %v3918
        %4204 = vmatprep.subr.mxu0 0.0
        %4205 = vmatpush1.msra.mxu0 %v3919
        %4206 = vmatprep.subr.mxu0 0.0
        %4207 = vmatpush1.msra.mxu0 %v3920
        %4208 = vmatprep.subr.mxu0 0.0
        %4209 = vmatpush1.msra.mxu0 %v3921
        %4210 = vmatprep.subr.mxu0 0.0
        %4211 = vmatpush1.msra.mxu0 0.0
        %4212 = vmatprep.subr.mxu0 0.0
        %4213 = vmatpush1.msra.mxu0 0.0
        %4214 = vmatprep.subr.mxu0 0.0
        %4215 = vmatpush1.msra.mxu0 0.0
        %4216 = vmatprep.subr.mxu0 0.0
        %4217 = vmatpush1.msra.mxu0 0.0
        %4218 = vmatprep.subr.mxu0 0.0
        %4219 = vmatpush1.msra.mxu0 0.0
        %4220 = vmatprep.subr.mxu0 0.0
        %4221 = vmatpush1.msra.mxu0 0.0
        %4222 = vmatprep.subr.mxu0 0.0
        %4223 = vmatpush1.msra.mxu0 0.0
        %4224 = vmatprep.subr.mxu0 0.0
        %4225 = vmatpush1.msra.mxu0 0.0
        %4226 = vmatprep.subr.mxu0 0.0
        %4227 = vmatpush1.msra.mxu0 0.0
        %4228 = vmatprep.subr.mxu0 0.0
        %4229 = vmatpush1.msra.mxu0 0.0
        %4230 = vmatprep.subr.mxu0 0.0
        %4231 = vmatpush1.msra.mxu0 0.0
        %4232 = vmatprep.subr.mxu0 0.0
        %4233 = vmatpush1.msra.mxu0 0.0
        %4234 = vmatprep.subr.mxu0 0.0
        %4235 = vmatpush1.msra.mxu0 0.0
        %4236 = vmatprep.subr.mxu0 0.0
        %4237 = vmatpush1.msra.mxu0 0.0
        %4238 = vmatprep.subr.mxu0 0.0
        %4239 = vmatpush1.msra.mxu0 0.0
        %4240 = vmatprep.subr.mxu0 0.0
        %4241 = vmatpush1.msra.mxu0 0.0
        %4242 = vmatprep.subr.mxu0 0.0
        %4243 = vmatpush1.msra.mxu0 0.0
        %4244 = vmatprep.subr.mxu0 0.0
        %4245 = vmatpush1.msra.mxu0 0.0
        %4246 = vmatprep.subr.mxu0 0.0
        %4247 = vmatpush1.msra.mxu0 0.0
        %4248 = vmatprep.subr.mxu0 0.0
        %4249 = vmatpush1.msra.mxu0 0.0
        %4250 = vmatprep.subr.mxu0 0.0
        %4251 = vmatpush1.msra.mxu0 0.0
        %4252 = vmatprep.subr.mxu0 0.0
        %4253 = vmatpush1.msra.mxu0 0.0
        %4254 = vmatprep.subr.mxu0 0.0
        %4255 = vmatpush1.msra.mxu0 0.0
        %4256 = vmatprep.subr.mxu0 0.0
        %4257 = vmatpush1.msra.mxu0 0.0
        %4258 = vmatprep.subr.mxu0 0.0
        %4259 = vmatpush1.msra.mxu0 0.0
        %4260 = vmatprep.subr.mxu0 0.0
        %4261 = vmatpush1.msra.mxu0 0.0
        %4262 = vmatprep.subr.mxu0 0.0
        %4263 = vmatpush1.msra.mxu0 0.0
        %4264 = vmatprep.subr.mxu0 0.0
        %4265 = vmatpush1.msra.mxu0 0.0
        %4266 = vmatprep.mubr.f32.mxu0 0.0
        %4267 = vmatmul.mubr.f32.gmra.mrb[0].mxu0 %v4200
        %v4268 = vpop.f32.mrb[0].mxu0
        %v4269 = vadd.f32 %v4197, %v4268
        %v4270 = vpop.f32.mrb[0].mxu0
        %4271 = vdwg.mxu0
        %v4272 = vmax.f32 %v4269, 0.0
        %v4274 = vlaneseq
        %v4275 = vshrl.u32 %v4274, 7
        %v4276 = vsub.s32 0, %v4275
        %v4277 = vrot.slane %v3941, %v4276
        %v4280 = vsel %vm443, %v4272, 0
        %4282 = vmatprep.subr.mxu0 0.0
        %4283 = vmatpush1.msra.mxu0 %v3932
        %4284 = vmatprep.subr.mxu0 0.0
        %4285 = vmatpush1.msra.mxu0 %v3933
        %4286 = vmatprep.subr.mxu0 0.0
        %4287 = vmatpush1.msra.mxu0 %v3934
        %4288 = vmatprep.subr.mxu0 0.0
        %4289 = vmatpush1.msra.mxu0 %v3935
        %4290 = vmatprep.subr.mxu0 0.0
        %4291 = vmatpush1.msra.mxu0 %v3936
        %4292 = vmatprep.subr.mxu0 0.0
        %4293 = vmatpush1.msra.mxu0 %v3937
        %4294 = vmatprep.subr.mxu0 0.0
        %4295 = vmatpush1.msra.mxu0 %v3938
        %4296 = vmatprep.subr.mxu0 0.0
        %4297 = vmatpush1.msra.mxu0 %v3939
        %4298 = vmatprep.subr.mxu0 0.0
        %4299 = vmatpush1.msra.mxu0 0.0
        %4300 = vmatprep.subr.mxu0 0.0
        %4301 = vmatpush1.msra.mxu0 0.0
        %4302 = vmatprep.subr.mxu0 0.0
        %4303 = vmatpush1.msra.mxu0 0.0
        %4304 = vmatprep.subr.mxu0 0.0
        %4305 = vmatpush1.msra.mxu0 0.0
        %4306 = vmatprep.subr.mxu0 0.0
        %4307 = vmatpush1.msra.mxu0 0.0
        %4308 = vmatprep.subr.mxu0 0.0
        %4309 = vmatpush1.msra.mxu0 0.0
        %4310 = vmatprep.subr.mxu0 0.0
        %4311 = vmatpush1.msra.mxu0 0.0
        %4312 = vmatprep.subr.mxu0 0.0
        %4313 = vmatpush1.msra.mxu0 0.0
        %4314 = vmatprep.subr.mxu0 0.0
        %4315 = vmatpush1.msra.mxu0 0.0
        %4316 = vmatprep.subr.mxu0 0.0
        %4317 = vmatpush1.msra.mxu0 0.0
        %4318 = vmatprep.subr.mxu0 0.0
        %4319 = vmatpush1.msra.mxu0 0.0
        %4320 = vmatprep.subr.mxu0 0.0
        %4321 = vmatpush1.msra.mxu0 0.0
        %4322 = vmatprep.subr.mxu0 0.0
        %4323 = vmatpush1.msra.mxu0 0.0
        %4324 = vmatprep.subr.mxu0 0.0
        %4325 = vmatpush1.msra.mxu0 0.0
        %4326 = vmatprep.subr.mxu0 0.0
        %4327 = vmatpush1.msra.mxu0 0.0
        %4328 = vmatprep.subr.mxu0 0.0
        %4329 = vmatpush1.msra.mxu0 0.0
        %4330 = vmatprep.subr.mxu0 0.0
        %4331 = vmatpush1.msra.mxu0 0.0
        %4332 = vmatprep.subr.mxu0 0.0
        %4333 = vmatpush1.msra.mxu0 0.0
        %4334 = vmatprep.subr.mxu0 0.0
        %4335 = vmatpush1.msra.mxu0 0.0
        %4336 = vmatprep.subr.mxu0 0.0
        %4337 = vmatpush1.msra.mxu0 0.0
        %4338 = vmatprep.subr.mxu0 0.0
        %4339 = vmatpush1.msra.mxu0 0.0
        %4340 = vmatprep.subr.mxu0 0.0
        %4341 = vmatpush1.msra.mxu0 0.0
        %4342 = vmatprep.subr.mxu0 0.0
        %4343 = vmatpush1.msra.mxu0 0.0
        %4344 = vmatprep.subr.mxu0 0.0
        %4345 = vmatpush1.msra.mxu0 0.0
        %4346 = vmatprep.mubr.f32.mxu0 0.0
        %4347 = vmatmul.mubr.f32.gmra.mrb[0].mxu0 %v4280
        %v4348 = vpop.f32.mrb[0].mxu0
        %v4349 = vadd.f32 %v4277, %v4348
        %v4350 = vpop.f32.mrb[0].mxu0
        %4351 = vdwg.mxu0
        %v4352 = vmax.f32 %v4349, 0.0
        %4354 = vset.pattern.permute.xlu0 0
        %4355 = vperm.xlu0 %4354, %v3945
        %v4356 = vpop.permute.xlu0 %4355
        %v4358 = vlaneseq
        %v4359 = vshrl.u32 %v4358, 7
        %v4360 = vsub.s32 0, %v4359
        %v4361 = vrot.slane %v4356, %v4360
        %v4363 = vsel %vm362, %v3943, 0
        %v4366 = vsel %vm362, %v4352, 0
        %4368 = vmatprep.subr.mxu0 0.0
        %4369 = vmatpush1.xpose.msra.mxu0 %v4366
        %4370 = vmatprep.subr.mxu0 0.0
        %4371 = vmatpush1.xpose.msra.mxu0 0.0
        %4372 = vmatprep.subr.mxu0 0.0
        %4373 = vmatpush1.xpose.msra.mxu0 0.0
        %4374 = vmatprep.subr.mxu0 0.0
        %4375 = vmatpush1.xpose.msra.mxu0 0.0
        %4376 = vmatprep.subr.mxu0 0.0
        %4377 = vmatpush1.xpose.msra.mxu0 0.0
        %4378 = vmatprep.subr.mxu0 0.0
        %4379 = vmatpush1.xpose.msra.mxu0 0.0
        %4380 = vmatprep.subr.mxu0 0.0
        %4381 = vmatpush1.xpose.msra.mxu0 0.0
        %4382 = vmatprep.subr.mxu0 0.0
        %4383 = vmatpush1.xpose.msra.mxu0 0.0
        %4384 = vmatprep.subr.mxu0 0.0
        %4385 = vmatpush1.xpose.msra.mxu0 0.0
        %4386 = vmatprep.subr.mxu0 0.0
        %4387 = vmatpush1.xpose.msra.mxu0 0.0
        %4388 = vmatprep.subr.mxu0 0.0
        %4389 = vmatpush1.xpose.msra.mxu0 0.0
        %4390 = vmatprep.subr.mxu0 0.0
        %4391 = vmatpush1.xpose.msra.mxu0 0.0
        %4392 = vmatprep.subr.mxu0 0.0
        %4393 = vmatpush1.xpose.msra.mxu0 0.0
        %4394 = vmatprep.subr.mxu0 0.0
        %4395 = vmatpush1.xpose.msra.mxu0 0.0
        %4396 = vmatprep.subr.mxu0 0.0
        %4397 = vmatpush1.xpose.msra.mxu0 0.0
        %4398 = vmatprep.subr.mxu0 0.0
        %4399 = vmatpush1.xpose.msra.mxu0 0.0
        %4400 = vmatprep.subr.mxu0 0.0
        %4401 = vmatpush1.xpose.msra.mxu0 0.0
        %4402 = vmatprep.subr.mxu0 0.0
        %4403 = vmatpush1.xpose.msra.mxu0 0.0
        %4404 = vmatprep.subr.mxu0 0.0
        %4405 = vmatpush1.xpose.msra.mxu0 0.0
        %4406 = vmatprep.subr.mxu0 0.0
        %4407 = vmatpush1.xpose.msra.mxu0 0.0
        %4408 = vmatprep.subr.mxu0 0.0
        %4409 = vmatpush1.xpose.msra.mxu0 0.0
        %4410 = vmatprep.subr.mxu0 0.0
        %4411 = vmatpush1.xpose.msra.mxu0 0.0
        %4412 = vmatprep.subr.mxu0 0.0
        %4413 = vmatpush1.xpose.msra.mxu0 0.0
        %4414 = vmatprep.subr.mxu0 0.0
        %4415 = vmatpush1.xpose.msra.mxu0 0.0
        %4416 = vmatprep.subr.mxu0 0.0
        %4417 = vmatpush1.xpose.msra.mxu0 0.0
        %4418 = vmatprep.subr.mxu0 0.0
        %4419 = vmatpush1.xpose.msra.mxu0 0.0
        %4420 = vmatprep.subr.mxu0 0.0
        %4421 = vmatpush1.xpose.msra.mxu0 0.0
        %4422 = vmatprep.subr.mxu0 0.0
        %4423 = vmatpush1.xpose.msra.mxu0 0.0
        %4424 = vmatprep.subr.mxu0 0.0
        %4425 = vmatpush1.xpose.msra.mxu0 0.0
        %4426 = vmatprep.subr.mxu0 0.0
        %4427 = vmatpush1.xpose.msra.mxu0 0.0
        %4428 = vmatprep.subr.mxu0 0.0
        %4429 = vmatpush1.xpose.msra.mxu0 0.0
        %4430 = vmatprep.subr.mxu0 0.0
        %4431 = vmatpush1.xpose.msra.mxu0 0.0
        %4432 = vmatprep.mubr.f32.mxu0 0.0
        %4433 = vmatmul.mubr.f32.gmra.mrb[0].mxu0 %v4363
        %v4434 = vpop.f32.mrb[0].mxu0
        %v4435 = vadd.f32 %v4361, %v4434
        %v4436 = vpop.f32.mrb[0].mxu0
        %4437 = vdwg.mxu0
        %4439 = vrot.lane.b32.xlu0 %v4435, 8
        %v4440 = vpop.permute.xlu0 %4439
        %vm4442 = vcmask 122944
        %4443 = vst.msk [vmem:[%s318] sm:$0x1] %vm4442, %v4440
        %s4444 = sand.u32 %s210, 1
        %s4445 = scalar_lea.sflag [#allocation4], %s4444
        %s4446 = sand.u32 %s210, 1
        %s4447 = scalar_lea.vmem [#allocation3], %s4446
        // Predicated region
        $region53: #{tpu_custom_call.1} parent=51 // pred_check
          %p4448 = pneg %p220
        $region54: #{tpu_custom_call.1} parent=51 // pred_check_branch
          %4450 = sbr.rel (%p4448) target = $region56
        $region55: #{tpu_custom_call.1} parent=51 // pred_region
          %s4452 = ssub.s32 16, 16
          %4453 = vsyncadd %s4445, %s4452
          %s4454 = smul.addr %s24, 16
          %s4455 = scalar_lea.hbm %s8, %s4454
          %s4457 = sshll.u32 %s4447, 4
          %s4458 = int_to_ptr.vmem [resolvable:$true] %s4457
          %4460 = dma.vmem_to_hbm [thread:$0]  %s4458, 16, %s4455, %s4445
        $region56: #{tpu_custom_call.1} parent=51 // pred_fallthru
          _
      $region52: #{tpu_custom_call.1} parent=5 // pred_fallthru
        _
      %p4461 = scmp.le.s32.totalorder 2, %s19
      // Predicated region
      $region57: #{tpu_custom_call.1} parent=5 // pred_check
        %p4462 = pneg %p4461
      $region58: #{tpu_custom_call.1} parent=5 // pred_check_branch
        %4464 = sbr.rel (%p4462) target = $region60
      $region59: #{tpu_custom_call.1} parent=5 // pred_region
        %s4465 = ssub.s32 %s19, 2
        // Predicated region
        $region61: #{tpu_custom_call.1} parent=59 // pred_check
          %p4466 = pneg %p226
        $region62: #{tpu_custom_call.1} parent=59 // pred_check_branch
          %4468 = sbr.rel (%p4466) target = $region64
        $region63: #{tpu_custom_call.1} parent=59 // pred_region
          %s4469 = sand.u32 %s211, 1
          %s4470 = scalar_lea.sflag [#allocation4], %s4469
          %s4471 = sand.u32 %s211, 1
          %s4472 = scalar_lea.vmem [#allocation3], %s4471
          %4473 = dma.done %s4470, 16
        $region64: #{tpu_custom_call.1} parent=59 // pred_fallthru
          _
      $region60: #{tpu_custom_call.1} parent=5 // pred_fallthru
        _
    $region6: #{tpu_custom_call.1} parent=1 // loop_footer
      %s23 = sadd.s32 1, %s19
    $region7: #{tpu_custom_call.1} parent=1 // loop_footer_branch
      %18 = sbr.rel target = $region3
    $region8: #{tpu_custom_call.1} parent=1 // loop_exit
      _
    %4474 = vsyncpa [#allocation4], 1
    %s4475 = scalar_lea.sflag [#allocation4], 1
    %4476 = vsyncpa %s4475, 1

</llo_original>
